<compile_context>
chip_gen: v7x
topology: tpu7x:2x2x1
jax: 0.10.0
libtpu: 0.0.40
codegen_flags: <defaults>
</compile_context>

<pallas_src>
import numpy as np

import jax
import jax.numpy as jnp
from jax import lax
from jax.experimental import pallas as pl
from jax.experimental.pallas import tpu as pltpu

B = 2          # batch
DIM = 32       # channels (divisible by 8 for GroupNorm(num_groups=8))
G = 8          # GroupNorm groups
H = W = 16     # spatial
WC = W * DIM   # lane-dense activation width (= 512)
BH = B * H     # batch folded into the M (row) dimension (= 32)
EPS = 1e-5     # PyTorch GroupNorm default eps


def _resblock_kernel(x_ref, m1_ref, b1_ref, gamma_ref, beta_ref,
                     m2_ref, b2_ref, o_ref):
    n_per_group = float((DIM // G) * H * W)            # 1024 elements / group

    row = lax.broadcasted_iota(jnp.int32, (BH, 1), 0)
    top_row = (row % H) == 0            # first row of each image: no h-1 tap
    bot_row = (row % H) == (H - 1)      # last row of each image: no h+1 tap
    img0 = row < H                      # rows belonging to image 0

    def conv_lhs(v):
        # v: (BH, WC) f32 -> (BH, 3*WC) bf16, im2col over the three ky taps.
        # Rolls are XLU ops; the masks zero the per-image H boundaries (the W
        # boundaries are already zeroed inside the banded weight matrices).
        dn = jnp.where(top_row, 0.0, pltpu.roll(v, shift=1, axis=0))        # v[h-1]
        up = jnp.where(bot_row, 0.0, pltpu.roll(v, shift=BH - 1, axis=0))   # v[h+1]
        return jnp.concatenate([dn, v, up], axis=-1).astype(jnp.bfloat16)

    x = x_ref[...]                                      # (BH, WC) f32

    # ---- conv1: ONE deep-K (K = 3*WC = 1536) bf16 MXU matmul ---------------
    a1 = jnp.dot(conv_lhs(x), m1_ref[...],
                 preferred_element_type=jnp.float32) + b1_ref[...]   # (BH, WC) f32

    # ---- GroupNorm(8): f32 stats via XLU lane reduction ---------------------
    # Per-image row sums of x and x^2, stacked as 4 sublanes.
    a1sq = a1 * a1
    stats = jnp.concatenate(
        [jnp.sum(a1[0:H], axis=0, keepdims=True),
         jnp.sum(a1[H:BH], axis=0, keepdims=True),
         jnp.sum(a1sq[0:H], axis=0, keepdims=True),
         jnp.sum(a1sq[H:BH], axis=0, keepdims=True)], axis=0)         # (4, WC)

    # Sum over the 16 W replicas: the channel pattern has period DIM lanes, so
    # circular rolls by DIM*2^k stay channel-aligned (log-step all-reduce).
    for s in (DIM, 2 * DIM, 4 * DIM, 8 * DIM):
        stats = stats + pltpu.roll(stats, shift=s, axis=1)
    # Butterfly sum over the 4 consecutive channel lanes of each group; after
    # these two steps every lane already holds its group sum (no broadcast-back).
    lane = lax.broadcasted_iota(jnp.int32, (4, WC), 1)
    stats = stats + jnp.where((lane % 2) == 0,
                              pltpu.roll(stats, shift=WC - 1, axis=1),
                              pltpu.roll(stats, shift=1, axis=1))
    stats = stats + jnp.where((lane % 4) < 2,
                              pltpu.roll(stats, shift=WC - 2, axis=1),
                              pltpu.roll(stats, shift=2, axis=1))
    stats = stats * (1.0 / n_per_group)

    mean = stats[0:2, :]                                # (2, WC) per-image
    ex2 = stats[2:4, :]
    # TODO(synk): biased variance via E[x^2]-mean^2 in f32; switch to a
    # centered second pass if this feeds activations with large means.
    inv = lax.rsqrt(ex2 - mean * mean + EPS)
    scale = inv * gamma_ref[...]                        # (2, WC)
    shift = beta_ref[...] - mean * scale                # (2, WC)

    scale_f = jnp.where(img0,
                        jnp.broadcast_to(scale[0:1, :], (BH, WC)),
                        jnp.broadcast_to(scale[1:2, :], (BH, WC)))
    shift_f = jnp.where(img0,
                        jnp.broadcast_to(shift[0:1, :], (BH, WC)),
                        jnp.broadcast_to(shift[1:2, :], (BH, WC)))
    y = a1 * scale_f + shift_f

    # ---- SiLU: exp + approx reciprocal, both on the EUP slot ----------------
    y = y * pl.reciprocal(1.0 + jnp.exp(-y), approx=True)

    # ---- conv2: same fused deep-K matmul; residual add, lane-dense store ----
    z = jnp.dot(conv_lhs(y), m2_ref[...],
                preferred_element_type=jnp.float32) + b2_ref[...]
    o_ref[...] = x + z


def _banded_conv_weights(wk):
    """wk: (3, 3, Cin, Cout) HWIO 3x3 weights -> (3*W*Cin, W*Cout) bf16.

    Row index = ky*W*Cin + wi*Cin + ci, col index = wo*Cout + co, with
    value wk[ky, wi-wo+1, ci, co] when |wi-wo| <= 1 (the W-boundary zero
    padding is handled by the band edges).  Matches the kernel's
    lane-concat LHS layout [x[h-1], x[h], x[h+1]].
    """
    wk = np.asarray(wk, dtype=np.float32)
    C = wk.shape[2]
    mats = np.zeros((3, W * C, W * C), np.float32)
    for ky in range(3):
        for kx in range(3):
            dx = kx - 1
            for wo in range(W):
                wi = wo + dx
                if 0 <= wi < W:
                    mats[ky, wi * C:(wi + 1) * C, wo * C:(wo + 1) * C] = wk[ky, kx]
    return jnp.asarray(mats.reshape(3 * W * C, W * C), dtype=jnp.bfloat16)


def resblock_pallas(x_nhwc, w1, b1, gamma, beta, w2, b2):
    C = DIM
    # Lane-dense, batch-folded activation layout: (B*H, W*C) = (32, 512).
    x_flat = x_nhwc.reshape(BH, WC)

    m1 = _banded_conv_weights(w1)                       # (3*WC, WC) bf16
    m2 = _banded_conv_weights(w2)
    b1_l = jnp.tile(b1[None, :].astype(jnp.float32), (1, W))        # (1, WC)
    b2_l = jnp.tile(b2[None, :].astype(jnp.float32), (1, W))
    gamma_l = jnp.tile(gamma[None, :].astype(jnp.float32), (1, W))
    beta_l = jnp.tile(beta[None, :].astype(jnp.float32), (1, W))

    out_flat = pl.pallas_call(
        _resblock_kernel,
        out_shape=jax.ShapeDtypeStruct((BH, WC), jnp.float32),
        grid=(1,),
        in_specs=[
            pl.BlockSpec((BH, WC), lambda i: (0, 0)),           # x (batch folded)
            pl.BlockSpec((3 * WC, WC), lambda i: (0, 0)),       # conv1 fused banded W
            pl.BlockSpec((1, WC), lambda i: (0, 0)),            # b1
            pl.BlockSpec((1, WC), lambda i: (0, 0)),            # gamma
            pl.BlockSpec((1, WC), lambda i: (0, 0)),            # beta
            pl.BlockSpec((3 * WC, WC), lambda i: (0, 0)),       # conv2 fused banded W
            pl.BlockSpec((1, WC), lambda i: (0, 0)),            # b2
        ],
        out_specs=pl.BlockSpec((BH, WC), lambda i: (0, 0)),
        compiler_params=pltpu.CompilerParams(
            dimension_semantics=("arbitrary",)),   # single step, no pipeline
    )(x_flat, m1, b1_l, gamma_l, beta_l, m2, b2_l)

    return out_flat.reshape(B, H, W, C)


def resblock_reference(x_nhwc, w1, b1, gamma, beta, w2, b2):
    """Pure-JAX reference mirroring the PyTorch ResBlock forward (f32)."""
    dn = ("NHWC", "HWIO", "NHWC")
    y = lax.conv_general_dilated(x_nhwc, w1, (1, 1), "SAME",
                                 dimension_numbers=dn,
                                 precision=lax.Precision.HIGHEST) + b1
    Bx, Hx, Wx, Cx = y.shape
    yg = y.reshape(Bx, Hx, Wx, G, Cx // G)
    mean = yg.mean(axis=(1, 2, 4), keepdims=True)
    var = ((yg - mean) ** 2).mean(axis=(1, 2, 4), keepdims=True)
    yn = ((yg - mean) / jnp.sqrt(var + EPS)).reshape(Bx, Hx, Wx, Cx)
    yn = yn * gamma + beta
    yn = yn * jax.nn.sigmoid(yn)
    z = lax.conv_general_dilated(yn, w2, (1, 1), "SAME",
                                 dimension_numbers=dn,
                                 precision=lax.Precision.HIGHEST) + b2
    return x_nhwc + z


if __name__ == "__main__":
    key = jax.random.PRNGKey(0)
    kx, k1, kb1, kg, kbt, k2, kb2 = jax.random.split(key, 7)

    # PyTorch-style NCHW input, converted to NHWC for the kernel.
    x_nchw = jax.random.normal(kx, (B, DIM, H, W), jnp.float32)
    x_nhwc = jnp.transpose(x_nchw, (0, 2, 3, 1))

    # Synthetic parameters; conv weights stored HWIO (ky, kx, Cin, Cout).
    w1 = jax.random.normal(k1, (3, 3, DIM, DIM), jnp.float32) * 0.1
    b1 = jax.random.normal(kb1, (DIM,), jnp.float32) * 0.1
    gamma = 1.0 + jax.random.normal(kg, (DIM,), jnp.float32) * 0.1
    beta = jax.random.normal(kbt, (DIM,), jnp.float32) * 0.1
    w2 = jax.random.normal(k2, (3, 3, DIM, DIM), jnp.float32) * 0.1
    b2 = jax.random.normal(kb2, (DIM,), jnp.float32) * 0.1

    out = jax.block_until_ready(
        resblock_pallas(x_nhwc, w1, b1, gamma, beta, w2, b2))
    ref = jax.block_until_ready(
        resblock_reference(x_nhwc, w1, b1, gamma, beta, w2, b2))

    # Tolerance reflects single-pass bf16 MXU convs + approx EUP reciprocal in
    # SiLU (per perf review) vs. the f32 HIGHEST reference; GroupNorm stats
    # stay in f32 in the kernel.
    if not jnp.allclose(out, ref, rtol=1e-2, atol=3e-2):
        raise AssertionError(
            f"mismatch vs reference: max abs err = {jnp.max(jnp.abs(out - ref))}")

    print("KERNEL_OK")
</pallas_src>

<mosaic_0001>
module attributes {stable_mosaic.version = 11 : i64} {
  func.func @_resblock_kernel(%arg0: i32, %arg1: memref<32x512xf32, #tpu.memory_space<vmem>>, %arg2: memref<1536x512xbf16, #tpu.memory_space<vmem>>, %arg3: memref<1x512xf32, #tpu.memory_space<vmem>>, %arg4: memref<1x512xf32, #tpu.memory_space<vmem>>, %arg5: memref<1x512xf32, #tpu.memory_space<vmem>>, %arg6: memref<1536x512xbf16, #tpu.memory_space<vmem>>, %arg7: memref<1x512xf32, #tpu.memory_space<vmem>>, %arg8: memref<32x512xf32, #tpu.memory_space<vmem>>) attributes {dimension_semantics = [#tpu.dimension_semantics<arbitrary>], iteration_bounds = array<i64: 1>, scalar_prefetch = 0 : i64, scratch_operands = 0 : i64, tpu.core_type = #tpu.core_type<tc>, window_params = [{pipeline_mode = #tpu.pipeline_mode<synchronous>, transform_indices = @transform_0, window_bounds = array<i64: 32, 512>}, {pipeline_mode = #tpu.pipeline_mode<synchronous>, transform_indices = @transform_1, window_bounds = array<i64: 1536, 512>}, {pipeline_mode = #tpu.pipeline_mode<synchronous>, transform_indices = @transform_2, window_bounds = array<i64: 1, 512>}, {pipeline_mode = #tpu.pipeline_mode<synchronous>, transform_indices = @transform_3, window_bounds = array<i64: 1, 512>}, {pipeline_mode = #tpu.pipeline_mode<synchronous>, transform_indices = @transform_4, window_bounds = array<i64: 1, 512>}, {pipeline_mode = #tpu.pipeline_mode<synchronous>, transform_indices = @transform_5, window_bounds = array<i64: 1536, 512>}, {pipeline_mode = #tpu.pipeline_mode<synchronous>, transform_indices = @transform_6, window_bounds = array<i64: 1, 512>}, {pipeline_mode = #tpu.pipeline_mode<synchronous>, transform_indices = @transform_7, window_bounds = array<i64: 32, 512>}]} {
    %0 = tpu.iota {dimensions = array<i32: 0>} : vector<32x1xi32>
    %c16_i32 = arith.constant 16 : i32
    %c0_i32 = arith.constant 0 : i32
    %1 = arith.cmpi eq, %c16_i32, %c0_i32 : i32
    %c1_i32 = arith.constant 1 : i32
    %2 = arith.select %1, %c1_i32, %c16_i32 : i32
    %3 = vector.broadcast %2 : i32 to vector<32x1xi32>
    %4 = arith.remsi %0, %3 : vector<32x1xi32>
    %c0_i32_0 = arith.constant 0 : i32
    %5 = vector.broadcast %c0_i32_0 : i32 to vector<32x1xi32>
    %6 = arith.cmpi ne, %4, %5 : vector<32x1xi32>
    %c0_i32_1 = arith.constant 0 : i32
    %7 = vector.broadcast %c0_i32_1 : i32 to vector<32x1xi32>
    %8 = arith.cmpi slt, %4, %7 : vector<32x1xi32>
    %c0_i32_2 = arith.constant 0 : i32
    %9 = arith.cmpi slt, %2, %c0_i32_2 : i32
    %10 = vector.broadcast %9 : i1 to vector<32x1xi1>
    %11 = vector.broadcast %10 : vector<32x1xi1> to vector<32x1xi1>
    %12 = arith.xori %8, %11 : vector<32x1xi1>
    %13 = arith.andi %12, %6 : vector<32x1xi1>
    %14 = vector.broadcast %2 : i32 to vector<32x1xi32>
    %15 = arith.addi %4, %14 : vector<32x1xi32>
    %16 = arith.select %13, %15, %4 : vector<32x1xi1>, vector<32x1xi32>
    %c0_i32_3 = arith.constant 0 : i32
    %17 = vector.broadcast %c0_i32_3 : i32 to vector<32x1xi32>
    %18 = arith.cmpi eq, %16, %17 : vector<32x1xi32>
    %c16_i32_4 = arith.constant 16 : i32
    %c0_i32_5 = arith.constant 0 : i32
    %19 = arith.cmpi eq, %c16_i32_4, %c0_i32_5 : i32
    %c1_i32_6 = arith.constant 1 : i32
    %20 = arith.select %19, %c1_i32_6, %c16_i32_4 : i32
    %21 = vector.broadcast %20 : i32 to vector<32x1xi32>
    %22 = arith.remsi %0, %21 : vector<32x1xi32>
    %c0_i32_7 = arith.constant 0 : i32
    %23 = vector.broadcast %c0_i32_7 : i32 to vector<32x1xi32>
    %24 = arith.cmpi ne, %22, %23 : vector<32x1xi32>
    %c0_i32_8 = arith.constant 0 : i32
    %25 = vector.broadcast %c0_i32_8 : i32 to vector<32x1xi32>
    %26 = arith.cmpi slt, %22, %25 : vector<32x1xi32>
    %c0_i32_9 = arith.constant 0 : i32
    %27 = arith.cmpi slt, %20, %c0_i32_9 : i32
    %28 = vector.broadcast %27 : i1 to vector<32x1xi1>
    %29 = vector.broadcast %28 : vector<32x1xi1> to vector<32x1xi1>
    %30 = arith.xori %26, %29 : vector<32x1xi1>
    %31 = arith.andi %30, %24 : vector<32x1xi1>
    %32 = vector.broadcast %20 : i32 to vector<32x1xi32>
    %33 = arith.addi %22, %32 : vector<32x1xi32>
    %34 = arith.select %31, %33, %22 : vector<32x1xi1>, vector<32x1xi32>
    %c15_i32 = arith.constant 15 : i32
    %35 = vector.broadcast %c15_i32 : i32 to vector<32x1xi32>
    %36 = arith.cmpi eq, %34, %35 : vector<32x1xi32>
    %c16_i32_10 = arith.constant 16 : i32
    %37 = vector.broadcast %c16_i32_10 : i32 to vector<32x1xi32>
    %38 = arith.cmpi slt, %0, %37 : vector<32x1xi32>
    %c0 = arith.constant 0 : index
    %c0_11 = arith.constant 0 : index
    %39 = vector.load %arg1[%c0, %c0_11] : memref<32x512xf32, #tpu.memory_space<vmem>>, vector<32x512xf32>
    %c1_i32_12 = arith.constant 1 : i32
    %40 = tpu.dynamic_rotate %39 by %c1_i32_12 dim 0 : vector<32x512xf32>, i32 -> vector<32x512xf32>
    %cst = arith.constant 0.000000e+00 : f32
    %41 = vector.shape_cast %18 : vector<32x1xi1> to vector<32x1xi1>
    %42 = vector.broadcast %41 : vector<32x1xi1> to vector<32x512xi1>
    %43 = vector.broadcast %cst : f32 to vector<32x512xf32>
    %44 = arith.select %42, %43, %40 : vector<32x512xi1>, vector<32x512xf32>
    %c31_i32 = arith.constant 31 : i32
    %45 = tpu.dynamic_rotate %39 by %c31_i32 dim 0 : vector<32x512xf32>, i32 -> vector<32x512xf32>
    %cst_13 = arith.constant 0.000000e+00 : f32
    %46 = vector.shape_cast %36 : vector<32x1xi1> to vector<32x1xi1>
    %47 = vector.broadcast %46 : vector<32x1xi1> to vector<32x512xi1>
    %48 = vector.broadcast %cst_13 : f32 to vector<32x512xf32>
    %49 = arith.select %47, %48, %45 : vector<32x512xi1>, vector<32x512xf32>
    %50 = tpu.concatenate %44, %39, %49 in 1 : vector<32x512xf32>, vector<32x512xf32>, vector<32x512xf32> -> vector<32x1536xf32>
    %51 = arith.truncf %50 : vector<32x1536xf32> to vector<32x1536xbf16>
    %c0_14 = arith.constant 0 : index
    %c0_15 = arith.constant 0 : index
    %52 = vector.load %arg2[%c0_14, %c0_15] : memref<1536x512xbf16, #tpu.memory_space<vmem>>, vector<1536x512xbf16>
    %cst_16 = arith.constant dense<0.000000e+00> : vector<32x512xf32>
    %53 = tpu.matmul %51, %52, %cst_16 {dimension_numbers = #tpu.dot_dimension_numbers<[1], [0], [0], [1], [0, 0, 1, 1], [], []>} : vector<32x1536xbf16>, vector<1536x512xbf16>, vector<32x512xf32> -> vector<32x512xf32>
    %c0_17 = arith.constant 0 : index
    %c0_18 = arith.constant 0 : index
    %54 = vector.load %arg3[%c0_17, %c0_18] : memref<1x512xf32, #tpu.memory_space<vmem>>, vector<1x512xf32>
    %55 = vector.broadcast %54 : vector<1x512xf32> to vector<32x512xf32>
    %56 = arith.addf %53, %55 : vector<32x512xf32>
    %57 = arith.mulf %56, %56 : vector<32x512xf32>
    %58 = vector.extract_strided_slice %56 {offsets = [0, 0], sizes = [16, 512], strides = [1, 1]} : vector<32x512xf32> to vector<16x512xf32>
    %cst_19 = arith.constant dense<0.000000e+00> : vector<512xf32>
    %59 = vector.multi_reduction <add>, %58, %cst_19 [0] : vector<16x512xf32> to vector<512xf32>
    %60 = vector.shape_cast %59 : vector<512xf32> to vector<1x512xf32>
    %61 = vector.extract_strided_slice %56 {offsets = [16, 0], sizes = [16, 512], strides = [1, 1]} : vector<32x512xf32> to vector<16x512xf32>
    %cst_20 = arith.constant dense<0.000000e+00> : vector<512xf32>
    %62 = vector.multi_reduction <add>, %61, %cst_20 [0] : vector<16x512xf32> to vector<512xf32>
    %63 = vector.shape_cast %62 : vector<512xf32> to vector<1x512xf32>
    %64 = vector.extract_strided_slice %57 {offsets = [0, 0], sizes = [16, 512], strides = [1, 1]} : vector<32x512xf32> to vector<16x512xf32>
    %cst_21 = arith.constant dense<0.000000e+00> : vector<512xf32>
    %65 = vector.multi_reduction <add>, %64, %cst_21 [0] : vector<16x512xf32> to vector<512xf32>
    %66 = vector.shape_cast %65 : vector<512xf32> to vector<1x512xf32>
    %67 = vector.extract_strided_slice %57 {offsets = [16, 0], sizes = [16, 512], strides = [1, 1]} : vector<32x512xf32> to vector<16x512xf32>
    %cst_22 = arith.constant dense<0.000000e+00> : vector<512xf32>
    %68 = vector.multi_reduction <add>, %67, %cst_22 [0] : vector<16x512xf32> to vector<512xf32>
    %69 = vector.shape_cast %68 : vector<512xf32> to vector<1x512xf32>
    %70 = tpu.concatenate %60, %63, %66, %69 in 0 : vector<1x512xf32>, vector<1x512xf32>, vector<1x512xf32>, vector<1x512xf32> -> vector<4x512xf32>
    %c32_i32 = arith.constant 32 : i32
    %71 = tpu.dynamic_rotate %70 by %c32_i32 dim 1 : vector<4x512xf32>, i32 -> vector<4x512xf32>
    %72 = arith.addf %70, %71 : vector<4x512xf32>
    %c64_i32 = arith.constant 64 : i32
    %73 = tpu.dynamic_rotate %72 by %c64_i32 dim 1 : vector<4x512xf32>, i32 -> vector<4x512xf32>
    %74 = arith.addf %72, %73 : vector<4x512xf32>
    %c128_i32 = arith.constant 128 : i32
    %75 = tpu.dynamic_rotate %74 by %c128_i32 dim 1 : vector<4x512xf32>, i32 -> vector<4x512xf32>
    %76 = arith.addf %74, %75 : vector<4x512xf32>
    %c256_i32 = arith.constant 256 : i32
    %77 = tpu.dynamic_rotate %76 by %c256_i32 dim 1 : vector<4x512xf32>, i32 -> vector<4x512xf32>
    %78 = arith.addf %76, %77 : vector<4x512xf32>
    %79 = tpu.iota {dimensions = array<i32: 1>} : vector<4x512xi32>
    %c2_i32 = arith.constant 2 : i32
    %c0_i32_23 = arith.constant 0 : i32
    %80 = arith.cmpi eq, %c2_i32, %c0_i32_23 : i32
    %c1_i32_24 = arith.constant 1 : i32
    %81 = arith.select %80, %c1_i32_24, %c2_i32 : i32
    %82 = vector.broadcast %81 : i32 to vector<4x512xi32>
    %83 = arith.remsi %79, %82 : vector<4x512xi32>
    %c0_i32_25 = arith.constant 0 : i32
    %84 = vector.broadcast %c0_i32_25 : i32 to vector<4x512xi32>
    %85 = arith.cmpi ne, %83, %84 : vector<4x512xi32>
    %c0_i32_26 = arith.constant 0 : i32
    %86 = vector.broadcast %c0_i32_26 : i32 to vector<4x512xi32>
    %87 = arith.cmpi slt, %83, %86 : vector<4x512xi32>
    %c0_i32_27 = arith.constant 0 : i32
    %88 = arith.cmpi slt, %81, %c0_i32_27 : i32
    %89 = vector.broadcast %88 : i1 to vector<4x512xi1>
    %90 = vector.broadcast %89 : vector<4x512xi1> to vector<4x512xi1>
    %91 = arith.xori %87, %90 : vector<4x512xi1>
    %92 = arith.andi %91, %85 : vector<4x512xi1>
    %93 = vector.broadcast %81 : i32 to vector<4x512xi32>
    %94 = arith.addi %83, %93 : vector<4x512xi32>
    %95 = arith.select %92, %94, %83 : vector<4x512xi1>, vector<4x512xi32>
    %c0_i32_28 = arith.constant 0 : i32
    %96 = vector.broadcast %c0_i32_28 : i32 to vector<4x512xi32>
    %97 = arith.cmpi eq, %95, %96 : vector<4x512xi32>
    %c511_i32 = arith.constant 511 : i32
    %98 = tpu.dynamic_rotate %78 by %c511_i32 dim 1 : vector<4x512xf32>, i32 -> vector<4x512xf32>
    %c1_i32_29 = arith.constant 1 : i32
    %99 = tpu.dynamic_rotate %78 by %c1_i32_29 dim 1 : vector<4x512xf32>, i32 -> vector<4x512xf32>
    %100 = arith.select %97, %98, %99 : vector<4x512xi1>, vector<4x512xf32>
    %101 = arith.addf %78, %100 : vector<4x512xf32>
    %c4_i32 = arith.constant 4 : i32
    %c0_i32_30 = arith.constant 0 : i32
    %102 = arith.cmpi eq, %c4_i32, %c0_i32_30 : i32
    %c1_i32_31 = arith.constant 1 : i32
    %103 = arith.select %102, %c1_i32_31, %c4_i32 : i32
    %104 = vector.broadcast %103 : i32 to vector<4x512xi32>
    %105 = arith.remsi %79, %104 : vector<4x512xi32>
    %c0_i32_32 = arith.constant 0 : i32
    %106 = vector.broadcast %c0_i32_32 : i32 to vector<4x512xi32>
    %107 = arith.cmpi ne, %105, %106 : vector<4x512xi32>
    %c0_i32_33 = arith.constant 0 : i32
    %108 = vector.broadcast %c0_i32_33 : i32 to vector<4x512xi32>
    %109 = arith.cmpi slt, %105, %108 : vector<4x512xi32>
    %c0_i32_34 = arith.constant 0 : i32
    %110 = arith.cmpi slt, %103, %c0_i32_34 : i32
    %111 = vector.broadcast %110 : i1 to vector<4x512xi1>
    %112 = vector.broadcast %111 : vector<4x512xi1> to vector<4x512xi1>
    %113 = arith.xori %109, %112 : vector<4x512xi1>
    %114 = arith.andi %113, %107 : vector<4x512xi1>
    %115 = vector.broadcast %103 : i32 to vector<4x512xi32>
    %116 = arith.addi %105, %115 : vector<4x512xi32>
    %117 = arith.select %114, %116, %105 : vector<4x512xi1>, vector<4x512xi32>
    %c2_i32_35 = arith.constant 2 : i32
    %118 = vector.broadcast %c2_i32_35 : i32 to vector<4x512xi32>
    %119 = arith.cmpi slt, %117, %118 : vector<4x512xi32>
    %c510_i32 = arith.constant 510 : i32
    %120 = tpu.dynamic_rotate %101 by %c510_i32 dim 1 : vector<4x512xf32>, i32 -> vector<4x512xf32>
    %c2_i32_36 = arith.constant 2 : i32
    %121 = tpu.dynamic_rotate %101 by %c2_i32_36 dim 1 : vector<4x512xf32>, i32 -> vector<4x512xf32>
    %122 = arith.select %119, %120, %121 : vector<4x512xi1>, vector<4x512xf32>
    %123 = arith.addf %101, %122 : vector<4x512xf32>
    %cst_37 = arith.constant 9.765625E-4 : f32
    %124 = vector.broadcast %cst_37 : f32 to vector<4x512xf32>
    %125 = arith.mulf %123, %124 : vector<4x512xf32>
    %126 = vector.extract_strided_slice %125 {offsets = [0, 0], sizes = [2, 512], strides = [1, 1]} : vector<4x512xf32> to vector<2x512xf32>
    %127 = vector.extract_strided_slice %125 {offsets = [2, 0], sizes = [2, 512], strides = [1, 1]} : vector<4x512xf32> to vector<2x512xf32>
    %128 = arith.mulf %126, %126 : vector<2x512xf32>
    %129 = arith.subf %127, %128 : vector<2x512xf32>
    %cst_38 = arith.constant 9.99999974E-6 : f32
    %130 = vector.broadcast %cst_38 : f32 to vector<2x512xf32>
    %131 = arith.addf %129, %130 : vector<2x512xf32>
    %132 = math.rsqrt %131 : vector<2x512xf32>
    %c0_39 = arith.constant 0 : index
    %c0_40 = arith.constant 0 : index
    %133 = vector.load %arg4[%c0_39, %c0_40] : memref<1x512xf32, #tpu.memory_space<vmem>>, vector<1x512xf32>
    %134 = vector.broadcast %133 : vector<1x512xf32> to vector<2x512xf32>
    %135 = arith.mulf %132, %134 : vector<2x512xf32>
    %c0_41 = arith.constant 0 : index
    %c0_42 = arith.constant 0 : index
    %136 = vector.load %arg5[%c0_41, %c0_42] : memref<1x512xf32, #tpu.memory_space<vmem>>, vector<1x512xf32>
    %137 = arith.mulf %126, %135 : vector<2x512xf32>
    %138 = vector.broadcast %136 : vector<1x512xf32> to vector<2x512xf32>
    %139 = arith.subf %138, %137 : vector<2x512xf32>
    %140 = vector.extract_strided_slice %135 {offsets = [0, 0], sizes = [1, 512], strides = [1, 1]} : vector<2x512xf32> to vector<1x512xf32>
    %141 = vector.shape_cast %140 : vector<1x512xf32> to vector<1x512xf32>
    %142 = vector.broadcast %141 : vector<1x512xf32> to vector<32x512xf32>
    %143 = vector.extract_strided_slice %135 {offsets = [1, 0], sizes = [1, 512], strides = [1, 1]} : vector<2x512xf32> to vector<1x512xf32>
    %144 = vector.shape_cast %143 : vector<1x512xf32> to vector<1x512xf32>
    %145 = vector.broadcast %144 : vector<1x512xf32> to vector<32x512xf32>
    %146 = vector.shape_cast %38 : vector<32x1xi1> to vector<32x1xi1>
    %147 = vector.broadcast %146 : vector<32x1xi1> to vector<32x512xi1>
    %148 = arith.select %147, %142, %145 : vector<32x512xi1>, vector<32x512xf32>
    %149 = vector.extract_strided_slice %139 {offsets = [0, 0], sizes = [1, 512], strides = [1, 1]} : vector<2x512xf32> to vector<1x512xf32>
    %150 = vector.shape_cast %149 : vector<1x512xf32> to vector<1x512xf32>
    %151 = vector.broadcast %150 : vector<1x512xf32> to vector<32x512xf32>
    %152 = vector.extract_strided_slice %139 {offsets = [1, 0], sizes = [1, 512], strides = [1, 1]} : vector<2x512xf32> to vector<1x512xf32>
    %153 = vector.shape_cast %152 : vector<1x512xf32> to vector<1x512xf32>
    %154 = vector.broadcast %153 : vector<1x512xf32> to vector<32x512xf32>
    %155 = vector.shape_cast %38 : vector<32x1xi1> to vector<32x1xi1>
    %156 = vector.broadcast %155 : vector<32x1xi1> to vector<32x512xi1>
    %157 = arith.select %156, %151, %154 : vector<32x512xi1>, vector<32x512xf32>
    %158 = arith.mulf %56, %148 : vector<32x512xf32>
    %159 = arith.addf %158, %157 : vector<32x512xf32>
    %cst_43 = arith.constant 0.000000e+00 : f32
    %160 = vector.broadcast %cst_43 : f32 to vector<32x512xf32>
    %161 = arith.subf %160, %159 : vector<32x512xf32>
    %162 = math.exp %161 : vector<32x512xf32>
    %cst_44 = arith.constant 1.000000e+00 : f32
    %163 = vector.broadcast %cst_44 : f32 to vector<32x512xf32>
    %164 = arith.addf %163, %162 : vector<32x512xf32>
    %165 = tpu.reciprocal %164 {approx = true} : vector<32x512xf32> -> vector<32x512xf32>
    %166 = arith.mulf %159, %165 : vector<32x512xf32>
    %c1_i32_45 = arith.constant 1 : i32
    %167 = tpu.dynamic_rotate %166 by %c1_i32_45 dim 0 : vector<32x512xf32>, i32 -> vector<32x512xf32>
    %cst_46 = arith.constant 0.000000e+00 : f32
    %168 = vector.shape_cast %18 : vector<32x1xi1> to vector<32x1xi1>
    %169 = vector.broadcast %168 : vector<32x1xi1> to vector<32x512xi1>
    %170 = vector.broadcast %cst_46 : f32 to vector<32x512xf32>
    %171 = arith.select %169, %170, %167 : vector<32x512xi1>, vector<32x512xf32>
    %c31_i32_47 = arith.constant 31 : i32
    %172 = tpu.dynamic_rotate %166 by %c31_i32_47 dim 0 : vector<32x512xf32>, i32 -> vector<32x512xf32>
    %cst_48 = arith.constant 0.000000e+00 : f32
    %173 = vector.shape_cast %36 : vector<32x1xi1> to vector<32x1xi1>
    %174 = vector.broadcast %173 : vector<32x1xi1> to vector<32x512xi1>
    %175 = vector.broadcast %cst_48 : f32 to vector<32x512xf32>
    %176 = arith.select %174, %175, %172 : vector<32x512xi1>, vector<32x512xf32>
    %177 = tpu.concatenate %171, %166, %176 in 1 : vector<32x512xf32>, vector<32x512xf32>, vector<32x512xf32> -> vector<32x1536xf32>
    %178 = arith.truncf %177 : vector<32x1536xf32> to vector<32x1536xbf16>
    %c0_49 = arith.constant 0 : index
    %c0_50 = arith.constant 0 : index
    %179 = vector.load %arg6[%c0_49, %c0_50] : memref<1536x512xbf16, #tpu.memory_space<vmem>>, vector<1536x512xbf16>
    %cst_51 = arith.constant dense<0.000000e+00> : vector<32x512xf32>
    %180 = tpu.matmul %178, %179, %cst_51 {dimension_numbers = #tpu.dot_dimension_numbers<[1], [0], [0], [1], [0, 0, 1, 1], [], []>} : vector<32x1536xbf16>, vector<1536x512xbf16>, vector<32x512xf32> -> vector<32x512xf32>
    %c0_52 = arith.constant 0 : index
    %c0_53 = arith.constant 0 : index
    %181 = vector.load %arg7[%c0_52, %c0_53] : memref<1x512xf32, #tpu.memory_space<vmem>>, vector<1x512xf32>
    %182 = vector.broadcast %181 : vector<1x512xf32> to vector<32x512xf32>
    %183 = arith.addf %180, %182 : vector<32x512xf32>
    %184 = arith.addf %39, %183 : vector<32x512xf32>
    %c0_54 = arith.constant 0 : index
    %c0_55 = arith.constant 0 : index
    %185 = vector.load %arg8[%c0_54, %c0_55] : memref<32x512xf32, #tpu.memory_space<vmem>>, vector<32x512xf32>
    tpu.vector_store %arg8[%c0_54, %c0_55], %184 {strides = array<i32>} : memref<32x512xf32, #tpu.memory_space<vmem>>, vector<32x512xf32>,
    return
  }
  func.func @transform_0(%arg0: i32) -> (i32, i32) {
    %c0_i32 = arith.constant 0 : i32
    %c0_i32_0 = arith.constant 0 : i32
    %c0_i32_1 = arith.constant 0 : i32
    return %c0_i32, %c0_i32_0 : i32, i32
  }
  func.func @transform_1(%arg0: i32) -> (i32, i32) {
    %c0_i32 = arith.constant 0 : i32
    %c0_i32_0 = arith.constant 0 : i32
    %c0_i32_1 = arith.constant 0 : i32
    return %c0_i32, %c0_i32_0 : i32, i32
  }
  func.func @transform_2(%arg0: i32) -> (i32, i32) {
    %c0_i32 = arith.constant 0 : i32
    %c0_i32_0 = arith.constant 0 : i32
    %c0_i32_1 = arith.constant 0 : i32
    return %c0_i32, %c0_i32_0 : i32, i32
  }
  func.func @transform_3(%arg0: i32) -> (i32, i32) {
    %c0_i32 = arith.constant 0 : i32
    %c0_i32_0 = arith.constant 0 : i32
    %c0_i32_1 = arith.constant 0 : i32
    return %c0_i32, %c0_i32_0 : i32, i32
  }
  func.func @transform_4(%arg0: i32) -> (i32, i32) {
    %c0_i32 = arith.constant 0 : i32
    %c0_i32_0 = arith.constant 0 : i32
    %c0_i32_1 = arith.constant 0 : i32
    return %c0_i32, %c0_i32_0 : i32, i32
  }
  func.func @transform_5(%arg0: i32) -> (i32, i32) {
    %c0_i32 = arith.constant 0 : i32
    %c0_i32_0 = arith.constant 0 : i32
    %c0_i32_1 = arith.constant 0 : i32
    return %c0_i32, %c0_i32_0 : i32, i32
  }
  func.func @transform_6(%arg0: i32) -> (i32, i32) {
    %c0_i32 = arith.constant 0 : i32
    %c0_i32_0 = arith.constant 0 : i32
    %c0_i32_1 = arith.constant 0 : i32
    return %c0_i32, %c0_i32_0 : i32, i32
  }
  func.func @transform_7(%arg0: i32) -> (i32, i32) {
    %c0_i32 = arith.constant 0 : i32
    %c0_i32_0 = arith.constant 0 : i32
    %c0_i32_1 = arith.constant 0 : i32
    return %c0_i32, %c0_i32_0 : i32, i32
  }
}

</mosaic_0001>

<llo_original>
// kernel: tpu_custom_call.1
$region0: #{tpu_custom_call.1}
  #allocation0 [shape = 'u32[]', space=smem, size = 0x4, offset = 0x4, fixed_abs, tag = 'smem constant byte address 0x4 - core index']
  #allocation1 [shape = 'u32[144,128]{1,0:T(1,128)}', space=vmem, size = 0x12000, scoped, tag = 'internal scratch']
  %s0 = inlined_call_operand.hbm [shape: f32[32,512], index: 0, kind: input, shape index: {}]
  %s1 = inlined_call_operand.hbm [shape: bf16[1536,512], index: 1, kind: input, shape index: {}]
  %s2 = inlined_call_operand.hbm [shape: f32[1,512], index: 2, kind: input, shape index: {}]
  %s3 = inlined_call_operand.hbm [shape: f32[1,512], index: 3, kind: input, shape index: {}]
  %s4 = inlined_call_operand.hbm [shape: f32[1,512], index: 4, kind: input, shape index: {}]
  %s5 = inlined_call_operand.hbm [shape: bf16[1536,512], index: 5, kind: input, shape index: {}]
  %s6 = inlined_call_operand.hbm [shape: f32[1,512], index: 6, kind: input, shape index: {}]
  %s7 = inlined_call_operand.hbm [shape: f32[32,512], index: 7, kind: output, shape index: {}]
  %s8 = sld [smem:[#allocation0]]
  $region66: #{tpu_custom_call.1} parent=0
    _
  %s10 = ssub.s32 1, %s8
  %s11 = scalar_select 0, %s10, %s8
  $region1: #{tpu_custom_call.1} parent=0
    #allocation2 [shape = 'u8[65536]{0}', space=vmem, size = 0x10000, scoped, tag = 'input window, operand 0, single buffered']
    #allocation3 [shape = 's32[1]{0}', space=sflag, size = 0x4, scoped, tag = 'scoped memory for tpu_custom_call.1']
    #allocation4 [shape = 's32[1]{0}', space=sflag, size = 0x4, scoped, tag = 'scoped memory for tpu_custom_call.1']
    #allocation5 [shape = 'u8[1572864]{0}', space=vmem, size = 0x180000, scoped, tag = 'input window, operand 1, single buffered']
    #allocation6 [shape = 's32[1]{0}', space=sflag, size = 0x4, scoped, tag = 'scoped memory for tpu_custom_call.1']
    #allocation7 [shape = 'u8[2048]{0}', space=vmem, size = 0x800, scoped, tag = 'input window, operand 2, single buffered']
    #allocation8 [shape = 'u8[2048]{0}', space=vmem, size = 0x800, scoped, tag = 'input window, operand 3, single buffered']
    #allocation9 [shape = 's32[1]{0}', space=sflag, size = 0x4, scoped, tag = 'scoped memory for tpu_custom_call.1']
    #allocation10 [shape = 'u8[2048]{0}', space=vmem, size = 0x800, scoped, tag = 'input window, operand 4, single buffered']
    #allocation11 [shape = 'u8[1572864]{0}', space=vmem, size = 0x180000, scoped, tag = 'input window, operand 5, single buffered']
    #allocation12 [shape = 's32[1]{0}', space=sflag, size = 0x4, scoped, tag = 'scoped memory for tpu_custom_call.1']
    #allocation13 [shape = 'u8[2048]{0}', space=vmem, size = 0x800, scoped, tag = 'input window, operand 6, single buffered']
    #allocation14 [shape = 'u8[65536]{0}', space=vmem, size = 0x10000, scoped, tag = 'output window, operand 0, single buffered']
    %12 = vsyncpa [#allocation3], 0
    %13 = vsyncpa [#allocation6], 0
    %14 = vsyncpa [#allocation9], 0
    %15 = vsyncpa [#allocation12], 0
    %16 = vsyncpa [#allocation4], 0
    // Predicated region
    $region2: #{tpu_custom_call.1} parent=1 // pred_check
      _
    $region3: #{tpu_custom_call.1} parent=1 // pred_check_branch
      %18 = sbr.rel (0) target = $region5
    $region4: #{tpu_custom_call.1} parent=1 // pred_region
      %s20 = ssub.s32 2048, 2048
      %21 = vsyncadd [#allocation3], %s20
      %s22 = sshll.u32 [#allocation2], 4
      %s23 = int_to_ptr.vmem [resolvable:$true] %s22
      %28 = dma.hbm_to_vmem [thread:$0]  %s0, 2048, %s23, [#allocation3], 512, 512, 32
    $region5: #{tpu_custom_call.1} parent=1 // pred_fallthru
      _
    // Predicated region
    $region6: #{tpu_custom_call.1} parent=1 // pred_check
      _
    $region7: #{tpu_custom_call.1} parent=1 // pred_check_branch
      %30 = sbr.rel (0) target = $region9
    $region8: #{tpu_custom_call.1} parent=1 // pred_region
      %s32 = ssub.s32 49152, 49152
      %33 = vsyncadd [#allocation6], %s32
      %s34 = sshll.u32 [#allocation5], 4
      %s35 = int_to_ptr.vmem [resolvable:$true] %s34
      %40 = dma.hbm_to_vmem [thread:$0]  %s1, 49152, %s35, [#allocation6], 256, 256, 16
    $region9: #{tpu_custom_call.1} parent=1 // pred_fallthru
      _
    // Predicated region
    $region10: #{tpu_custom_call.1} parent=1 // pred_check
      _
    $region11: #{tpu_custom_call.1} parent=1 // pred_check_branch
      %42 = sbr.rel (0) target = $region13
    $region12: #{tpu_custom_call.1} parent=1 // pred_region
      %s44 = ssub.s32 64, 64
      %45 = vsyncadd [#allocation6], %s44
      %s47 = sshll.u32 [#allocation7], 4
      %s48 = int_to_ptr.vmem [resolvable:$true] %s47
      %50 = dma.hbm_to_vmem [thread:$0]  %s2, 64, %s48, [#allocation6]
    $region13: #{tpu_custom_call.1} parent=1 // pred_fallthru
      _
    // Predicated region
    $region14: #{tpu_custom_call.1} parent=1 // pred_check
      _
    $region15: #{tpu_custom_call.1} parent=1 // pred_check_branch
      %52 = sbr.rel (0) target = $region17
    $region16: #{tpu_custom_call.1} parent=1 // pred_region
      %s54 = ssub.s32 64, 64
      %55 = vsyncadd [#allocation9], %s54
      %s57 = sshll.u32 [#allocation8], 4
      %s58 = int_to_ptr.vmem [resolvable:$true] %s57
      %60 = dma.hbm_to_vmem [thread:$0]  %s3, 64, %s58, [#allocation9]
    $region17: #{tpu_custom_call.1} parent=1 // pred_fallthru
      _
    // Predicated region
    $region18: #{tpu_custom_call.1} parent=1 // pred_check
      _
    $region19: #{tpu_custom_call.1} parent=1 // pred_check_branch
      %62 = sbr.rel (0) target = $region21
    $region20: #{tpu_custom_call.1} parent=1 // pred_region
      %s64 = ssub.s32 64, 64
      %65 = vsyncadd [#allocation9], %s64
      %s67 = sshll.u32 [#allocation10], 4
      %s68 = int_to_ptr.vmem [resolvable:$true] %s67
      %70 = dma.hbm_to_vmem [thread:$0]  %s4, 64, %s68, [#allocation9]
    $region21: #{tpu_custom_call.1} parent=1 // pred_fallthru
      _
    // Predicated region
    $region22: #{tpu_custom_call.1} parent=1 // pred_check
      _
    $region23: #{tpu_custom_call.1} parent=1 // pred_check_branch
      %72 = sbr.rel (0) target = $region25
    $region24: #{tpu_custom_call.1} parent=1 // pred_region
      %s74 = ssub.s32 49152, 49152
      %75 = vsyncadd [#allocation12], %s74
      %s76 = sshll.u32 [#allocation11], 4
      %s77 = int_to_ptr.vmem [resolvable:$true] %s76
      %82 = dma.hbm_to_vmem [thread:$0]  %s5, 49152, %s77, [#allocation12], 256, 256, 16
    $region25: #{tpu_custom_call.1} parent=1 // pred_fallthru
      _
    // Predicated region
    $region26: #{tpu_custom_call.1} parent=1 // pred_check
      _
    $region27: #{tpu_custom_call.1} parent=1 // pred_check_branch
      %84 = sbr.rel (0) target = $region29
    $region28: #{tpu_custom_call.1} parent=1 // pred_region
      %s86 = ssub.s32 64, 64
      %87 = vsyncadd [#allocation12], %s86
      %s89 = sshll.u32 [#allocation13], 4
      %s90 = int_to_ptr.vmem [resolvable:$true] %s89
      %92 = dma.hbm_to_vmem [thread:$0]  %s6, 64, %s90, [#allocation12]
    $region29: #{tpu_custom_call.1} parent=1 // pred_fallthru
      _
    // Predicated region
    $region30: #{tpu_custom_call.1} parent=1 // pred_check
      _
    $region31: #{tpu_custom_call.1} parent=1 // pred_check_branch
      %94 = sbr.rel (0) target = $region33
    $region32: #{tpu_custom_call.1} parent=1 // pred_region
      %95 = dma.done [#allocation3], 2048
    $region33: #{tpu_custom_call.1} parent=1 // pred_fallthru
      _
    // Predicated region
    $region34: #{tpu_custom_call.1} parent=1 // pred_check
      _
    $region35: #{tpu_custom_call.1} parent=1 // pred_check_branch
      %97 = sbr.rel (0) target = $region37
    $region36: #{tpu_custom_call.1} parent=1 // pred_region
      %98 = dma.done [#allocation6], 49152
    $region37: #{tpu_custom_call.1} parent=1 // pred_fallthru
      _
    // Predicated region
    $region38: #{tpu_custom_call.1} parent=1 // pred_check
      _
    $region39: #{tpu_custom_call.1} parent=1 // pred_check_branch
      %100 = sbr.rel (0) target = $region41
    $region40: #{tpu_custom_call.1} parent=1 // pred_region
      %101 = dma.done [#allocation6], 64
    $region41: #{tpu_custom_call.1} parent=1 // pred_fallthru
      _
    // Predicated region
    $region42: #{tpu_custom_call.1} parent=1 // pred_check
      _
    $region43: #{tpu_custom_call.1} parent=1 // pred_check_branch
      %103 = sbr.rel (0) target = $region45
    $region44: #{tpu_custom_call.1} parent=1 // pred_region
      %104 = dma.done [#allocation9], 64
    $region45: #{tpu_custom_call.1} parent=1 // pred_fallthru
      _
    // Predicated region
    $region46: #{tpu_custom_call.1} parent=1 // pred_check
      _
    $region47: #{tpu_custom_call.1} parent=1 // pred_check_branch
      %106 = sbr.rel (0) target = $region49
    $region48: #{tpu_custom_call.1} parent=1 // pred_region
      %107 = dma.done [#allocation9], 64
    $region49: #{tpu_custom_call.1} parent=1 // pred_fallthru
      _
    // Predicated region
    $region50: #{tpu_custom_call.1} parent=1 // pred_check
      _
    $region51: #{tpu_custom_call.1} parent=1 // pred_check_branch
      %109 = sbr.rel (0) target = $region53
    $region52: #{tpu_custom_call.1} parent=1 // pred_region
      %110 = dma.done [#allocation12], 49152
    $region53: #{tpu_custom_call.1} parent=1 // pred_fallthru
      _
    // Predicated region
    $region54: #{tpu_custom_call.1} parent=1 // pred_check
      _
    $region55: #{tpu_custom_call.1} parent=1 // pred_check_branch
      %112 = sbr.rel (0) target = $region57
    $region56: #{tpu_custom_call.1} parent=1 // pred_region
      %113 = dma.done [#allocation12], 64
    $region57: #{tpu_custom_call.1} parent=1 // pred_fallthru
      _
    %v114 = vlaneseq
    %v115 = vshrl.u32 %v114, 7
    %v116 = vadd.s32 %v115, 8
    %v117 = vadd.s32 %v115, 16
    %v118 = vadd.s32 %v115, 24
    %vm119 = vcmp.lt.s32.totalorder %v115, 0
    %v120 = vsub.s32 0, %v115
    %v121 = vsel %vm119, %v120, %v115
    %v122 = vshrl.u32 %v121, 4
    %v123 = vand.u32 %v121, 15
    %v124 = vsub.s32 0, %v123
    %v125 = vsel %vm119, %v124, %v123
    %vm126 = vcmp.lt.s32.totalorder %v116, 0
    %v127 = vsub.s32 0, %v116
    %v128 = vsel %vm126, %v127, %v116
    %v129 = vshrl.u32 %v128, 4
    %v130 = vand.u32 %v128, 15
    %v131 = vsub.s32 0, %v130
    %v132 = vsel %vm126, %v131, %v130
    %vm133 = vcmp.lt.s32.totalorder %v117, 0
    %v134 = vsub.s32 0, %v117
    %v135 = vsel %vm133, %v134, %v117
    %v136 = vshrl.u32 %v135, 4
    %v137 = vand.u32 %v135, 15
    %v138 = vsub.s32 0, %v137
    %v139 = vsel %vm133, %v138, %v137
    %vm140 = vcmp.lt.s32.totalorder %v118, 0
    %v141 = vsub.s32 0, %v118
    %v142 = vsel %vm140, %v141, %v118
    %v143 = vshrl.u32 %v142, 4
    %v144 = vand.u32 %v142, 15
    %v145 = vsub.s32 0, %v144
    %v146 = vsel %vm140, %v145, %v144
    %vm147 = vcmp.ne.s32.totalorder %v125, 0
    %vm148 = vcmp.ne.s32.totalorder %v132, 0
    %vm149 = vcmp.ne.s32.totalorder %v139, 0
    %vm150 = vcmp.ne.s32.totalorder %v146, 0
    %vm151 = vcmp.lt.s32.totalorder %v125, 0
    %vm152 = vcmp.lt.s32.totalorder %v132, 0
    %vm153 = vcmp.lt.s32.totalorder %v139, 0
    %vm154 = vcmp.lt.s32.totalorder %v146, 0
    %vm155 = vmand %vm151, %vm147
    %vm156 = vmand %vm152, %vm148
    %vm157 = vmand %vm153, %vm149
    %vm158 = vmand %vm154, %vm150
    %v159 = vadd.s32 %v125, 16
    %v160 = vadd.s32 %v132, 16
    %v161 = vadd.s32 %v139, 16
    %v162 = vadd.s32 %v146, 16
    %v163 = vsel %vm155, %v159, %v125
    %v164 = vsel %vm156, %v160, %v132
    %v165 = vsel %vm157, %v161, %v139
    %v166 = vsel %vm158, %v162, %v146
    %vm167 = vcmp.eq.s32.totalorder %v163, 0
    %vm168 = vcmp.eq.s32.totalorder %v164, 0
    %vm169 = vcmp.eq.s32.totalorder %v165, 0
    %vm170 = vcmp.eq.s32.totalorder %v166, 0
    %vm171 = vcmp.eq.s32.totalorder %v163, 15
    %vm172 = vcmp.eq.s32.totalorder %v164, 15
    %vm173 = vcmp.eq.s32.totalorder %v165, 15
    %vm174 = vcmp.eq.s32.totalorder %v166, 15
    %vm175 = vcmp.lt.s32.totalorder %v115, 16
    %vm176 = vcmp.lt.s32.totalorder %v116, 16
    %vm177 = vcmp.lt.s32.totalorder %v117, 16
    %vm178 = vcmp.lt.s32.totalorder %v118, 16
    %v179 = vld [vmem:[#allocation2] sm:$0xff]
    %v180 = vld [vmem:[#allocation2 + $0x8] sm:$0xff]
    %v181 = vld [vmem:[#allocation2 + $0x10] sm:$0xff]
    %v182 = vld [vmem:[#allocation2 + $0x18] sm:$0xff]
    %v183 = vld [vmem:[#allocation2 + $0x20] sm:$0xff]
    %v184 = vld [vmem:[#allocation2 + $0x28] sm:$0xff]
    %v185 = vld [vmem:[#allocation2 + $0x30] sm:$0xff]
    %v186 = vld [vmem:[#allocation2 + $0x38] sm:$0xff]
    %v187 = vld [vmem:[#allocation2 + $0x40] sm:$0xff]
    %v188 = vld [vmem:[#allocation2 + $0x48] sm:$0xff]
    %v189 = vld [vmem:[#allocation2 + $0x50] sm:$0xff]
    %v190 = vld [vmem:[#allocation2 + $0x58] sm:$0xff]
    %v191 = vld [vmem:[#allocation2 + $0x60] sm:$0xff]
    %v192 = vld [vmem:[#allocation2 + $0x68] sm:$0xff]
    %v193 = vld [vmem:[#allocation2 + $0x70] sm:$0xff]
    %v194 = vld [vmem:[#allocation2 + $0x78] sm:$0xff]
    %v195 = vrot.slane %v179, 7
    %v196 = vrot.slane %v180, 7
    %v197 = vrot.slane %v181, 7
    %v198 = vrot.slane %v182, 7
    %v199 = vrot.slane %v183, 7
    %v200 = vrot.slane %v184, 7
    %v201 = vrot.slane %v185, 7
    %v202 = vrot.slane %v186, 7
    %v203 = vrot.slane %v187, 7
    %v204 = vrot.slane %v188, 7
    %v205 = vrot.slane %v189, 7
    %v206 = vrot.slane %v190, 7
    %v207 = vrot.slane %v191, 7
    %v208 = vrot.slane %v192, 7
    %v209 = vrot.slane %v193, 7
    %v210 = vrot.slane %v194, 7
    %vm211 = vcmp.lt.s32.totalorder %v115, 1
    %v212 = vsel %vm211, %v203, %v207
    %v213 = vsel %vm211, %v204, %v208
    %v214 = vsel %vm211, %v205, %v209
    %v215 = vsel %vm211, %v206, %v210
    %v216 = vsel %vm211, %v199, %v203
    %v217 = vsel %vm211, %v200, %v204
    %v218 = vsel %vm211, %v201, %v205
    %v219 = vsel %vm211, %v202, %v206
    %v220 = vsel %vm211, %v195, %v199
    %v221 = vsel %vm211, %v196, %v200
    %v222 = vsel %vm211, %v197, %v201
    %v223 = vsel %vm211, %v198, %v202
    %v224 = vsel %vm211, %v207, %v195
    %v225 = vsel %vm211, %v208, %v196
    %v226 = vsel %vm211, %v209, %v197
    %v227 = vsel %vm211, %v210, %v198
    %v228 = vsel %vm167, 1, 0
    %v229 = vsel %vm168, 1, 0
    %v230 = vsel %vm169, 1, 0
    %v231 = vsel %vm170, 1, 0
    %vm232 = vcmp.eq.s32.totalorder %v228, 1
    %vm233 = vcmp.eq.s32.totalorder %v229, 1
    %vm234 = vcmp.eq.s32.totalorder %v230, 1
    %vm235 = vcmp.eq.s32.totalorder %v231, 1
    %v236 = vsel %vm232, 0.0, %v224
    %v237 = vsel %vm232, 0.0, %v225
    %v238 = vsel %vm232, 0.0, %v226
    %v239 = vsel %vm232, 0.0, %v227
    %v240 = vsel %vm233, 0.0, %v220
    %v241 = vsel %vm233, 0.0, %v221
    %v242 = vsel %vm233, 0.0, %v222
    %v243 = vsel %vm233, 0.0, %v223
    %v244 = vsel %vm234, 0.0, %v216
    %v245 = vsel %vm234, 0.0, %v217
    %v246 = vsel %vm234, 0.0, %v218
    %v247 = vsel %vm234, 0.0, %v219
    %v248 = vsel %vm235, 0.0, %v212
    %v249 = vsel %vm235, 0.0, %v213
    %v250 = vsel %vm235, 0.0, %v214
    %v251 = vsel %vm235, 0.0, %v215
    %v252 = vrot.slane %v179, 1
    %v253 = vrot.slane %v180, 1
    %v254 = vrot.slane %v181, 1
    %v255 = vrot.slane %v182, 1
    %v256 = vrot.slane %v183, 1
    %v257 = vrot.slane %v184, 1
    %v258 = vrot.slane %v185, 1
    %v259 = vrot.slane %v186, 1
    %v260 = vrot.slane %v187, 1
    %v261 = vrot.slane %v188, 1
    %v262 = vrot.slane %v189, 1
    %v263 = vrot.slane %v190, 1
    %v264 = vrot.slane %v191, 1
    %v265 = vrot.slane %v192, 1
    %v266 = vrot.slane %v193, 1
    %v267 = vrot.slane %v194, 1
    %vm268 = vcmp.lt.s32.totalorder %v115, 7
    %v269 = vsel %vm268, %v260, %v264
    %v270 = vsel %vm268, %v261, %v265
    %v271 = vsel %vm268, %v262, %v266
    %v272 = vsel %vm268, %v263, %v267
    %v273 = vsel %vm268, %v256, %v260
    %v274 = vsel %vm268, %v257, %v261
    %v275 = vsel %vm268, %v258, %v262
    %v276 = vsel %vm268, %v259, %v263
    %v277 = vsel %vm268, %v252, %v256
    %v278 = vsel %vm268, %v253, %v257
    %v279 = vsel %vm268, %v254, %v258
    %v280 = vsel %vm268, %v255, %v259
    %v281 = vsel %vm268, %v264, %v252
    %v282 = vsel %vm268, %v265, %v253
    %v283 = vsel %vm268, %v266, %v254
    %v284 = vsel %vm268, %v267, %v255
    %v285 = vsel %vm171, 1, 0
    %v286 = vsel %vm172, 1, 0
    %v287 = vsel %vm173, 1, 0
    %v288 = vsel %vm174, 1, 0
    %vm289 = vcmp.eq.s32.totalorder %v285, 1
    %vm290 = vcmp.eq.s32.totalorder %v286, 1
    %vm291 = vcmp.eq.s32.totalorder %v287, 1
    %vm292 = vcmp.eq.s32.totalorder %v288, 1
    %v293 = vsel %vm289, 0.0, %v277
    %v294 = vsel %vm289, 0.0, %v278
    %v295 = vsel %vm289, 0.0, %v279
    %v296 = vsel %vm289, 0.0, %v280
    %v297 = vsel %vm290, 0.0, %v273
    %v298 = vsel %vm290, 0.0, %v274
    %v299 = vsel %vm290, 0.0, %v275
    %v300 = vsel %vm290, 0.0, %v276
    %v301 = vsel %vm291, 0.0, %v269
    %v302 = vsel %vm291, 0.0, %v270
    %v303 = vsel %vm291, 0.0, %v271
    %v304 = vsel %vm291, 0.0, %v272
    %v305 = vsel %vm292, 0.0, %v281
    %v306 = vsel %vm292, 0.0, %v282
    %v307 = vsel %vm292, 0.0, %v283
    %v308 = vsel %vm292, 0.0, %v284
    %v309 = vpack.c.bf16 %v240, %v236
    %v310 = vpack.c.bf16 %v241, %v237
    %v311 = vpack.c.bf16 %v242, %v238
    %v312 = vpack.c.bf16 %v243, %v239
    %v313 = vpack.c.bf16 %v183, %v179
    %v314 = vpack.c.bf16 %v184, %v180
    %v315 = vpack.c.bf16 %v185, %v181
    %v316 = vpack.c.bf16 %v186, %v182
    %v317 = vpack.c.bf16 %v297, %v293
    %v318 = vpack.c.bf16 %v298, %v294
    %v319 = vpack.c.bf16 %v299, %v295
    %v320 = vpack.c.bf16 %v300, %v296
    %v321 = vpack.c.bf16 %v248, %v244
    %v322 = vpack.c.bf16 %v249, %v245
    %v323 = vpack.c.bf16 %v250, %v246
    %v324 = vpack.c.bf16 %v251, %v247
    %v325 = vpack.c.bf16 %v191, %v187
    %v326 = vpack.c.bf16 %v192, %v188
    %v327 = vpack.c.bf16 %v193, %v189
    %v328 = vpack.c.bf16 %v194, %v190
    %v329 = vpack.c.bf16 %v305, %v301
    %v330 = vpack.c.bf16 %v306, %v302
    %v331 = vpack.c.bf16 %v307, %v303
    %v332 = vpack.c.bf16 %v308, %v304
    %v333 = vld [vmem:[#allocation5] sm:$0xff]
    %v334 = vld [vmem:[#allocation5 + $0x8] sm:$0xff]
    %v335 = vld [vmem:[#allocation5 + $0x10] sm:$0xff]
    %v336 = vld [vmem:[#allocation5 + $0x18] sm:$0xff]
    %v337 = vld [vmem:[#allocation5 + $0x20] sm:$0xff]
    %v338 = vld [vmem:[#allocation5 + $0x28] sm:$0xff]
    %v339 = vld [vmem:[#allocation5 + $0x30] sm:$0xff]
    %v340 = vld [vmem:[#allocation5 + $0x38] sm:$0xff]
    %v341 = vld [vmem:[#allocation5 + $0x40] sm:$0xff]
    %v342 = vld [vmem:[#allocation5 + $0x48] sm:$0xff]
    %v343 = vld [vmem:[#allocation5 + $0x50] sm:$0xff]
    %v344 = vld [vmem:[#allocation5 + $0x58] sm:$0xff]
    %v345 = vld [vmem:[#allocation5 + $0x60] sm:$0xff]
    %v346 = vld [vmem:[#allocation5 + $0x68] sm:$0xff]
    %v347 = vld [vmem:[#allocation5 + $0x70] sm:$0xff]
    %v348 = vld [vmem:[#allocation5 + $0x78] sm:$0xff]
    %v349 = vld [vmem:[#allocation5 + $0x80] sm:$0xff]
    %v350 = vld [vmem:[#allocation5 + $0x88] sm:$0xff]
    %v351 = vld [vmem:[#allocation5 + $0x90] sm:$0xff]
    %v352 = vld [vmem:[#allocation5 + $0x98] sm:$0xff]
    %v353 = vld [vmem:[#allocation5 + $0xa0] sm:$0xff]
    %v354 = vld [vmem:[#allocation5 + $0xa8] sm:$0xff]
    %v355 = vld [vmem:[#allocation5 + $0xb0] sm:$0xff]
    %v356 = vld [vmem:[#allocation5 + $0xb8] sm:$0xff]
    %v357 = vld [vmem:[#allocation5 + $0xc0] sm:$0xff]
    %v358 = vld [vmem:[#allocation5 + $0xc8] sm:$0xff]
    %v359 = vld [vmem:[#allocation5 + $0xd0] sm:$0xff]
    %v360 = vld [vmem:[#allocation5 + $0xd8] sm:$0xff]
    %v361 = vld [vmem:[#allocation5 + $0xe0] sm:$0xff]
    %v362 = vld [vmem:[#allocation5 + $0xe8] sm:$0xff]
    %v363 = vld [vmem:[#allocation5 + $0xf0] sm:$0xff]
    %v364 = vld [vmem:[#allocation5 + $0xf8] sm:$0xff]
    %v365 = vld [vmem:[#allocation5 + $0x100] sm:$0xff]
    %v366 = vld [vmem:[#allocation5 + $0x108] sm:$0xff]
    %v367 = vld [vmem:[#allocation5 + $0x110] sm:$0xff]
    %v368 = vld [vmem:[#allocation5 + $0x118] sm:$0xff]
    %v369 = vld [vmem:[#allocation5 + $0x120] sm:$0xff]
    %v370 = vld [vmem:[#allocation5 + $0x128] sm:$0xff]
    %v371 = vld [vmem:[#allocation5 + $0x130] sm:$0xff]
    %v372 = vld [vmem:[#allocation5 + $0x138] sm:$0xff]
    %v373 = vld [vmem:[#allocation5 + $0x140] sm:$0xff]
    %v374 = vld [vmem:[#allocation5 + $0x148] sm:$0xff]
    %v375 = vld [vmem:[#allocation5 + $0x150] sm:$0xff]
    %v376 = vld [vmem:[#allocation5 + $0x158] sm:$0xff]
    %v377 = vld [vmem:[#allocation5 + $0x160] sm:$0xff]
    %v378 = vld [vmem:[#allocation5 + $0x168] sm:$0xff]
    %v379 = vld [vmem:[#allocation5 + $0x170] sm:$0xff]
    %v380 = vld [vmem:[#allocation5 + $0x178] sm:$0xff]
    %v381 = vld [vmem:[#allocation5 + $0x180] sm:$0xff]
    %v382 = vld [vmem:[#allocation5 + $0x188] sm:$0xff]
    %v383 = vld [vmem:[#allocation5 + $0x190] sm:$0xff]
    %v384 = vld [vmem:[#allocation5 + $0x198] sm:$0xff]
    %v385 = vld [vmem:[#allocation5 + $0x1a0] sm:$0xff]
    %v386 = vld [vmem:[#allocation5 + $0x1a8] sm:$0xff]
    %v387 = vld [vmem:[#allocation5 + $0x1b0] sm:$0xff]
    %v388 = vld [vmem:[#allocation5 + $0x1b8] sm:$0xff]
    %v389 = vld [vmem:[#allocation5 + $0x1c0] sm:$0xff]
    %v390 = vld [vmem:[#allocation5 + $0x1c8] sm:$0xff]
    %v391 = vld [vmem:[#allocation5 + $0x1d0] sm:$0xff]
    %v392 = vld [vmem:[#allocation5 + $0x1d8] sm:$0xff]
    %v393 = vld [vmem:[#allocation5 + $0x1e0] sm:$0xff]
    %v394 = vld [vmem:[#allocation5 + $0x1e8] sm:$0xff]
    %v395 = vld [vmem:[#allocation5 + $0x1f0] sm:$0xff]
    %v396 = vld [vmem:[#allocation5 + $0x1f8] sm:$0xff]
    %v397 = vld [vmem:[#allocation5 + $0x200] sm:$0xff]
    %v398 = vld [vmem:[#allocation5 + $0x208] sm:$0xff]
    %v399 = vld [vmem:[#allocation5 + $0x210] sm:$0xff]
    %v400 = vld [vmem:[#allocation5 + $0x218] sm:$0xff]
    %v401 = vld [vmem:[#allocation5 + $0x220] sm:$0xff]
    %v402 = vld [vmem:[#allocation5 + $0x228] sm:$0xff]
    %v403 = vld [vmem:[#allocation5 + $0x230] sm:$0xff]
    %v404 = vld [vmem:[#allocation5 + $0x238] sm:$0xff]
    %v405 = vld [vmem:[#allocation5 + $0x240] sm:$0xff]
    %v406 = vld [vmem:[#allocation5 + $0x248] sm:$0xff]
    %v407 = vld [vmem:[#allocation5 + $0x250] sm:$0xff]
    %v408 = vld [vmem:[#allocation5 + $0x258] sm:$0xff]
    %v409 = vld [vmem:[#allocation5 + $0x260] sm:$0xff]
    %v410 = vld [vmem:[#allocation5 + $0x268] sm:$0xff]
    %v411 = vld [vmem:[#allocation5 + $0x270] sm:$0xff]
    %v412 = vld [vmem:[#allocation5 + $0x278] sm:$0xff]
    %v413 = vld [vmem:[#allocation5 + $0x280] sm:$0xff]
    %v414 = vld [vmem:[#allocation5 + $0x288] sm:$0xff]
    %v415 = vld [vmem:[#allocation5 + $0x290] sm:$0xff]
    %v416 = vld [vmem:[#allocation5 + $0x298] sm:$0xff]
    %v417 = vld [vmem:[#allocation5 + $0x2a0] sm:$0xff]
    %v418 = vld [vmem:[#allocation5 + $0x2a8] sm:$0xff]
    %v419 = vld [vmem:[#allocation5 + $0x2b0] sm:$0xff]
    %v420 = vld [vmem:[#allocation5 + $0x2b8] sm:$0xff]
    %v421 = vld [vmem:[#allocation5 + $0x2c0] sm:$0xff]
    %v422 = vld [vmem:[#allocation5 + $0x2c8] sm:$0xff]
    %v423 = vld [vmem:[#allocation5 + $0x2d0] sm:$0xff]
    %v424 = vld [vmem:[#allocation5 + $0x2d8] sm:$0xff]
    %v425 = vld [vmem:[#allocation5 + $0x2e0] sm:$0xff]
    %v426 = vld [vmem:[#allocation5 + $0x2e8] sm:$0xff]
    %v427 = vld [vmem:[#allocation5 + $0x2f0] sm:$0xff]
    %v428 = vld [vmem:[#allocation5 + $0x2f8] sm:$0xff]
    %v429 = vld [vmem:[#allocation5 + $0x300] sm:$0xff]
    %v430 = vld [vmem:[#allocation5 + $0x308] sm:$0xff]
    %v431 = vld [vmem:[#allocation5 + $0x310] sm:$0xff]
    %v432 = vld [vmem:[#allocation5 + $0x318] sm:$0xff]
    %v433 = vld [vmem:[#allocation5 + $0x320] sm:$0xff]
    %v434 = vld [vmem:[#allocation5 + $0x328] sm:$0xff]
    %v435 = vld [vmem:[#allocation5 + $0x330] sm:$0xff]
    %v436 = vld [vmem:[#allocation5 + $0x338] sm:$0xff]
    %v437 = vld [vmem:[#allocation5 + $0x340] sm:$0xff]
    %v438 = vld [vmem:[#allocation5 + $0x348] sm:$0xff]
    %v439 = vld [vmem:[#allocation5 + $0x350] sm:$0xff]
    %v440 = vld [vmem:[#allocation5 + $0x358] sm:$0xff]
    %v441 = vld [vmem:[#allocation5 + $0x360] sm:$0xff]
    %v442 = vld [vmem:[#allocation5 + $0x368] sm:$0xff]
    %v443 = vld [vmem:[#allocation5 + $0x370] sm:$0xff]
    %v444 = vld [vmem:[#allocation5 + $0x378] sm:$0xff]
    %v445 = vld [vmem:[#allocation5 + $0x380] sm:$0xff]
    %v446 = vld [vmem:[#allocation5 + $0x388] sm:$0xff]
    %v447 = vld [vmem:[#allocation5 + $0x390] sm:$0xff]
    %v448 = vld [vmem:[#allocation5 + $0x398] sm:$0xff]
    %v449 = vld [vmem:[#allocation5 + $0x3a0] sm:$0xff]
    %v450 = vld [vmem:[#allocation5 + $0x3a8] sm:$0xff]
    %v451 = vld [vmem:[#allocation5 + $0x3b0] sm:$0xff]
    %v452 = vld [vmem:[#allocation5 + $0x3b8] sm:$0xff]
    %v453 = vld [vmem:[#allocation5 + $0x3c0] sm:$0xff]
    %v454 = vld [vmem:[#allocation5 + $0x3c8] sm:$0xff]
    %v455 = vld [vmem:[#allocation5 + $0x3d0] sm:$0xff]
    %v456 = vld [vmem:[#allocation5 + $0x3d8] sm:$0xff]
    %v457 = vld [vmem:[#allocation5 + $0x3e0] sm:$0xff]
    %v458 = vld [vmem:[#allocation5 + $0x3e8] sm:$0xff]
    %v459 = vld [vmem:[#allocation5 + $0x3f0] sm:$0xff]
    %v460 = vld [vmem:[#allocation5 + $0x3f8] sm:$0xff]
    %v461 = vld [vmem:[#allocation5 + $0x400] sm:$0xff]
    %v462 = vld [vmem:[#allocation5 + $0x408] sm:$0xff]
    %v463 = vld [vmem:[#allocation5 + $0x410] sm:$0xff]
    %v464 = vld [vmem:[#allocation5 + $0x418] sm:$0xff]
    %v465 = vld [vmem:[#allocation5 + $0x420] sm:$0xff]
    %v466 = vld [vmem:[#allocation5 + $0x428] sm:$0xff]
    %v467 = vld [vmem:[#allocation5 + $0x430] sm:$0xff]
    %v468 = vld [vmem:[#allocation5 + $0x438] sm:$0xff]
    %v469 = vld [vmem:[#allocation5 + $0x440] sm:$0xff]
    %v470 = vld [vmem:[#allocation5 + $0x448] sm:$0xff]
    %v471 = vld [vmem:[#allocation5 + $0x450] sm:$0xff]
    %v472 = vld [vmem:[#allocation5 + $0x458] sm:$0xff]
    %v473 = vld [vmem:[#allocation5 + $0x460] sm:$0xff]
    %v474 = vld [vmem:[#allocation5 + $0x468] sm:$0xff]
    %v475 = vld [vmem:[#allocation5 + $0x470] sm:$0xff]
    %v476 = vld [vmem:[#allocation5 + $0x478] sm:$0xff]
    %v477 = vld [vmem:[#allocation5 + $0x480] sm:$0xff]
    %v478 = vld [vmem:[#allocation5 + $0x488] sm:$0xff]
    %v479 = vld [vmem:[#allocation5 + $0x490] sm:$0xff]
    %v480 = vld [vmem:[#allocation5 + $0x498] sm:$0xff]
    %v481 = vld [vmem:[#allocation5 + $0x4a0] sm:$0xff]
    %v482 = vld [vmem:[#allocation5 + $0x4a8] sm:$0xff]
    %v483 = vld [vmem:[#allocation5 + $0x4b0] sm:$0xff]
    %v484 = vld [vmem:[#allocation5 + $0x4b8] sm:$0xff]
    %v485 = vld [vmem:[#allocation5 + $0x4c0] sm:$0xff]
    %v486 = vld [vmem:[#allocation5 + $0x4c8] sm:$0xff]
    %v487 = vld [vmem:[#allocation5 + $0x4d0] sm:$0xff]
    %v488 = vld [vmem:[#allocation5 + $0x4d8] sm:$0xff]
    %v489 = vld [vmem:[#allocation5 + $0x4e0] sm:$0xff]
    %v490 = vld [vmem:[#allocation5 + $0x4e8] sm:$0xff]
    %v491 = vld [vmem:[#allocation5 + $0x4f0] sm:$0xff]
    %v492 = vld [vmem:[#allocation5 + $0x4f8] sm:$0xff]
    %v493 = vld [vmem:[#allocation5 + $0x500] sm:$0xff]
    %v494 = vld [vmem:[#allocation5 + $0x508] sm:$0xff]
    %v495 = vld [vmem:[#allocation5 + $0x510] sm:$0xff]
    %v496 = vld [vmem:[#allocation5 + $0x518] sm:$0xff]
    %v497 = vld [vmem:[#allocation5 + $0x520] sm:$0xff]
    %v498 = vld [vmem:[#allocation5 + $0x528] sm:$0xff]
    %v499 = vld [vmem:[#allocation5 + $0x530] sm:$0xff]
    %v500 = vld [vmem:[#allocation5 + $0x538] sm:$0xff]
    %v501 = vld [vmem:[#allocation5 + $0x540] sm:$0xff]
    %v502 = vld [vmem:[#allocation5 + $0x548] sm:$0xff]
    %v503 = vld [vmem:[#allocation5 + $0x550] sm:$0xff]
    %v504 = vld [vmem:[#allocation5 + $0x558] sm:$0xff]
    %v505 = vld [vmem:[#allocation5 + $0x560] sm:$0xff]
    %v506 = vld [vmem:[#allocation5 + $0x568] sm:$0xff]
    %v507 = vld [vmem:[#allocation5 + $0x570] sm:$0xff]
    %v508 = vld [vmem:[#allocation5 + $0x578] sm:$0xff]
    %v509 = vld [vmem:[#allocation5 + $0x580] sm:$0xff]
    %v510 = vld [vmem:[#allocation5 + $0x588] sm:$0xff]
    %v511 = vld [vmem:[#allocation5 + $0x590] sm:$0xff]
    %v512 = vld [vmem:[#allocation5 + $0x598] sm:$0xff]
    %v513 = vld [vmem:[#allocation5 + $0x5a0] sm:$0xff]
    %v514 = vld [vmem:[#allocation5 + $0x5a8] sm:$0xff]
    %v515 = vld [vmem:[#allocation5 + $0x5b0] sm:$0xff]
    %v516 = vld [vmem:[#allocation5 + $0x5b8] sm:$0xff]
    %v517 = vld [vmem:[#allocation5 + $0x5c0] sm:$0xff]
    %v518 = vld [vmem:[#allocation5 + $0x5c8] sm:$0xff]
    %v519 = vld [vmem:[#allocation5 + $0x5d0] sm:$0xff]
    %v520 = vld [vmem:[#allocation5 + $0x5d8] sm:$0xff]
    %v521 = vld [vmem:[#allocation5 + $0x5e0] sm:$0xff]
    %v522 = vld [vmem:[#allocation5 + $0x5e8] sm:$0xff]
    %v523 = vld [vmem:[#allocation5 + $0x5f0] sm:$0xff]
    %v524 = vld [vmem:[#allocation5 + $0x5f8] sm:$0xff]
    %v525 = vld [vmem:[#allocation5 + $0x600] sm:$0xff]
    %v526 = vld [vmem:[#allocation5 + $0x608] sm:$0xff]
    %v527 = vld [vmem:[#allocation5 + $0x610] sm:$0xff]
    %v528 = vld [vmem:[#allocation5 + $0x618] sm:$0xff]
    %v529 = vld [vmem:[#allocation5 + $0x620] sm:$0xff]
    %v530 = vld [vmem:[#allocation5 + $0x628] sm:$0xff]
    %v531 = vld [vmem:[#allocation5 + $0x630] sm:$0xff]
    %v532 = vld [vmem:[#allocation5 + $0x638] sm:$0xff]
    %v533 = vld [vmem:[#allocation5 + $0x640] sm:$0xff]
    %v534 = vld [vmem:[#allocation5 + $0x648] sm:$0xff]
    %v535 = vld [vmem:[#allocation5 + $0x650] sm:$0xff]
    %v536 = vld [vmem:[#allocation5 + $0x658] sm:$0xff]
    %v537 = vld [vmem:[#allocation5 + $0x660] sm:$0xff]
    %v538 = vld [vmem:[#allocation5 + $0x668] sm:$0xff]
    %v539 = vld [vmem:[#allocation5 + $0x670] sm:$0xff]
    %v540 = vld [vmem:[#allocation5 + $0x678] sm:$0xff]
    %v541 = vld [vmem:[#allocation5 + $0x680] sm:$0xff]
    %v542 = vld [vmem:[#allocation5 + $0x688] sm:$0xff]
    %v543 = vld [vmem:[#allocation5 + $0x690] sm:$0xff]
    %v544 = vld [vmem:[#allocation5 + $0x698] sm:$0xff]
    %v545 = vld [vmem:[#allocation5 + $0x6a0] sm:$0xff]
    %v546 = vld [vmem:[#allocation5 + $0x6a8] sm:$0xff]
    %v547 = vld [vmem:[#allocation5 + $0x6b0] sm:$0xff]
    %v548 = vld [vmem:[#allocation5 + $0x6b8] sm:$0xff]
    %v549 = vld [vmem:[#allocation5 + $0x6c0] sm:$0xff]
    %v550 = vld [vmem:[#allocation5 + $0x6c8] sm:$0xff]
    %v551 = vld [vmem:[#allocation5 + $0x6d0] sm:$0xff]
    %v552 = vld [vmem:[#allocation5 + $0x6d8] sm:$0xff]
    %v553 = vld [vmem:[#allocation5 + $0x6e0] sm:$0xff]
    %v554 = vld [vmem:[#allocation5 + $0x6e8] sm:$0xff]
    %v555 = vld [vmem:[#allocation5 + $0x6f0] sm:$0xff]
    %v556 = vld [vmem:[#allocation5 + $0x6f8] sm:$0xff]
    %v557 = vld [vmem:[#allocation5 + $0x700] sm:$0xff]
    %v558 = vld [vmem:[#allocation5 + $0x708] sm:$0xff]
    %v559 = vld [vmem:[#allocation5 + $0x710] sm:$0xff]
    %v560 = vld [vmem:[#allocation5 + $0x718] sm:$0xff]
    %v561 = vld [vmem:[#allocation5 + $0x720] sm:$0xff]
    %v562 = vld [vmem:[#allocation5 + $0x728] sm:$0xff]
    %v563 = vld [vmem:[#allocation5 + $0x730] sm:$0xff]
    %v564 = vld [vmem:[#allocation5 + $0x738] sm:$0xff]
    %v565 = vld [vmem:[#allocation5 + $0x740] sm:$0xff]
    %v566 = vld [vmem:[#allocation5 + $0x748] sm:$0xff]
    %v567 = vld [vmem:[#allocation5 + $0x750] sm:$0xff]
    %v568 = vld [vmem:[#allocation5 + $0x758] sm:$0xff]
    %v569 = vld [vmem:[#allocation5 + $0x760] sm:$0xff]
    %v570 = vld [vmem:[#allocation5 + $0x768] sm:$0xff]
    %v571 = vld [vmem:[#allocation5 + $0x770] sm:$0xff]
    %v572 = vld [vmem:[#allocation5 + $0x778] sm:$0xff]
    %v573 = vld [vmem:[#allocation5 + $0x780] sm:$0xff]
    %v574 = vld [vmem:[#allocation5 + $0x788] sm:$0xff]
    %v575 = vld [vmem:[#allocation5 + $0x790] sm:$0xff]
    %v576 = vld [vmem:[#allocation5 + $0x798] sm:$0xff]
    %v577 = vld [vmem:[#allocation5 + $0x7a0] sm:$0xff]
    %v578 = vld [vmem:[#allocation5 + $0x7a8] sm:$0xff]
    %v579 = vld [vmem:[#allocation5 + $0x7b0] sm:$0xff]
    %v580 = vld [vmem:[#allocation5 + $0x7b8] sm:$0xff]
    %v581 = vld [vmem:[#allocation5 + $0x7c0] sm:$0xff]
    %v582 = vld [vmem:[#allocation5 + $0x7c8] sm:$0xff]
    %v583 = vld [vmem:[#allocation5 + $0x7d0] sm:$0xff]
    %v584 = vld [vmem:[#allocation5 + $0x7d8] sm:$0xff]
    %v585 = vld [vmem:[#allocation5 + $0x7e0] sm:$0xff]
    %v586 = vld [vmem:[#allocation5 + $0x7e8] sm:$0xff]
    %v587 = vld [vmem:[#allocation5 + $0x7f0] sm:$0xff]
    %v588 = vld [vmem:[#allocation5 + $0x7f8] sm:$0xff]
    %v589 = vld [vmem:[#allocation5 + $0x800] sm:$0xff]
    %v590 = vld [vmem:[#allocation5 + $0x808] sm:$0xff]
    %v591 = vld [vmem:[#allocation5 + $0x810] sm:$0xff]
    %v592 = vld [vmem:[#allocation5 + $0x818] sm:$0xff]
    %v593 = vld [vmem:[#allocation5 + $0x820] sm:$0xff]
    %v594 = vld [vmem:[#allocation5 + $0x828] sm:$0xff]
    %v595 = vld [vmem:[#allocation5 + $0x830] sm:$0xff]
    %v596 = vld [vmem:[#allocation5 + $0x838] sm:$0xff]
    %v597 = vld [vmem:[#allocation5 + $0x840] sm:$0xff]
    %v598 = vld [vmem:[#allocation5 + $0x848] sm:$0xff]
    %v599 = vld [vmem:[#allocation5 + $0x850] sm:$0xff]
    %v600 = vld [vmem:[#allocation5 + $0x858] sm:$0xff]
    %v601 = vld [vmem:[#allocation5 + $0x860] sm:$0xff]
    %v602 = vld [vmem:[#allocation5 + $0x868] sm:$0xff]
    %v603 = vld [vmem:[#allocation5 + $0x870] sm:$0xff]
    %v604 = vld [vmem:[#allocation5 + $0x878] sm:$0xff]
    %v605 = vld [vmem:[#allocation5 + $0x880] sm:$0xff]
    %v606 = vld [vmem:[#allocation5 + $0x888] sm:$0xff]
    %v607 = vld [vmem:[#allocation5 + $0x890] sm:$0xff]
    %v608 = vld [vmem:[#allocation5 + $0x898] sm:$0xff]
    %v609 = vld [vmem:[#allocation5 + $0x8a0] sm:$0xff]
    %v610 = vld [vmem:[#allocation5 + $0x8a8] sm:$0xff]
    %v611 = vld [vmem:[#allocation5 + $0x8b0] sm:$0xff]
    %v612 = vld [vmem:[#allocation5 + $0x8b8] sm:$0xff]
    %v613 = vld [vmem:[#allocation5 + $0x8c0] sm:$0xff]
    %v614 = vld [vmem:[#allocation5 + $0x8c8] sm:$0xff]
    %v615 = vld [vmem:[#allocation5 + $0x8d0] sm:$0xff]
    %v616 = vld [vmem:[#allocation5 + $0x8d8] sm:$0xff]
    %v617 = vld [vmem:[#allocation5 + $0x8e0] sm:$0xff]
    %v618 = vld [vmem:[#allocation5 + $0x8e8] sm:$0xff]
    %v619 = vld [vmem:[#allocation5 + $0x8f0] sm:$0xff]
    %v620 = vld [vmem:[#allocation5 + $0x8f8] sm:$0xff]
    %v621 = vld [vmem:[#allocation5 + $0x900] sm:$0xff]
    %v622 = vld [vmem:[#allocation5 + $0x908] sm:$0xff]
    %v623 = vld [vmem:[#allocation5 + $0x910] sm:$0xff]
    %v624 = vld [vmem:[#allocation5 + $0x918] sm:$0xff]
    %v625 = vld [vmem:[#allocation5 + $0x920] sm:$0xff]
    %v626 = vld [vmem:[#allocation5 + $0x928] sm:$0xff]
    %v627 = vld [vmem:[#allocation5 + $0x930] sm:$0xff]
    %v628 = vld [vmem:[#allocation5 + $0x938] sm:$0xff]
    %v629 = vld [vmem:[#allocation5 + $0x940] sm:$0xff]
    %v630 = vld [vmem:[#allocation5 + $0x948] sm:$0xff]
    %v631 = vld [vmem:[#allocation5 + $0x950] sm:$0xff]
    %v632 = vld [vmem:[#allocation5 + $0x958] sm:$0xff]
    %v633 = vld [vmem:[#allocation5 + $0x960] sm:$0xff]
    %v634 = vld [vmem:[#allocation5 + $0x968] sm:$0xff]
    %v635 = vld [vmem:[#allocation5 + $0x970] sm:$0xff]
    %v636 = vld [vmem:[#allocation5 + $0x978] sm:$0xff]
    %v637 = vld [vmem:[#allocation5 + $0x980] sm:$0xff]
    %v638 = vld [vmem:[#allocation5 + $0x988] sm:$0xff]
    %v639 = vld [vmem:[#allocation5 + $0x990] sm:$0xff]
    %v640 = vld [vmem:[#allocation5 + $0x998] sm:$0xff]
    %v641 = vld [vmem:[#allocation5 + $0x9a0] sm:$0xff]
    %v642 = vld [vmem:[#allocation5 + $0x9a8] sm:$0xff]
    %v643 = vld [vmem:[#allocation5 + $0x9b0] sm:$0xff]
    %v644 = vld [vmem:[#allocation5 + $0x9b8] sm:$0xff]
    %v645 = vld [vmem:[#allocation5 + $0x9c0] sm:$0xff]
    %v646 = vld [vmem:[#allocation5 + $0x9c8] sm:$0xff]
    %v647 = vld [vmem:[#allocation5 + $0x9d0] sm:$0xff]
    %v648 = vld [vmem:[#allocation5 + $0x9d8] sm:$0xff]
    %v649 = vld [vmem:[#allocation5 + $0x9e0] sm:$0xff]
    %v650 = vld [vmem:[#allocation5 + $0x9e8] sm:$0xff]
    %v651 = vld [vmem:[#allocation5 + $0x9f0] sm:$0xff]
    %v652 = vld [vmem:[#allocation5 + $0x9f8] sm:$0xff]
    %v653 = vld [vmem:[#allocation5 + $0xa00] sm:$0xff]
    %v654 = vld [vmem:[#allocation5 + $0xa08] sm:$0xff]
    %v655 = vld [vmem:[#allocation5 + $0xa10] sm:$0xff]
    %v656 = vld [vmem:[#allocation5 + $0xa18] sm:$0xff]
    %v657 = vld [vmem:[#allocation5 + $0xa20] sm:$0xff]
    %v658 = vld [vmem:[#allocation5 + $0xa28] sm:$0xff]
    %v659 = vld [vmem:[#allocation5 + $0xa30] sm:$0xff]
    %v660 = vld [vmem:[#allocation5 + $0xa38] sm:$0xff]
    %v661 = vld [vmem:[#allocation5 + $0xa40] sm:$0xff]
    %v662 = vld [vmem:[#allocation5 + $0xa48] sm:$0xff]
    %v663 = vld [vmem:[#allocation5 + $0xa50] sm:$0xff]
    %v664 = vld [vmem:[#allocation5 + $0xa58] sm:$0xff]
    %v665 = vld [vmem:[#allocation5 + $0xa60] sm:$0xff]
    %v666 = vld [vmem:[#allocation5 + $0xa68] sm:$0xff]
    %v667 = vld [vmem:[#allocation5 + $0xa70] sm:$0xff]
    %v668 = vld [vmem:[#allocation5 + $0xa78] sm:$0xff]
    %v669 = vld [vmem:[#allocation5 + $0xa80] sm:$0xff]
    %v670 = vld [vmem:[#allocation5 + $0xa88] sm:$0xff]
    %v671 = vld [vmem:[#allocation5 + $0xa90] sm:$0xff]
    %v672 = vld [vmem:[#allocation5 + $0xa98] sm:$0xff]
    %v673 = vld [vmem:[#allocation5 + $0xaa0] sm:$0xff]
    %v674 = vld [vmem:[#allocation5 + $0xaa8] sm:$0xff]
    %v675 = vld [vmem:[#allocation5 + $0xab0] sm:$0xff]
    %v676 = vld [vmem:[#allocation5 + $0xab8] sm:$0xff]
    %v677 = vld [vmem:[#allocation5 + $0xac0] sm:$0xff]
    %v678 = vld [vmem:[#allocation5 + $0xac8] sm:$0xff]
    %v679 = vld [vmem:[#allocation5 + $0xad0] sm:$0xff]
    %v680 = vld [vmem:[#allocation5 + $0xad8] sm:$0xff]
    %v681 = vld [vmem:[#allocation5 + $0xae0] sm:$0xff]
    %v682 = vld [vmem:[#allocation5 + $0xae8] sm:$0xff]
    %v683 = vld [vmem:[#allocation5 + $0xaf0] sm:$0xff]
    %v684 = vld [vmem:[#allocation5 + $0xaf8] sm:$0xff]
    %v685 = vld [vmem:[#allocation5 + $0xb00] sm:$0xff]
    %v686 = vld [vmem:[#allocation5 + $0xb08] sm:$0xff]
    %v687 = vld [vmem:[#allocation5 + $0xb10] sm:$0xff]
    %v688 = vld [vmem:[#allocation5 + $0xb18] sm:$0xff]
    %v689 = vld [vmem:[#allocation5 + $0xb20] sm:$0xff]
    %v690 = vld [vmem:[#allocation5 + $0xb28] sm:$0xff]
    %v691 = vld [vmem:[#allocation5 + $0xb30] sm:$0xff]
    %v692 = vld [vmem:[#allocation5 + $0xb38] sm:$0xff]
    %v693 = vld [vmem:[#allocation5 + $0xb40] sm:$0xff]
    %v694 = vld [vmem:[#allocation5 + $0xb48] sm:$0xff]
    %v695 = vld [vmem:[#allocation5 + $0xb50] sm:$0xff]
    %v696 = vld [vmem:[#allocation5 + $0xb58] sm:$0xff]
    %v697 = vld [vmem:[#allocation5 + $0xb60] sm:$0xff]
    %v698 = vld [vmem:[#allocation5 + $0xb68] sm:$0xff]
    %v699 = vld [vmem:[#allocation5 + $0xb70] sm:$0xff]
    %v700 = vld [vmem:[#allocation5 + $0xb78] sm:$0xff]
    %v701 = vld [vmem:[#allocation5 + $0xb80] sm:$0xff]
    %v702 = vld [vmem:[#allocation5 + $0xb88] sm:$0xff]
    %v703 = vld [vmem:[#allocation5 + $0xb90] sm:$0xff]
    %v704 = vld [vmem:[#allocation5 + $0xb98] sm:$0xff]
    %v705 = vld [vmem:[#allocation5 + $0xba0] sm:$0xff]
    %v706 = vld [vmem:[#allocation5 + $0xba8] sm:$0xff]
    %v707 = vld [vmem:[#allocation5 + $0xbb0] sm:$0xff]
    %v708 = vld [vmem:[#allocation5 + $0xbb8] sm:$0xff]
    %v709 = vld [vmem:[#allocation5 + $0xbc0] sm:$0xff]
    %v710 = vld [vmem:[#allocation5 + $0xbc8] sm:$0xff]
    %v711 = vld [vmem:[#allocation5 + $0xbd0] sm:$0xff]
    %v712 = vld [vmem:[#allocation5 + $0xbd8] sm:$0xff]
    %v713 = vld [vmem:[#allocation5 + $0xbe0] sm:$0xff]
    %v714 = vld [vmem:[#allocation5 + $0xbe8] sm:$0xff]
    %v715 = vld [vmem:[#allocation5 + $0xbf0] sm:$0xff]
    %v716 = vld [vmem:[#allocation5 + $0xbf8] sm:$0xff]
    %v717 = vld [vmem:[#allocation7] sm:$0xf]
    %v719 = vlaneseq
    %v720 = vshrl.u32 %v719, 7
    %v721 = vsub.s32 0, %v720
    %v722 = vrot.slane %v717, %v721
    %v723 = vlaneseq
    %v724 = vshrl.u32 %v723, 7
    %v725 = vsub.s32 1, %v724
    %v726 = vrot.slane %v717, %v725
    %v727 = vlaneseq
    %v728 = vshrl.u32 %v727, 7
    %v729 = vsub.s32 2, %v728
    %v730 = vrot.slane %v717, %v729
    %v731 = vlaneseq
    %v732 = vshrl.u32 %v731, 7
    %v733 = vsub.s32 3, %v732
    %v734 = vrot.slane %v717, %v733
    %v1123 = vunpack.c.l.b16 %v333
    %v1124 = vunpack.c.h.b16 %v333
    %v1125 = vunpack.c.l.b16 %v334
    %v1126 = vunpack.c.h.b16 %v334
    %v1127 = vunpack.c.l.b16 %v335
    %v1128 = vunpack.c.h.b16 %v335
    %v1129 = vunpack.c.l.b16 %v336
    %v1130 = vunpack.c.h.b16 %v336
    %v1131 = vunpack.c.l.b16 %v337
    %v1132 = vunpack.c.h.b16 %v337
    %v1133 = vunpack.c.l.b16 %v338
    %v1134 = vunpack.c.h.b16 %v338
    %v1135 = vunpack.c.l.b16 %v339
    %v1136 = vunpack.c.h.b16 %v339
    %v1137 = vunpack.c.l.b16 %v340
    %v1138 = vunpack.c.h.b16 %v340
    %v1139 = vunpack.c.l.b16 %v341
    %v1140 = vunpack.c.h.b16 %v341
    %v1141 = vunpack.c.l.b16 %v342
    %v1142 = vunpack.c.h.b16 %v342
    %v1143 = vunpack.c.l.b16 %v343
    %v1144 = vunpack.c.h.b16 %v343
    %v1145 = vunpack.c.l.b16 %v344
    %v1146 = vunpack.c.h.b16 %v344
    %v1147 = vunpack.c.l.b16 %v345
    %v1148 = vunpack.c.h.b16 %v345
    %v1149 = vunpack.c.l.b16 %v346
    %v1150 = vunpack.c.h.b16 %v346
    %v1151 = vunpack.c.l.b16 %v347
    %v1152 = vunpack.c.h.b16 %v347
    %v1153 = vunpack.c.l.b16 %v348
    %v1154 = vunpack.c.h.b16 %v348
    %v1155 = vunpack.c.l.b16 %v349
    %v1156 = vunpack.c.h.b16 %v349
    %v1157 = vunpack.c.l.b16 %v350
    %v1158 = vunpack.c.h.b16 %v350
    %v1159 = vunpack.c.l.b16 %v351
    %v1160 = vunpack.c.h.b16 %v351
    %v1161 = vunpack.c.l.b16 %v352
    %v1162 = vunpack.c.h.b16 %v352
    %v1163 = vunpack.c.l.b16 %v353
    %v1164 = vunpack.c.h.b16 %v353
    %v1165 = vunpack.c.l.b16 %v354
    %v1166 = vunpack.c.h.b16 %v354
    %v1167 = vunpack.c.l.b16 %v355
    %v1168 = vunpack.c.h.b16 %v355
    %v1169 = vunpack.c.l.b16 %v356
    %v1170 = vunpack.c.h.b16 %v356
    %v1171 = vunpack.c.l.b16 %v357
    %v1172 = vunpack.c.h.b16 %v357
    %v1173 = vunpack.c.l.b16 %v358
    %v1174 = vunpack.c.h.b16 %v358
    %v1175 = vunpack.c.l.b16 %v359
    %v1176 = vunpack.c.h.b16 %v359
    %v1177 = vunpack.c.l.b16 %v360
    %v1178 = vunpack.c.h.b16 %v360
    %v1179 = vunpack.c.l.b16 %v361
    %v1180 = vunpack.c.h.b16 %v361
    %v1181 = vunpack.c.l.b16 %v362
    %v1182 = vunpack.c.h.b16 %v362
    %v1183 = vunpack.c.l.b16 %v363
    %v1184 = vunpack.c.h.b16 %v363
    %v1185 = vunpack.c.l.b16 %v364
    %v1186 = vunpack.c.h.b16 %v364
    %v1187 = vunpack.c.l.b16 %v365
    %v1188 = vunpack.c.h.b16 %v365
    %v1189 = vunpack.c.l.b16 %v366
    %v1190 = vunpack.c.h.b16 %v366
    %v1191 = vunpack.c.l.b16 %v367
    %v1192 = vunpack.c.h.b16 %v367
    %v1193 = vunpack.c.l.b16 %v368
    %v1194 = vunpack.c.h.b16 %v368
    %v1195 = vunpack.c.l.b16 %v369
    %v1196 = vunpack.c.h.b16 %v369
    %v1197 = vunpack.c.l.b16 %v370
    %v1198 = vunpack.c.h.b16 %v370
    %v1199 = vunpack.c.l.b16 %v371
    %v1200 = vunpack.c.h.b16 %v371
    %v1201 = vunpack.c.l.b16 %v372
    %v1202 = vunpack.c.h.b16 %v372
    %v1203 = vunpack.c.l.b16 %v373
    %v1204 = vunpack.c.h.b16 %v373
    %v1205 = vunpack.c.l.b16 %v374
    %v1206 = vunpack.c.h.b16 %v374
    %v1207 = vunpack.c.l.b16 %v375
    %v1208 = vunpack.c.h.b16 %v375
    %v1209 = vunpack.c.l.b16 %v376
    %v1210 = vunpack.c.h.b16 %v376
    %v1211 = vunpack.c.l.b16 %v377
    %v1212 = vunpack.c.h.b16 %v377
    %v1213 = vunpack.c.l.b16 %v378
    %v1214 = vunpack.c.h.b16 %v378
    %v1215 = vunpack.c.l.b16 %v379
    %v1216 = vunpack.c.h.b16 %v379
    %v1217 = vunpack.c.l.b16 %v380
    %v1218 = vunpack.c.h.b16 %v380
    %v1219 = vunpack.c.l.b16 %v381
    %v1220 = vunpack.c.h.b16 %v381
    %v1221 = vunpack.c.l.b16 %v382
    %v1222 = vunpack.c.h.b16 %v382
    %v1223 = vunpack.c.l.b16 %v383
    %v1224 = vunpack.c.h.b16 %v383
    %v1225 = vunpack.c.l.b16 %v384
    %v1226 = vunpack.c.h.b16 %v384
    %v1227 = vunpack.c.l.b16 %v385
    %v1228 = vunpack.c.h.b16 %v385
    %v1229 = vunpack.c.l.b16 %v386
    %v1230 = vunpack.c.h.b16 %v386
    %v1231 = vunpack.c.l.b16 %v387
    %v1232 = vunpack.c.h.b16 %v387
    %v1233 = vunpack.c.l.b16 %v388
    %v1234 = vunpack.c.h.b16 %v388
    %v1235 = vunpack.c.l.b16 %v389
    %v1236 = vunpack.c.h.b16 %v389
    %v1237 = vunpack.c.l.b16 %v390
    %v1238 = vunpack.c.h.b16 %v390
    %v1239 = vunpack.c.l.b16 %v391
    %v1240 = vunpack.c.h.b16 %v391
    %v1241 = vunpack.c.l.b16 %v392
    %v1242 = vunpack.c.h.b16 %v392
    %v1243 = vunpack.c.l.b16 %v393
    %v1244 = vunpack.c.h.b16 %v393
    %v1245 = vunpack.c.l.b16 %v394
    %v1246 = vunpack.c.h.b16 %v394
    %v1247 = vunpack.c.l.b16 %v395
    %v1248 = vunpack.c.h.b16 %v395
    %v1249 = vunpack.c.l.b16 %v396
    %v1250 = vunpack.c.h.b16 %v396
    %v1251 = vunpack.c.l.b16 %v397
    %v1252 = vunpack.c.h.b16 %v397
    %v1253 = vunpack.c.l.b16 %v398
    %v1254 = vunpack.c.h.b16 %v398
    %v1255 = vunpack.c.l.b16 %v399
    %v1256 = vunpack.c.h.b16 %v399
    %v1257 = vunpack.c.l.b16 %v400
    %v1258 = vunpack.c.h.b16 %v400
    %v1259 = vunpack.c.l.b16 %v401
    %v1260 = vunpack.c.h.b16 %v401
    %v1261 = vunpack.c.l.b16 %v402
    %v1262 = vunpack.c.h.b16 %v402
    %v1263 = vunpack.c.l.b16 %v403
    %v1264 = vunpack.c.h.b16 %v403
    %v1265 = vunpack.c.l.b16 %v404
    %v1266 = vunpack.c.h.b16 %v404
    %v1267 = vunpack.c.l.b16 %v405
    %v1268 = vunpack.c.h.b16 %v405
    %v1269 = vunpack.c.l.b16 %v406
    %v1270 = vunpack.c.h.b16 %v406
    %v1271 = vunpack.c.l.b16 %v407
    %v1272 = vunpack.c.h.b16 %v407
    %v1273 = vunpack.c.l.b16 %v408
    %v1274 = vunpack.c.h.b16 %v408
    %v1275 = vunpack.c.l.b16 %v409
    %v1276 = vunpack.c.h.b16 %v409
    %v1277 = vunpack.c.l.b16 %v410
    %v1278 = vunpack.c.h.b16 %v410
    %v1279 = vunpack.c.l.b16 %v411
    %v1280 = vunpack.c.h.b16 %v411
    %v1281 = vunpack.c.l.b16 %v412
    %v1282 = vunpack.c.h.b16 %v412
    %v1283 = vunpack.c.l.b16 %v413
    %v1284 = vunpack.c.h.b16 %v413
    %v1285 = vunpack.c.l.b16 %v414
    %v1286 = vunpack.c.h.b16 %v414
    %v1287 = vunpack.c.l.b16 %v415
    %v1288 = vunpack.c.h.b16 %v415
    %v1289 = vunpack.c.l.b16 %v416
    %v1290 = vunpack.c.h.b16 %v416
    %v1291 = vunpack.c.l.b16 %v417
    %v1292 = vunpack.c.h.b16 %v417
    %v1293 = vunpack.c.l.b16 %v418
    %v1294 = vunpack.c.h.b16 %v418
    %v1295 = vunpack.c.l.b16 %v419
    %v1296 = vunpack.c.h.b16 %v419
    %v1297 = vunpack.c.l.b16 %v420
    %v1298 = vunpack.c.h.b16 %v420
    %v1299 = vunpack.c.l.b16 %v421
    %v1300 = vunpack.c.h.b16 %v421
    %v1301 = vunpack.c.l.b16 %v422
    %v1302 = vunpack.c.h.b16 %v422
    %v1303 = vunpack.c.l.b16 %v423
    %v1304 = vunpack.c.h.b16 %v423
    %v1305 = vunpack.c.l.b16 %v424
    %v1306 = vunpack.c.h.b16 %v424
    %v1307 = vunpack.c.l.b16 %v425
    %v1308 = vunpack.c.h.b16 %v425
    %v1309 = vunpack.c.l.b16 %v426
    %v1310 = vunpack.c.h.b16 %v426
    %v1311 = vunpack.c.l.b16 %v427
    %v1312 = vunpack.c.h.b16 %v427
    %v1313 = vunpack.c.l.b16 %v428
    %v1314 = vunpack.c.h.b16 %v428
    %v1315 = vunpack.c.l.b16 %v429
    %v1316 = vunpack.c.h.b16 %v429
    %v1317 = vunpack.c.l.b16 %v430
    %v1318 = vunpack.c.h.b16 %v430
    %v1319 = vunpack.c.l.b16 %v431
    %v1320 = vunpack.c.h.b16 %v431
    %v1321 = vunpack.c.l.b16 %v432
    %v1322 = vunpack.c.h.b16 %v432
    %v1323 = vunpack.c.l.b16 %v433
    %v1324 = vunpack.c.h.b16 %v433
    %v1325 = vunpack.c.l.b16 %v434
    %v1326 = vunpack.c.h.b16 %v434
    %v1327 = vunpack.c.l.b16 %v435
    %v1328 = vunpack.c.h.b16 %v435
    %v1329 = vunpack.c.l.b16 %v436
    %v1330 = vunpack.c.h.b16 %v436
    %v1331 = vunpack.c.l.b16 %v437
    %v1332 = vunpack.c.h.b16 %v437
    %v1333 = vunpack.c.l.b16 %v438
    %v1334 = vunpack.c.h.b16 %v438
    %v1335 = vunpack.c.l.b16 %v439
    %v1336 = vunpack.c.h.b16 %v439
    %v1337 = vunpack.c.l.b16 %v440
    %v1338 = vunpack.c.h.b16 %v440
    %v1339 = vunpack.c.l.b16 %v441
    %v1340 = vunpack.c.h.b16 %v441
    %v1341 = vunpack.c.l.b16 %v442
    %v1342 = vunpack.c.h.b16 %v442
    %v1343 = vunpack.c.l.b16 %v443
    %v1344 = vunpack.c.h.b16 %v443
    %v1345 = vunpack.c.l.b16 %v444
    %v1346 = vunpack.c.h.b16 %v444
    %v1347 = vunpack.c.l.b16 %v445
    %v1348 = vunpack.c.h.b16 %v445
    %v1349 = vunpack.c.l.b16 %v446
    %v1350 = vunpack.c.h.b16 %v446
    %v1351 = vunpack.c.l.b16 %v447
    %v1352 = vunpack.c.h.b16 %v447
    %v1353 = vunpack.c.l.b16 %v448
    %v1354 = vunpack.c.h.b16 %v448
    %v1355 = vunpack.c.l.b16 %v449
    %v1356 = vunpack.c.h.b16 %v449
    %v1357 = vunpack.c.l.b16 %v450
    %v1358 = vunpack.c.h.b16 %v450
    %v1359 = vunpack.c.l.b16 %v451
    %v1360 = vunpack.c.h.b16 %v451
    %v1361 = vunpack.c.l.b16 %v452
    %v1362 = vunpack.c.h.b16 %v452
    %v1363 = vunpack.c.l.b16 %v453
    %v1364 = vunpack.c.h.b16 %v453
    %v1365 = vunpack.c.l.b16 %v454
    %v1366 = vunpack.c.h.b16 %v454
    %v1367 = vunpack.c.l.b16 %v455
    %v1368 = vunpack.c.h.b16 %v455
    %v1369 = vunpack.c.l.b16 %v456
    %v1370 = vunpack.c.h.b16 %v456
    %v1371 = vunpack.c.l.b16 %v457
    %v1372 = vunpack.c.h.b16 %v457
    %v1373 = vunpack.c.l.b16 %v458
    %v1374 = vunpack.c.h.b16 %v458
    %v1375 = vunpack.c.l.b16 %v459
    %v1376 = vunpack.c.h.b16 %v459
    %v1377 = vunpack.c.l.b16 %v460
    %v1378 = vunpack.c.h.b16 %v460
    %v1379 = vunpack.c.l.b16 %v461
    %v1380 = vunpack.c.h.b16 %v461
    %v1381 = vunpack.c.l.b16 %v462
    %v1382 = vunpack.c.h.b16 %v462
    %v1383 = vunpack.c.l.b16 %v463
    %v1384 = vunpack.c.h.b16 %v463
    %v1385 = vunpack.c.l.b16 %v464
    %v1386 = vunpack.c.h.b16 %v464
    %v1387 = vunpack.c.l.b16 %v465
    %v1388 = vunpack.c.h.b16 %v465
    %v1389 = vunpack.c.l.b16 %v466
    %v1390 = vunpack.c.h.b16 %v466
    %v1391 = vunpack.c.l.b16 %v467
    %v1392 = vunpack.c.h.b16 %v467
    %v1393 = vunpack.c.l.b16 %v468
    %v1394 = vunpack.c.h.b16 %v468
    %v1395 = vunpack.c.l.b16 %v469
    %v1396 = vunpack.c.h.b16 %v469
    %v1397 = vunpack.c.l.b16 %v470
    %v1398 = vunpack.c.h.b16 %v470
    %v1399 = vunpack.c.l.b16 %v471
    %v1400 = vunpack.c.h.b16 %v471
    %v1401 = vunpack.c.l.b16 %v472
    %v1402 = vunpack.c.h.b16 %v472
    %v1403 = vunpack.c.l.b16 %v473
    %v1404 = vunpack.c.h.b16 %v473
    %v1405 = vunpack.c.l.b16 %v474
    %v1406 = vunpack.c.h.b16 %v474
    %v1407 = vunpack.c.l.b16 %v475
    %v1408 = vunpack.c.h.b16 %v475
    %v1409 = vunpack.c.l.b16 %v476
    %v1410 = vunpack.c.h.b16 %v476
    %v1411 = vunpack.c.l.b16 %v477
    %v1412 = vunpack.c.h.b16 %v477
    %v1413 = vunpack.c.l.b16 %v478
    %v1414 = vunpack.c.h.b16 %v478
    %v1415 = vunpack.c.l.b16 %v479
    %v1416 = vunpack.c.h.b16 %v479
    %v1417 = vunpack.c.l.b16 %v480
    %v1418 = vunpack.c.h.b16 %v480
    %v1419 = vunpack.c.l.b16 %v481
    %v1420 = vunpack.c.h.b16 %v481
    %v1421 = vunpack.c.l.b16 %v482
    %v1422 = vunpack.c.h.b16 %v482
    %v1423 = vunpack.c.l.b16 %v483
    %v1424 = vunpack.c.h.b16 %v483
    %v1425 = vunpack.c.l.b16 %v484
    %v1426 = vunpack.c.h.b16 %v484
    %v1427 = vunpack.c.l.b16 %v485
    %v1428 = vunpack.c.h.b16 %v485
    %v1429 = vunpack.c.l.b16 %v486
    %v1430 = vunpack.c.h.b16 %v486
    %v1431 = vunpack.c.l.b16 %v487
    %v1432 = vunpack.c.h.b16 %v487
    %v1433 = vunpack.c.l.b16 %v488
    %v1434 = vunpack.c.h.b16 %v488
    %v1435 = vunpack.c.l.b16 %v489
    %v1436 = vunpack.c.h.b16 %v489
    %v1437 = vunpack.c.l.b16 %v490
    %v1438 = vunpack.c.h.b16 %v490
    %v1439 = vunpack.c.l.b16 %v491
    %v1440 = vunpack.c.h.b16 %v491
    %v1441 = vunpack.c.l.b16 %v492
    %v1442 = vunpack.c.h.b16 %v492
    %v1443 = vunpack.c.l.b16 %v493
    %v1444 = vunpack.c.h.b16 %v493
    %v1445 = vunpack.c.l.b16 %v494
    %v1446 = vunpack.c.h.b16 %v494
    %v1447 = vunpack.c.l.b16 %v495
    %v1448 = vunpack.c.h.b16 %v495
    %v1449 = vunpack.c.l.b16 %v496
    %v1450 = vunpack.c.h.b16 %v496
    %v1451 = vunpack.c.l.b16 %v497
    %v1452 = vunpack.c.h.b16 %v497
    %v1453 = vunpack.c.l.b16 %v498
    %v1454 = vunpack.c.h.b16 %v498
    %v1455 = vunpack.c.l.b16 %v499
    %v1456 = vunpack.c.h.b16 %v499
    %v1457 = vunpack.c.l.b16 %v500
    %v1458 = vunpack.c.h.b16 %v500
    %v1459 = vunpack.c.l.b16 %v501
    %v1460 = vunpack.c.h.b16 %v501
    %v1461 = vunpack.c.l.b16 %v502
    %v1462 = vunpack.c.h.b16 %v502
    %v1463 = vunpack.c.l.b16 %v503
    %v1464 = vunpack.c.h.b16 %v503
    %v1465 = vunpack.c.l.b16 %v504
    %v1466 = vunpack.c.h.b16 %v504
    %v1467 = vunpack.c.l.b16 %v505
    %v1468 = vunpack.c.h.b16 %v505
    %v1469 = vunpack.c.l.b16 %v506
    %v1470 = vunpack.c.h.b16 %v506
    %v1471 = vunpack.c.l.b16 %v507
    %v1472 = vunpack.c.h.b16 %v507
    %v1473 = vunpack.c.l.b16 %v508
    %v1474 = vunpack.c.h.b16 %v508
    %v1475 = vunpack.c.l.b16 %v509
    %v1476 = vunpack.c.h.b16 %v509
    %v1477 = vunpack.c.l.b16 %v510
    %v1478 = vunpack.c.h.b16 %v510
    %v1479 = vunpack.c.l.b16 %v511
    %v1480 = vunpack.c.h.b16 %v511
    %v1481 = vunpack.c.l.b16 %v512
    %v1482 = vunpack.c.h.b16 %v512
    %v1483 = vunpack.c.l.b16 %v513
    %v1484 = vunpack.c.h.b16 %v513
    %v1485 = vunpack.c.l.b16 %v514
    %v1486 = vunpack.c.h.b16 %v514
    %v1487 = vunpack.c.l.b16 %v515
    %v1488 = vunpack.c.h.b16 %v515
    %v1489 = vunpack.c.l.b16 %v516
    %v1490 = vunpack.c.h.b16 %v516
    %v1491 = vunpack.c.l.b16 %v517
    %v1492 = vunpack.c.h.b16 %v517
    %v1493 = vunpack.c.l.b16 %v518
    %v1494 = vunpack.c.h.b16 %v518
    %v1495 = vunpack.c.l.b16 %v519
    %v1496 = vunpack.c.h.b16 %v519
    %v1497 = vunpack.c.l.b16 %v520
    %v1498 = vunpack.c.h.b16 %v520
    %v1499 = vunpack.c.l.b16 %v521
    %v1500 = vunpack.c.h.b16 %v521
    %v1501 = vunpack.c.l.b16 %v522
    %v1502 = vunpack.c.h.b16 %v522
    %v1503 = vunpack.c.l.b16 %v523
    %v1504 = vunpack.c.h.b16 %v523
    %v1505 = vunpack.c.l.b16 %v524
    %v1506 = vunpack.c.h.b16 %v524
    %v1507 = vunpack.c.l.b16 %v525
    %v1508 = vunpack.c.h.b16 %v525
    %v1509 = vunpack.c.l.b16 %v526
    %v1510 = vunpack.c.h.b16 %v526
    %v1511 = vunpack.c.l.b16 %v527
    %v1512 = vunpack.c.h.b16 %v527
    %v1513 = vunpack.c.l.b16 %v528
    %v1514 = vunpack.c.h.b16 %v528
    %v1515 = vunpack.c.l.b16 %v529
    %v1516 = vunpack.c.h.b16 %v529
    %v1517 = vunpack.c.l.b16 %v530
    %v1518 = vunpack.c.h.b16 %v530
    %v1519 = vunpack.c.l.b16 %v531
    %v1520 = vunpack.c.h.b16 %v531
    %v1521 = vunpack.c.l.b16 %v532
    %v1522 = vunpack.c.h.b16 %v532
    %v1523 = vunpack.c.l.b16 %v533
    %v1524 = vunpack.c.h.b16 %v533
    %v1525 = vunpack.c.l.b16 %v534
    %v1526 = vunpack.c.h.b16 %v534
    %v1527 = vunpack.c.l.b16 %v535
    %v1528 = vunpack.c.h.b16 %v535
    %v1529 = vunpack.c.l.b16 %v536
    %v1530 = vunpack.c.h.b16 %v536
    %v1531 = vunpack.c.l.b16 %v537
    %v1532 = vunpack.c.h.b16 %v537
    %v1533 = vunpack.c.l.b16 %v538
    %v1534 = vunpack.c.h.b16 %v538
    %v1535 = vunpack.c.l.b16 %v539
    %v1536 = vunpack.c.h.b16 %v539
    %v1537 = vunpack.c.l.b16 %v540
    %v1538 = vunpack.c.h.b16 %v540
    %v1539 = vunpack.c.l.b16 %v541
    %v1540 = vunpack.c.h.b16 %v541
    %v1541 = vunpack.c.l.b16 %v542
    %v1542 = vunpack.c.h.b16 %v542
    %v1543 = vunpack.c.l.b16 %v543
    %v1544 = vunpack.c.h.b16 %v543
    %v1545 = vunpack.c.l.b16 %v544
    %v1546 = vunpack.c.h.b16 %v544
    %v1547 = vunpack.c.l.b16 %v545
    %v1548 = vunpack.c.h.b16 %v545
    %v1549 = vunpack.c.l.b16 %v546
    %v1550 = vunpack.c.h.b16 %v546
    %v1551 = vunpack.c.l.b16 %v547
    %v1552 = vunpack.c.h.b16 %v547
    %v1553 = vunpack.c.l.b16 %v548
    %v1554 = vunpack.c.h.b16 %v548
    %v1555 = vunpack.c.l.b16 %v549
    %v1556 = vunpack.c.h.b16 %v549
    %v1557 = vunpack.c.l.b16 %v550
    %v1558 = vunpack.c.h.b16 %v550
    %v1559 = vunpack.c.l.b16 %v551
    %v1560 = vunpack.c.h.b16 %v551
    %v1561 = vunpack.c.l.b16 %v552
    %v1562 = vunpack.c.h.b16 %v552
    %v1563 = vunpack.c.l.b16 %v553
    %v1564 = vunpack.c.h.b16 %v553
    %v1565 = vunpack.c.l.b16 %v554
    %v1566 = vunpack.c.h.b16 %v554
    %v1567 = vunpack.c.l.b16 %v555
    %v1568 = vunpack.c.h.b16 %v555
    %v1569 = vunpack.c.l.b16 %v556
    %v1570 = vunpack.c.h.b16 %v556
    %v1571 = vunpack.c.l.b16 %v557
    %v1572 = vunpack.c.h.b16 %v557
    %v1573 = vunpack.c.l.b16 %v558
    %v1574 = vunpack.c.h.b16 %v558
    %v1575 = vunpack.c.l.b16 %v559
    %v1576 = vunpack.c.h.b16 %v559
    %v1577 = vunpack.c.l.b16 %v560
    %v1578 = vunpack.c.h.b16 %v560
    %v1579 = vunpack.c.l.b16 %v561
    %v1580 = vunpack.c.h.b16 %v561
    %v1581 = vunpack.c.l.b16 %v562
    %v1582 = vunpack.c.h.b16 %v562
    %v1583 = vunpack.c.l.b16 %v563
    %v1584 = vunpack.c.h.b16 %v563
    %v1585 = vunpack.c.l.b16 %v564
    %v1586 = vunpack.c.h.b16 %v564
    %v1587 = vunpack.c.l.b16 %v565
    %v1588 = vunpack.c.h.b16 %v565
    %v1589 = vunpack.c.l.b16 %v566
    %v1590 = vunpack.c.h.b16 %v566
    %v1591 = vunpack.c.l.b16 %v567
    %v1592 = vunpack.c.h.b16 %v567
    %v1593 = vunpack.c.l.b16 %v568
    %v1594 = vunpack.c.h.b16 %v568
    %v1595 = vunpack.c.l.b16 %v569
    %v1596 = vunpack.c.h.b16 %v569
    %v1597 = vunpack.c.l.b16 %v570
    %v1598 = vunpack.c.h.b16 %v570
    %v1599 = vunpack.c.l.b16 %v571
    %v1600 = vunpack.c.h.b16 %v571
    %v1601 = vunpack.c.l.b16 %v572
    %v1602 = vunpack.c.h.b16 %v572
    %v1603 = vunpack.c.l.b16 %v573
    %v1604 = vunpack.c.h.b16 %v573
    %v1605 = vunpack.c.l.b16 %v574
    %v1606 = vunpack.c.h.b16 %v574
    %v1607 = vunpack.c.l.b16 %v575
    %v1608 = vunpack.c.h.b16 %v575
    %v1609 = vunpack.c.l.b16 %v576
    %v1610 = vunpack.c.h.b16 %v576
    %v1611 = vunpack.c.l.b16 %v577
    %v1612 = vunpack.c.h.b16 %v577
    %v1613 = vunpack.c.l.b16 %v578
    %v1614 = vunpack.c.h.b16 %v578
    %v1615 = vunpack.c.l.b16 %v579
    %v1616 = vunpack.c.h.b16 %v579
    %v1617 = vunpack.c.l.b16 %v580
    %v1618 = vunpack.c.h.b16 %v580
    %v1619 = vunpack.c.l.b16 %v581
    %v1620 = vunpack.c.h.b16 %v581
    %v1621 = vunpack.c.l.b16 %v582
    %v1622 = vunpack.c.h.b16 %v582
    %v1623 = vunpack.c.l.b16 %v583
    %v1624 = vunpack.c.h.b16 %v583
    %v1625 = vunpack.c.l.b16 %v584
    %v1626 = vunpack.c.h.b16 %v584
    %v1627 = vunpack.c.l.b16 %v585
    %v1628 = vunpack.c.h.b16 %v585
    %v1629 = vunpack.c.l.b16 %v586
    %v1630 = vunpack.c.h.b16 %v586
    %v1631 = vunpack.c.l.b16 %v587
    %v1632 = vunpack.c.h.b16 %v587
    %v1633 = vunpack.c.l.b16 %v588
    %v1634 = vunpack.c.h.b16 %v588
    %v1635 = vunpack.c.l.b16 %v589
    %v1636 = vunpack.c.h.b16 %v589
    %v1637 = vunpack.c.l.b16 %v590
    %v1638 = vunpack.c.h.b16 %v590
    %v1639 = vunpack.c.l.b16 %v591
    %v1640 = vunpack.c.h.b16 %v591
    %v1641 = vunpack.c.l.b16 %v592
    %v1642 = vunpack.c.h.b16 %v592
    %v1643 = vunpack.c.l.b16 %v593
    %v1644 = vunpack.c.h.b16 %v593
    %v1645 = vunpack.c.l.b16 %v594
    %v1646 = vunpack.c.h.b16 %v594
    %v1647 = vunpack.c.l.b16 %v595
    %v1648 = vunpack.c.h.b16 %v595
    %v1649 = vunpack.c.l.b16 %v596
    %v1650 = vunpack.c.h.b16 %v596
    %v1651 = vunpack.c.l.b16 %v597
    %v1652 = vunpack.c.h.b16 %v597
    %v1653 = vunpack.c.l.b16 %v598
    %v1654 = vunpack.c.h.b16 %v598
    %v1655 = vunpack.c.l.b16 %v599
    %v1656 = vunpack.c.h.b16 %v599
    %v1657 = vunpack.c.l.b16 %v600
    %v1658 = vunpack.c.h.b16 %v600
    %v1659 = vunpack.c.l.b16 %v601
    %v1660 = vunpack.c.h.b16 %v601
    %v1661 = vunpack.c.l.b16 %v602
    %v1662 = vunpack.c.h.b16 %v602
    %v1663 = vunpack.c.l.b16 %v603
    %v1664 = vunpack.c.h.b16 %v603
    %v1665 = vunpack.c.l.b16 %v604
    %v1666 = vunpack.c.h.b16 %v604
    %v1667 = vunpack.c.l.b16 %v605
    %v1668 = vunpack.c.h.b16 %v605
    %v1669 = vunpack.c.l.b16 %v606
    %v1670 = vunpack.c.h.b16 %v606
    %v1671 = vunpack.c.l.b16 %v607
    %v1672 = vunpack.c.h.b16 %v607
    %v1673 = vunpack.c.l.b16 %v608
    %v1674 = vunpack.c.h.b16 %v608
    %v1675 = vunpack.c.l.b16 %v609
    %v1676 = vunpack.c.h.b16 %v609
    %v1677 = vunpack.c.l.b16 %v610
    %v1678 = vunpack.c.h.b16 %v610
    %v1679 = vunpack.c.l.b16 %v611
    %v1680 = vunpack.c.h.b16 %v611
    %v1681 = vunpack.c.l.b16 %v612
    %v1682 = vunpack.c.h.b16 %v612
    %v1683 = vunpack.c.l.b16 %v613
    %v1684 = vunpack.c.h.b16 %v613
    %v1685 = vunpack.c.l.b16 %v614
    %v1686 = vunpack.c.h.b16 %v614
    %v1687 = vunpack.c.l.b16 %v615
    %v1688 = vunpack.c.h.b16 %v615
    %v1689 = vunpack.c.l.b16 %v616
    %v1690 = vunpack.c.h.b16 %v616
    %v1691 = vunpack.c.l.b16 %v617
    %v1692 = vunpack.c.h.b16 %v617
    %v1693 = vunpack.c.l.b16 %v618
    %v1694 = vunpack.c.h.b16 %v618
    %v1695 = vunpack.c.l.b16 %v619
    %v1696 = vunpack.c.h.b16 %v619
    %v1697 = vunpack.c.l.b16 %v620
    %v1698 = vunpack.c.h.b16 %v620
    %v1699 = vunpack.c.l.b16 %v621
    %v1700 = vunpack.c.h.b16 %v621
    %v1701 = vunpack.c.l.b16 %v622
    %v1702 = vunpack.c.h.b16 %v622
    %v1703 = vunpack.c.l.b16 %v623
    %v1704 = vunpack.c.h.b16 %v623
    %v1705 = vunpack.c.l.b16 %v624
    %v1706 = vunpack.c.h.b16 %v624
    %v1707 = vunpack.c.l.b16 %v625
    %v1708 = vunpack.c.h.b16 %v625
    %v1709 = vunpack.c.l.b16 %v626
    %v1710 = vunpack.c.h.b16 %v626
    %v1711 = vunpack.c.l.b16 %v627
    %v1712 = vunpack.c.h.b16 %v627
    %v1713 = vunpack.c.l.b16 %v628
    %v1714 = vunpack.c.h.b16 %v628
    %v1715 = vunpack.c.l.b16 %v629
    %v1716 = vunpack.c.h.b16 %v629
    %v1717 = vunpack.c.l.b16 %v630
    %v1718 = vunpack.c.h.b16 %v630
    %v1719 = vunpack.c.l.b16 %v631
    %v1720 = vunpack.c.h.b16 %v631
    %v1721 = vunpack.c.l.b16 %v632
    %v1722 = vunpack.c.h.b16 %v632
    %v1723 = vunpack.c.l.b16 %v633
    %v1724 = vunpack.c.h.b16 %v633
    %v1725 = vunpack.c.l.b16 %v634
    %v1726 = vunpack.c.h.b16 %v634
    %v1727 = vunpack.c.l.b16 %v635
    %v1728 = vunpack.c.h.b16 %v635
    %v1729 = vunpack.c.l.b16 %v636
    %v1730 = vunpack.c.h.b16 %v636
    %v1731 = vunpack.c.l.b16 %v637
    %v1732 = vunpack.c.h.b16 %v637
    %v1733 = vunpack.c.l.b16 %v638
    %v1734 = vunpack.c.h.b16 %v638
    %v1735 = vunpack.c.l.b16 %v639
    %v1736 = vunpack.c.h.b16 %v639
    %v1737 = vunpack.c.l.b16 %v640
    %v1738 = vunpack.c.h.b16 %v640
    %v1739 = vunpack.c.l.b16 %v641
    %v1740 = vunpack.c.h.b16 %v641
    %v1741 = vunpack.c.l.b16 %v642
    %v1742 = vunpack.c.h.b16 %v642
    %v1743 = vunpack.c.l.b16 %v643
    %v1744 = vunpack.c.h.b16 %v643
    %v1745 = vunpack.c.l.b16 %v644
    %v1746 = vunpack.c.h.b16 %v644
    %v1747 = vunpack.c.l.b16 %v645
    %v1748 = vunpack.c.h.b16 %v645
    %v1749 = vunpack.c.l.b16 %v646
    %v1750 = vunpack.c.h.b16 %v646
    %v1751 = vunpack.c.l.b16 %v647
    %v1752 = vunpack.c.h.b16 %v647
    %v1753 = vunpack.c.l.b16 %v648
    %v1754 = vunpack.c.h.b16 %v648
    %v1755 = vunpack.c.l.b16 %v649
    %v1756 = vunpack.c.h.b16 %v649
    %v1757 = vunpack.c.l.b16 %v650
    %v1758 = vunpack.c.h.b16 %v650
    %v1759 = vunpack.c.l.b16 %v651
    %v1760 = vunpack.c.h.b16 %v651
    %v1761 = vunpack.c.l.b16 %v652
    %v1762 = vunpack.c.h.b16 %v652
    %v1763 = vunpack.c.l.b16 %v653
    %v1764 = vunpack.c.h.b16 %v653
    %v1765 = vunpack.c.l.b16 %v654
    %v1766 = vunpack.c.h.b16 %v654
    %v1767 = vunpack.c.l.b16 %v655
    %v1768 = vunpack.c.h.b16 %v655
    %v1769 = vunpack.c.l.b16 %v656
    %v1770 = vunpack.c.h.b16 %v656
    %v1771 = vunpack.c.l.b16 %v657
    %v1772 = vunpack.c.h.b16 %v657
    %v1773 = vunpack.c.l.b16 %v658
    %v1774 = vunpack.c.h.b16 %v658
    %v1775 = vunpack.c.l.b16 %v659
    %v1776 = vunpack.c.h.b16 %v659
    %v1777 = vunpack.c.l.b16 %v660
    %v1778 = vunpack.c.h.b16 %v660
    %v1779 = vunpack.c.l.b16 %v661
    %v1780 = vunpack.c.h.b16 %v661
    %v1781 = vunpack.c.l.b16 %v662
    %v1782 = vunpack.c.h.b16 %v662
    %v1783 = vunpack.c.l.b16 %v663
    %v1784 = vunpack.c.h.b16 %v663
    %v1785 = vunpack.c.l.b16 %v664
    %v1786 = vunpack.c.h.b16 %v664
    %v1787 = vunpack.c.l.b16 %v665
    %v1788 = vunpack.c.h.b16 %v665
    %v1789 = vunpack.c.l.b16 %v666
    %v1790 = vunpack.c.h.b16 %v666
    %v1791 = vunpack.c.l.b16 %v667
    %v1792 = vunpack.c.h.b16 %v667
    %v1793 = vunpack.c.l.b16 %v668
    %v1794 = vunpack.c.h.b16 %v668
    %v1795 = vunpack.c.l.b16 %v669
    %v1796 = vunpack.c.h.b16 %v669
    %v1797 = vunpack.c.l.b16 %v670
    %v1798 = vunpack.c.h.b16 %v670
    %v1799 = vunpack.c.l.b16 %v671
    %v1800 = vunpack.c.h.b16 %v671
    %v1801 = vunpack.c.l.b16 %v672
    %v1802 = vunpack.c.h.b16 %v672
    %v1803 = vunpack.c.l.b16 %v673
    %v1804 = vunpack.c.h.b16 %v673
    %v1805 = vunpack.c.l.b16 %v674
    %v1806 = vunpack.c.h.b16 %v674
    %v1807 = vunpack.c.l.b16 %v675
    %v1808 = vunpack.c.h.b16 %v675
    %v1809 = vunpack.c.l.b16 %v676
    %v1810 = vunpack.c.h.b16 %v676
    %v1811 = vunpack.c.l.b16 %v677
    %v1812 = vunpack.c.h.b16 %v677
    %v1813 = vunpack.c.l.b16 %v678
    %v1814 = vunpack.c.h.b16 %v678
    %v1815 = vunpack.c.l.b16 %v679
    %v1816 = vunpack.c.h.b16 %v679
    %v1817 = vunpack.c.l.b16 %v680
    %v1818 = vunpack.c.h.b16 %v680
    %v1819 = vunpack.c.l.b16 %v681
    %v1820 = vunpack.c.h.b16 %v681
    %v1821 = vunpack.c.l.b16 %v682
    %v1822 = vunpack.c.h.b16 %v682
    %v1823 = vunpack.c.l.b16 %v683
    %v1824 = vunpack.c.h.b16 %v683
    %v1825 = vunpack.c.l.b16 %v684
    %v1826 = vunpack.c.h.b16 %v684
    %v1827 = vunpack.c.l.b16 %v685
    %v1828 = vunpack.c.h.b16 %v685
    %v1829 = vunpack.c.l.b16 %v686
    %v1830 = vunpack.c.h.b16 %v686
    %v1831 = vunpack.c.l.b16 %v687
    %v1832 = vunpack.c.h.b16 %v687
    %v1833 = vunpack.c.l.b16 %v688
    %v1834 = vunpack.c.h.b16 %v688
    %v1835 = vunpack.c.l.b16 %v689
    %v1836 = vunpack.c.h.b16 %v689
    %v1837 = vunpack.c.l.b16 %v690
    %v1838 = vunpack.c.h.b16 %v690
    %v1839 = vunpack.c.l.b16 %v691
    %v1840 = vunpack.c.h.b16 %v691
    %v1841 = vunpack.c.l.b16 %v692
    %v1842 = vunpack.c.h.b16 %v692
    %v1843 = vunpack.c.l.b16 %v693
    %v1844 = vunpack.c.h.b16 %v693
    %v1845 = vunpack.c.l.b16 %v694
    %v1846 = vunpack.c.h.b16 %v694
    %v1847 = vunpack.c.l.b16 %v695
    %v1848 = vunpack.c.h.b16 %v695
    %v1849 = vunpack.c.l.b16 %v696
    %v1850 = vunpack.c.h.b16 %v696
    %v1851 = vunpack.c.l.b16 %v697
    %v1852 = vunpack.c.h.b16 %v697
    %v1853 = vunpack.c.l.b16 %v698
    %v1854 = vunpack.c.h.b16 %v698
    %v1855 = vunpack.c.l.b16 %v699
    %v1856 = vunpack.c.h.b16 %v699
    %v1857 = vunpack.c.l.b16 %v700
    %v1858 = vunpack.c.h.b16 %v700
    %v1859 = vunpack.c.l.b16 %v701
    %v1860 = vunpack.c.h.b16 %v701
    %v1861 = vunpack.c.l.b16 %v702
    %v1862 = vunpack.c.h.b16 %v702
    %v1863 = vunpack.c.l.b16 %v703
    %v1864 = vunpack.c.h.b16 %v703
    %v1865 = vunpack.c.l.b16 %v704
    %v1866 = vunpack.c.h.b16 %v704
    %v1867 = vunpack.c.l.b16 %v705
    %v1868 = vunpack.c.h.b16 %v705
    %v1869 = vunpack.c.l.b16 %v706
    %v1870 = vunpack.c.h.b16 %v706
    %v1871 = vunpack.c.l.b16 %v707
    %v1872 = vunpack.c.h.b16 %v707
    %v1873 = vunpack.c.l.b16 %v708
    %v1874 = vunpack.c.h.b16 %v708
    %v1875 = vunpack.c.l.b16 %v709
    %v1876 = vunpack.c.h.b16 %v709
    %v1877 = vunpack.c.l.b16 %v710
    %v1878 = vunpack.c.h.b16 %v710
    %v1879 = vunpack.c.l.b16 %v711
    %v1880 = vunpack.c.h.b16 %v711
    %v1881 = vunpack.c.l.b16 %v712
    %v1882 = vunpack.c.h.b16 %v712
    %v1883 = vunpack.c.l.b16 %v713
    %v1884 = vunpack.c.h.b16 %v713
    %v1885 = vunpack.c.l.b16 %v714
    %v1886 = vunpack.c.h.b16 %v714
    %v1887 = vunpack.c.l.b16 %v715
    %v1888 = vunpack.c.h.b16 %v715
    %v1889 = vunpack.c.l.b16 %v716
    %v1890 = vunpack.c.h.b16 %v716
    %v1891 = vpack.c.b16 %v1127, %v1123
    %v1892 = vpack.c.b16 %v1128, %v1124
    %v1893 = vpack.c.b16 %v1129, %v1125
    %v1894 = vpack.c.b16 %v1130, %v1126
    %v1895 = vpack.c.b16 %v1135, %v1131
    %v1896 = vpack.c.b16 %v1136, %v1132
    %v1897 = vpack.c.b16 %v1137, %v1133
    %v1898 = vpack.c.b16 %v1138, %v1134
    %v1899 = vpack.c.b16 %v1143, %v1139
    %v1900 = vpack.c.b16 %v1144, %v1140
    %v1901 = vpack.c.b16 %v1145, %v1141
    %v1902 = vpack.c.b16 %v1146, %v1142
    %v1903 = vpack.c.b16 %v1151, %v1147
    %v1904 = vpack.c.b16 %v1152, %v1148
    %v1905 = vpack.c.b16 %v1153, %v1149
    %v1906 = vpack.c.b16 %v1154, %v1150
    %v1907 = vpack.c.b16 %v1159, %v1155
    %v1908 = vpack.c.b16 %v1160, %v1156
    %v1909 = vpack.c.b16 %v1161, %v1157
    %v1910 = vpack.c.b16 %v1162, %v1158
    %v1911 = vpack.c.b16 %v1167, %v1163
    %v1912 = vpack.c.b16 %v1168, %v1164
    %v1913 = vpack.c.b16 %v1169, %v1165
    %v1914 = vpack.c.b16 %v1170, %v1166
    %v1915 = vpack.c.b16 %v1175, %v1171
    %v1916 = vpack.c.b16 %v1176, %v1172
    %v1917 = vpack.c.b16 %v1177, %v1173
    %v1918 = vpack.c.b16 %v1178, %v1174
    %v1919 = vpack.c.b16 %v1183, %v1179
    %v1920 = vpack.c.b16 %v1184, %v1180
    %v1921 = vpack.c.b16 %v1185, %v1181
    %v1922 = vpack.c.b16 %v1186, %v1182
    %v1923 = vpack.c.b16 %v1191, %v1187
    %v1924 = vpack.c.b16 %v1192, %v1188
    %v1925 = vpack.c.b16 %v1193, %v1189
    %v1926 = vpack.c.b16 %v1194, %v1190
    %v1927 = vpack.c.b16 %v1199, %v1195
    %v1928 = vpack.c.b16 %v1200, %v1196
    %v1929 = vpack.c.b16 %v1201, %v1197
    %v1930 = vpack.c.b16 %v1202, %v1198
    %v1931 = vpack.c.b16 %v1207, %v1203
    %v1932 = vpack.c.b16 %v1208, %v1204
    %v1933 = vpack.c.b16 %v1209, %v1205
    %v1934 = vpack.c.b16 %v1210, %v1206
    %v1935 = vpack.c.b16 %v1215, %v1211
    %v1936 = vpack.c.b16 %v1216, %v1212
    %v1937 = vpack.c.b16 %v1217, %v1213
    %v1938 = vpack.c.b16 %v1218, %v1214
    %v1939 = vpack.c.b16 %v1223, %v1219
    %v1940 = vpack.c.b16 %v1224, %v1220
    %v1941 = vpack.c.b16 %v1225, %v1221
    %v1942 = vpack.c.b16 %v1226, %v1222
    %v1943 = vpack.c.b16 %v1231, %v1227
    %v1944 = vpack.c.b16 %v1232, %v1228
    %v1945 = vpack.c.b16 %v1233, %v1229
    %v1946 = vpack.c.b16 %v1234, %v1230
    %v1947 = vpack.c.b16 %v1239, %v1235
    %v1948 = vpack.c.b16 %v1240, %v1236
    %v1949 = vpack.c.b16 %v1241, %v1237
    %v1950 = vpack.c.b16 %v1242, %v1238
    %v1951 = vpack.c.b16 %v1247, %v1243
    %v1952 = vpack.c.b16 %v1248, %v1244
    %v1953 = vpack.c.b16 %v1249, %v1245
    %v1954 = vpack.c.b16 %v1250, %v1246
    %v1955 = vpack.c.b16 %v1255, %v1251
    %v1956 = vpack.c.b16 %v1256, %v1252
    %v1957 = vpack.c.b16 %v1257, %v1253
    %v1958 = vpack.c.b16 %v1258, %v1254
    %v1959 = vpack.c.b16 %v1263, %v1259
    %v1960 = vpack.c.b16 %v1264, %v1260
    %v1961 = vpack.c.b16 %v1265, %v1261
    %v1962 = vpack.c.b16 %v1266, %v1262
    %v1963 = vpack.c.b16 %v1271, %v1267
    %v1964 = vpack.c.b16 %v1272, %v1268
    %v1965 = vpack.c.b16 %v1273, %v1269
    %v1966 = vpack.c.b16 %v1274, %v1270
    %v1967 = vpack.c.b16 %v1279, %v1275
    %v1968 = vpack.c.b16 %v1280, %v1276
    %v1969 = vpack.c.b16 %v1281, %v1277
    %v1970 = vpack.c.b16 %v1282, %v1278
    %v1971 = vpack.c.b16 %v1287, %v1283
    %v1972 = vpack.c.b16 %v1288, %v1284
    %v1973 = vpack.c.b16 %v1289, %v1285
    %v1974 = vpack.c.b16 %v1290, %v1286
    %v1975 = vpack.c.b16 %v1295, %v1291
    %v1976 = vpack.c.b16 %v1296, %v1292
    %v1977 = vpack.c.b16 %v1297, %v1293
    %v1978 = vpack.c.b16 %v1298, %v1294
    %v1979 = vpack.c.b16 %v1303, %v1299
    %v1980 = vpack.c.b16 %v1304, %v1300
    %v1981 = vpack.c.b16 %v1305, %v1301
    %v1982 = vpack.c.b16 %v1306, %v1302
    %v1983 = vpack.c.b16 %v1311, %v1307
    %v1984 = vpack.c.b16 %v1312, %v1308
    %v1985 = vpack.c.b16 %v1313, %v1309
    %v1986 = vpack.c.b16 %v1314, %v1310
    %v1987 = vpack.c.b16 %v1319, %v1315
    %v1988 = vpack.c.b16 %v1320, %v1316
    %v1989 = vpack.c.b16 %v1321, %v1317
    %v1990 = vpack.c.b16 %v1322, %v1318
    %v1991 = vpack.c.b16 %v1327, %v1323
    %v1992 = vpack.c.b16 %v1328, %v1324
    %v1993 = vpack.c.b16 %v1329, %v1325
    %v1994 = vpack.c.b16 %v1330, %v1326
    %v1995 = vpack.c.b16 %v1335, %v1331
    %v1996 = vpack.c.b16 %v1336, %v1332
    %v1997 = vpack.c.b16 %v1337, %v1333
    %v1998 = vpack.c.b16 %v1338, %v1334
    %v1999 = vpack.c.b16 %v1343, %v1339
    %v2000 = vpack.c.b16 %v1344, %v1340
    %v2001 = vpack.c.b16 %v1345, %v1341
    %v2002 = vpack.c.b16 %v1346, %v1342
    %v2003 = vpack.c.b16 %v1351, %v1347
    %v2004 = vpack.c.b16 %v1352, %v1348
    %v2005 = vpack.c.b16 %v1353, %v1349
    %v2006 = vpack.c.b16 %v1354, %v1350
    %v2007 = vpack.c.b16 %v1359, %v1355
    %v2008 = vpack.c.b16 %v1360, %v1356
    %v2009 = vpack.c.b16 %v1361, %v1357
    %v2010 = vpack.c.b16 %v1362, %v1358
    %v2011 = vpack.c.b16 %v1367, %v1363
    %v2012 = vpack.c.b16 %v1368, %v1364
    %v2013 = vpack.c.b16 %v1369, %v1365
    %v2014 = vpack.c.b16 %v1370, %v1366
    %v2015 = vpack.c.b16 %v1375, %v1371
    %v2016 = vpack.c.b16 %v1376, %v1372
    %v2017 = vpack.c.b16 %v1377, %v1373
    %v2018 = vpack.c.b16 %v1378, %v1374
    %v2019 = vpack.c.b16 %v1383, %v1379
    %v2020 = vpack.c.b16 %v1384, %v1380
    %v2021 = vpack.c.b16 %v1385, %v1381
    %v2022 = vpack.c.b16 %v1386, %v1382
    %v2023 = vpack.c.b16 %v1391, %v1387
    %v2024 = vpack.c.b16 %v1392, %v1388
    %v2025 = vpack.c.b16 %v1393, %v1389
    %v2026 = vpack.c.b16 %v1394, %v1390
    %v2027 = vpack.c.b16 %v1399, %v1395
    %v2028 = vpack.c.b16 %v1400, %v1396
    %v2029 = vpack.c.b16 %v1401, %v1397
    %v2030 = vpack.c.b16 %v1402, %v1398
    %v2031 = vpack.c.b16 %v1407, %v1403
    %v2032 = vpack.c.b16 %v1408, %v1404
    %v2033 = vpack.c.b16 %v1409, %v1405
    %v2034 = vpack.c.b16 %v1410, %v1406
    %v2035 = vpack.c.b16 %v1415, %v1411
    %v2036 = vpack.c.b16 %v1416, %v1412
    %v2037 = vpack.c.b16 %v1417, %v1413
    %v2038 = vpack.c.b16 %v1418, %v1414
    %v2039 = vpack.c.b16 %v1423, %v1419
    %v2040 = vpack.c.b16 %v1424, %v1420
    %v2041 = vpack.c.b16 %v1425, %v1421
    %v2042 = vpack.c.b16 %v1426, %v1422
    %v2043 = vpack.c.b16 %v1431, %v1427
    %v2044 = vpack.c.b16 %v1432, %v1428
    %v2045 = vpack.c.b16 %v1433, %v1429
    %v2046 = vpack.c.b16 %v1434, %v1430
    %v2047 = vpack.c.b16 %v1439, %v1435
    %v2048 = vpack.c.b16 %v1440, %v1436
    %v2049 = vpack.c.b16 %v1441, %v1437
    %v2050 = vpack.c.b16 %v1442, %v1438
    %v2051 = vpack.c.b16 %v1447, %v1443
    %v2052 = vpack.c.b16 %v1448, %v1444
    %v2053 = vpack.c.b16 %v1449, %v1445
    %v2054 = vpack.c.b16 %v1450, %v1446
    %v2055 = vpack.c.b16 %v1455, %v1451
    %v2056 = vpack.c.b16 %v1456, %v1452
    %v2057 = vpack.c.b16 %v1457, %v1453
    %v2058 = vpack.c.b16 %v1458, %v1454
    %v2059 = vpack.c.b16 %v1463, %v1459
    %v2060 = vpack.c.b16 %v1464, %v1460
    %v2061 = vpack.c.b16 %v1465, %v1461
    %v2062 = vpack.c.b16 %v1466, %v1462
    %v2063 = vpack.c.b16 %v1471, %v1467
    %v2064 = vpack.c.b16 %v1472, %v1468
    %v2065 = vpack.c.b16 %v1473, %v1469
    %v2066 = vpack.c.b16 %v1474, %v1470
    %v2067 = vpack.c.b16 %v1479, %v1475
    %v2068 = vpack.c.b16 %v1480, %v1476
    %v2069 = vpack.c.b16 %v1481, %v1477
    %v2070 = vpack.c.b16 %v1482, %v1478
    %v2071 = vpack.c.b16 %v1487, %v1483
    %v2072 = vpack.c.b16 %v1488, %v1484
    %v2073 = vpack.c.b16 %v1489, %v1485
    %v2074 = vpack.c.b16 %v1490, %v1486
    %v2075 = vpack.c.b16 %v1495, %v1491
    %v2076 = vpack.c.b16 %v1496, %v1492
    %v2077 = vpack.c.b16 %v1497, %v1493
    %v2078 = vpack.c.b16 %v1498, %v1494
    %v2079 = vpack.c.b16 %v1503, %v1499
    %v2080 = vpack.c.b16 %v1504, %v1500
    %v2081 = vpack.c.b16 %v1505, %v1501
    %v2082 = vpack.c.b16 %v1506, %v1502
    %v2083 = vpack.c.b16 %v1511, %v1507
    %v2084 = vpack.c.b16 %v1512, %v1508
    %v2085 = vpack.c.b16 %v1513, %v1509
    %v2086 = vpack.c.b16 %v1514, %v1510
    %v2087 = vpack.c.b16 %v1519, %v1515
    %v2088 = vpack.c.b16 %v1520, %v1516
    %v2089 = vpack.c.b16 %v1521, %v1517
    %v2090 = vpack.c.b16 %v1522, %v1518
    %v2091 = vpack.c.b16 %v1527, %v1523
    %v2092 = vpack.c.b16 %v1528, %v1524
    %v2093 = vpack.c.b16 %v1529, %v1525
    %v2094 = vpack.c.b16 %v1530, %v1526
    %v2095 = vpack.c.b16 %v1535, %v1531
    %v2096 = vpack.c.b16 %v1536, %v1532
    %v2097 = vpack.c.b16 %v1537, %v1533
    %v2098 = vpack.c.b16 %v1538, %v1534
    %v2099 = vpack.c.b16 %v1543, %v1539
    %v2100 = vpack.c.b16 %v1544, %v1540
    %v2101 = vpack.c.b16 %v1545, %v1541
    %v2102 = vpack.c.b16 %v1546, %v1542
    %v2103 = vpack.c.b16 %v1551, %v1547
    %v2104 = vpack.c.b16 %v1552, %v1548
    %v2105 = vpack.c.b16 %v1553, %v1549
    %v2106 = vpack.c.b16 %v1554, %v1550
    %v2107 = vpack.c.b16 %v1559, %v1555
    %v2108 = vpack.c.b16 %v1560, %v1556
    %v2109 = vpack.c.b16 %v1561, %v1557
    %v2110 = vpack.c.b16 %v1562, %v1558
    %v2111 = vpack.c.b16 %v1567, %v1563
    %v2112 = vpack.c.b16 %v1568, %v1564
    %v2113 = vpack.c.b16 %v1569, %v1565
    %v2114 = vpack.c.b16 %v1570, %v1566
    %v2115 = vpack.c.b16 %v1575, %v1571
    %v2116 = vpack.c.b16 %v1576, %v1572
    %v2117 = vpack.c.b16 %v1577, %v1573
    %v2118 = vpack.c.b16 %v1578, %v1574
    %v2119 = vpack.c.b16 %v1583, %v1579
    %v2120 = vpack.c.b16 %v1584, %v1580
    %v2121 = vpack.c.b16 %v1585, %v1581
    %v2122 = vpack.c.b16 %v1586, %v1582
    %v2123 = vpack.c.b16 %v1591, %v1587
    %v2124 = vpack.c.b16 %v1592, %v1588
    %v2125 = vpack.c.b16 %v1593, %v1589
    %v2126 = vpack.c.b16 %v1594, %v1590
    %v2127 = vpack.c.b16 %v1599, %v1595
    %v2128 = vpack.c.b16 %v1600, %v1596
    %v2129 = vpack.c.b16 %v1601, %v1597
    %v2130 = vpack.c.b16 %v1602, %v1598
    %v2131 = vpack.c.b16 %v1607, %v1603
    %v2132 = vpack.c.b16 %v1608, %v1604
    %v2133 = vpack.c.b16 %v1609, %v1605
    %v2134 = vpack.c.b16 %v1610, %v1606
    %v2135 = vpack.c.b16 %v1615, %v1611
    %v2136 = vpack.c.b16 %v1616, %v1612
    %v2137 = vpack.c.b16 %v1617, %v1613
    %v2138 = vpack.c.b16 %v1618, %v1614
    %v2139 = vpack.c.b16 %v1623, %v1619
    %v2140 = vpack.c.b16 %v1624, %v1620
    %v2141 = vpack.c.b16 %v1625, %v1621
    %v2142 = vpack.c.b16 %v1626, %v1622
    %v2143 = vpack.c.b16 %v1631, %v1627
    %v2144 = vpack.c.b16 %v1632, %v1628
    %v2145 = vpack.c.b16 %v1633, %v1629
    %v2146 = vpack.c.b16 %v1634, %v1630
    %v2147 = vpack.c.b16 %v1639, %v1635
    %v2148 = vpack.c.b16 %v1640, %v1636
    %v2149 = vpack.c.b16 %v1641, %v1637
    %v2150 = vpack.c.b16 %v1642, %v1638
    %v2151 = vpack.c.b16 %v1647, %v1643
    %v2152 = vpack.c.b16 %v1648, %v1644
    %v2153 = vpack.c.b16 %v1649, %v1645
    %v2154 = vpack.c.b16 %v1650, %v1646
    %v2155 = vpack.c.b16 %v1655, %v1651
    %v2156 = vpack.c.b16 %v1656, %v1652
    %v2157 = vpack.c.b16 %v1657, %v1653
    %v2158 = vpack.c.b16 %v1658, %v1654
    %v2159 = vpack.c.b16 %v1663, %v1659
    %v2160 = vpack.c.b16 %v1664, %v1660
    %v2161 = vpack.c.b16 %v1665, %v1661
    %v2162 = vpack.c.b16 %v1666, %v1662
    %v2163 = vpack.c.b16 %v1671, %v1667
    %v2164 = vpack.c.b16 %v1672, %v1668
    %v2165 = vpack.c.b16 %v1673, %v1669
    %v2166 = vpack.c.b16 %v1674, %v1670
    %v2167 = vpack.c.b16 %v1679, %v1675
    %v2168 = vpack.c.b16 %v1680, %v1676
    %v2169 = vpack.c.b16 %v1681, %v1677
    %v2170 = vpack.c.b16 %v1682, %v1678
    %v2171 = vpack.c.b16 %v1687, %v1683
    %v2172 = vpack.c.b16 %v1688, %v1684
    %v2173 = vpack.c.b16 %v1689, %v1685
    %v2174 = vpack.c.b16 %v1690, %v1686
    %v2175 = vpack.c.b16 %v1695, %v1691
    %v2176 = vpack.c.b16 %v1696, %v1692
    %v2177 = vpack.c.b16 %v1697, %v1693
    %v2178 = vpack.c.b16 %v1698, %v1694
    %v2179 = vpack.c.b16 %v1703, %v1699
    %v2180 = vpack.c.b16 %v1704, %v1700
    %v2181 = vpack.c.b16 %v1705, %v1701
    %v2182 = vpack.c.b16 %v1706, %v1702
    %v2183 = vpack.c.b16 %v1711, %v1707
    %v2184 = vpack.c.b16 %v1712, %v1708
    %v2185 = vpack.c.b16 %v1713, %v1709
    %v2186 = vpack.c.b16 %v1714, %v1710
    %v2187 = vpack.c.b16 %v1719, %v1715
    %v2188 = vpack.c.b16 %v1720, %v1716
    %v2189 = vpack.c.b16 %v1721, %v1717
    %v2190 = vpack.c.b16 %v1722, %v1718
    %v2191 = vpack.c.b16 %v1727, %v1723
    %v2192 = vpack.c.b16 %v1728, %v1724
    %v2193 = vpack.c.b16 %v1729, %v1725
    %v2194 = vpack.c.b16 %v1730, %v1726
    %v2195 = vpack.c.b16 %v1735, %v1731
    %v2196 = vpack.c.b16 %v1736, %v1732
    %v2197 = vpack.c.b16 %v1737, %v1733
    %v2198 = vpack.c.b16 %v1738, %v1734
    %v2199 = vpack.c.b16 %v1743, %v1739
    %v2200 = vpack.c.b16 %v1744, %v1740
    %v2201 = vpack.c.b16 %v1745, %v1741
    %v2202 = vpack.c.b16 %v1746, %v1742
    %v2203 = vpack.c.b16 %v1751, %v1747
    %v2204 = vpack.c.b16 %v1752, %v1748
    %v2205 = vpack.c.b16 %v1753, %v1749
    %v2206 = vpack.c.b16 %v1754, %v1750
    %v2207 = vpack.c.b16 %v1759, %v1755
    %v2208 = vpack.c.b16 %v1760, %v1756
    %v2209 = vpack.c.b16 %v1761, %v1757
    %v2210 = vpack.c.b16 %v1762, %v1758
    %v2211 = vpack.c.b16 %v1767, %v1763
    %v2212 = vpack.c.b16 %v1768, %v1764
    %v2213 = vpack.c.b16 %v1769, %v1765
    %v2214 = vpack.c.b16 %v1770, %v1766
    %v2215 = vpack.c.b16 %v1775, %v1771
    %v2216 = vpack.c.b16 %v1776, %v1772
    %v2217 = vpack.c.b16 %v1777, %v1773
    %v2218 = vpack.c.b16 %v1778, %v1774
    %v2219 = vpack.c.b16 %v1783, %v1779
    %v2220 = vpack.c.b16 %v1784, %v1780
    %v2221 = vpack.c.b16 %v1785, %v1781
    %v2222 = vpack.c.b16 %v1786, %v1782
    %v2223 = vpack.c.b16 %v1791, %v1787
    %v2224 = vpack.c.b16 %v1792, %v1788
    %v2225 = vpack.c.b16 %v1793, %v1789
    %v2226 = vpack.c.b16 %v1794, %v1790
    %v2227 = vpack.c.b16 %v1799, %v1795
    %v2228 = vpack.c.b16 %v1800, %v1796
    %v2229 = vpack.c.b16 %v1801, %v1797
    %v2230 = vpack.c.b16 %v1802, %v1798
    %v2231 = vpack.c.b16 %v1807, %v1803
    %v2232 = vpack.c.b16 %v1808, %v1804
    %v2233 = vpack.c.b16 %v1809, %v1805
    %v2234 = vpack.c.b16 %v1810, %v1806
    %v2235 = vpack.c.b16 %v1815, %v1811
    %v2236 = vpack.c.b16 %v1816, %v1812
    %v2237 = vpack.c.b16 %v1817, %v1813
    %v2238 = vpack.c.b16 %v1818, %v1814
    %v2239 = vpack.c.b16 %v1823, %v1819
    %v2240 = vpack.c.b16 %v1824, %v1820
    %v2241 = vpack.c.b16 %v1825, %v1821
    %v2242 = vpack.c.b16 %v1826, %v1822
    %v2243 = vpack.c.b16 %v1831, %v1827
    %v2244 = vpack.c.b16 %v1832, %v1828
    %v2245 = vpack.c.b16 %v1833, %v1829
    %v2246 = vpack.c.b16 %v1834, %v1830
    %v2247 = vpack.c.b16 %v1839, %v1835
    %v2248 = vpack.c.b16 %v1840, %v1836
    %v2249 = vpack.c.b16 %v1841, %v1837
    %v2250 = vpack.c.b16 %v1842, %v1838
    %v2251 = vpack.c.b16 %v1847, %v1843
    %v2252 = vpack.c.b16 %v1848, %v1844
    %v2253 = vpack.c.b16 %v1849, %v1845
    %v2254 = vpack.c.b16 %v1850, %v1846
    %v2255 = vpack.c.b16 %v1855, %v1851
    %v2256 = vpack.c.b16 %v1856, %v1852
    %v2257 = vpack.c.b16 %v1857, %v1853
    %v2258 = vpack.c.b16 %v1858, %v1854
    %v2259 = vpack.c.b16 %v1863, %v1859
    %v2260 = vpack.c.b16 %v1864, %v1860
    %v2261 = vpack.c.b16 %v1865, %v1861
    %v2262 = vpack.c.b16 %v1866, %v1862
    %v2263 = vpack.c.b16 %v1871, %v1867
    %v2264 = vpack.c.b16 %v1872, %v1868
    %v2265 = vpack.c.b16 %v1873, %v1869
    %v2266 = vpack.c.b16 %v1874, %v1870
    %v2267 = vpack.c.b16 %v1879, %v1875
    %v2268 = vpack.c.b16 %v1880, %v1876
    %v2269 = vpack.c.b16 %v1881, %v1877
    %v2270 = vpack.c.b16 %v1882, %v1878
    %v2271 = vpack.c.b16 %v1887, %v1883
    %v2272 = vpack.c.b16 %v1888, %v1884
    %v2273 = vpack.c.b16 %v1889, %v1885
    %v2274 = vpack.c.b16 %v1890, %v1886
    %2659 = vmatprep.subr.bf16.mxu0 %v1892
    %2660 = vmatpush1.bf16.msra.mxu0 %v1891
    %2661 = vmatprep.subr.bf16.mxu0 %v1896
    %2662 = vmatpush1.bf16.msra.mxu0 %v1895
    %2663 = vmatprep.subr.bf16.mxu0 %v1900
    %2664 = vmatpush1.bf16.msra.mxu0 %v1899
    %2665 = vmatprep.subr.bf16.mxu0 %v1904
    %2666 = vmatpush1.bf16.msra.mxu0 %v1903
    %2667 = vmatprep.subr.bf16.mxu0 %v1908
    %2668 = vmatpush1.bf16.msra.mxu0 %v1907
    %2669 = vmatprep.subr.bf16.mxu0 %v1912
    %2670 = vmatpush1.bf16.msra.mxu0 %v1911
    %2671 = vmatprep.subr.bf16.mxu0 %v1916
    %2672 = vmatpush1.bf16.msra.mxu0 %v1915
    %2673 = vmatprep.subr.bf16.mxu0 %v1920
    %2674 = vmatpush1.bf16.msra.mxu0 %v1919
    %2675 = vmatprep.subr.bf16.mxu0 %v1924
    %2676 = vmatpush1.bf16.msra.mxu0 %v1923
    %2677 = vmatprep.subr.bf16.mxu0 %v1928
    %2678 = vmatpush1.bf16.msra.mxu0 %v1927
    %2679 = vmatprep.subr.bf16.mxu0 %v1932
    %2680 = vmatpush1.bf16.msra.mxu0 %v1931
    %2681 = vmatprep.subr.bf16.mxu0 %v1936
    %2682 = vmatpush1.bf16.msra.mxu0 %v1935
    %2683 = vmatprep.subr.bf16.mxu0 %v1940
    %2684 = vmatpush1.bf16.msra.mxu0 %v1939
    %2685 = vmatprep.subr.bf16.mxu0 %v1944
    %2686 = vmatpush1.bf16.msra.mxu0 %v1943
    %2687 = vmatprep.subr.bf16.mxu0 %v1948
    %2688 = vmatpush1.bf16.msra.mxu0 %v1947
    %2689 = vmatprep.subr.bf16.mxu0 %v1952
    %2690 = vmatpush1.bf16.msra.mxu0 %v1951
    %2691 = vmatprep.mubr.bf16.mxu0 %v310
    %2692 = vmatmul.mubr.bf16.gmra.mrb[0].mxu0 %v309
    %v2693 = vpop.f32.mrb[0].mxu0
    %v2694 = vadd.f32 %v722, %v2693
    %v2695 = vpop.f32.mrb[0].mxu0
    %v2696 = vadd.f32 %v726, %v2695
    %v2697 = vpop.f32.mrb[0].mxu0
    %v2698 = vadd.f32 %v722, %v2697
    %v2699 = vpop.f32.mrb[0].mxu0
    %v2700 = vadd.f32 %v726, %v2699
    %2701 = vmatprep.mubr.bf16.mxu0 %v322
    %2702 = vmatmul.mubr.bf16.gmra.mrb[0].mxu0 %v321
    %v2703 = vpop.f32.mrb[0].mxu0
    %v2704 = vadd.f32 %v722, %v2703
    %v2705 = vpop.f32.mrb[0].mxu0
    %v2706 = vadd.f32 %v726, %v2705
    %v2707 = vpop.f32.mrb[0].mxu0
    %v2708 = vadd.f32 %v722, %v2707
    %v2709 = vpop.f32.mrb[0].mxu0
    %v2710 = vadd.f32 %v726, %v2709
    %2711 = vdwg.mxu0
    %2712 = vmatprep.subr.bf16.mxu0 %v1956
    %2713 = vmatpush1.bf16.msra.mxu0 %v1955
    %2714 = vmatprep.subr.bf16.mxu0 %v1960
    %2715 = vmatpush1.bf16.msra.mxu0 %v1959
    %2716 = vmatprep.subr.bf16.mxu0 %v1964
    %2717 = vmatpush1.bf16.msra.mxu0 %v1963
    %2718 = vmatprep.subr.bf16.mxu0 %v1968
    %2719 = vmatpush1.bf16.msra.mxu0 %v1967
    %2720 = vmatprep.subr.bf16.mxu0 %v1972
    %2721 = vmatpush1.bf16.msra.mxu0 %v1971
    %2722 = vmatprep.subr.bf16.mxu0 %v1976
    %2723 = vmatpush1.bf16.msra.mxu0 %v1975
    %2724 = vmatprep.subr.bf16.mxu0 %v1980
    %2725 = vmatpush1.bf16.msra.mxu0 %v1979
    %2726 = vmatprep.subr.bf16.mxu0 %v1984
    %2727 = vmatpush1.bf16.msra.mxu0 %v1983
    %2728 = vmatprep.subr.bf16.mxu0 %v1988
    %2729 = vmatpush1.bf16.msra.mxu0 %v1987
    %2730 = vmatprep.subr.bf16.mxu0 %v1992
    %2731 = vmatpush1.bf16.msra.mxu0 %v1991
    %2732 = vmatprep.subr.bf16.mxu0 %v1996
    %2733 = vmatpush1.bf16.msra.mxu0 %v1995
    %2734 = vmatprep.subr.bf16.mxu0 %v2000
    %2735 = vmatpush1.bf16.msra.mxu0 %v1999
    %2736 = vmatprep.subr.bf16.mxu0 %v2004
    %2737 = vmatpush1.bf16.msra.mxu0 %v2003
    %2738 = vmatprep.subr.bf16.mxu0 %v2008
    %2739 = vmatpush1.bf16.msra.mxu0 %v2007
    %2740 = vmatprep.subr.bf16.mxu0 %v2012
    %2741 = vmatpush1.bf16.msra.mxu0 %v2011
    %2742 = vmatprep.subr.bf16.mxu0 %v2016
    %2743 = vmatpush1.bf16.msra.mxu0 %v2015
    %2744 = vmatprep.mubr.bf16.mxu0 %v312
    %2745 = vmatmul.mubr.bf16.gmra.mrb[0].mxu0 %v311
    %v2746 = vpop.f32.mrb[0].mxu0
    %v2747 = vadd.f32 %v2694, %v2746
    %v2748 = vpop.f32.mrb[0].mxu0
    %v2749 = vadd.f32 %v2696, %v2748
    %v2750 = vpop.f32.mrb[0].mxu0
    %v2751 = vadd.f32 %v2698, %v2750
    %v2752 = vpop.f32.mrb[0].mxu0
    %v2753 = vadd.f32 %v2700, %v2752
    %2754 = vmatprep.mubr.bf16.mxu0 %v324
    %2755 = vmatmul.mubr.bf16.gmra.mrb[0].mxu0 %v323
    %v2756 = vpop.f32.mrb[0].mxu0
    %v2757 = vadd.f32 %v2704, %v2756
    %v2758 = vpop.f32.mrb[0].mxu0
    %v2759 = vadd.f32 %v2706, %v2758
    %v2760 = vpop.f32.mrb[0].mxu0
    %v2761 = vadd.f32 %v2708, %v2760
    %v2762 = vpop.f32.mrb[0].mxu0
    %v2763 = vadd.f32 %v2710, %v2762
    %2764 = vdwg.mxu0
    %2765 = vmatprep.subr.bf16.mxu0 %v2020
    %2766 = vmatpush1.bf16.msra.mxu0 %v2019
    %2767 = vmatprep.subr.bf16.mxu0 %v2024
    %2768 = vmatpush1.bf16.msra.mxu0 %v2023
    %2769 = vmatprep.subr.bf16.mxu0 %v2028
    %2770 = vmatpush1.bf16.msra.mxu0 %v2027
    %2771 = vmatprep.subr.bf16.mxu0 %v2032
    %2772 = vmatpush1.bf16.msra.mxu0 %v2031
    %2773 = vmatprep.subr.bf16.mxu0 %v2036
    %2774 = vmatpush1.bf16.msra.mxu0 %v2035
    %2775 = vmatprep.subr.bf16.mxu0 %v2040
    %2776 = vmatpush1.bf16.msra.mxu0 %v2039
    %2777 = vmatprep.subr.bf16.mxu0 %v2044
    %2778 = vmatpush1.bf16.msra.mxu0 %v2043
    %2779 = vmatprep.subr.bf16.mxu0 %v2048
    %2780 = vmatpush1.bf16.msra.mxu0 %v2047
    %2781 = vmatprep.subr.bf16.mxu0 %v2052
    %2782 = vmatpush1.bf16.msra.mxu0 %v2051
    %2783 = vmatprep.subr.bf16.mxu0 %v2056
    %2784 = vmatpush1.bf16.msra.mxu0 %v2055
    %2785 = vmatprep.subr.bf16.mxu0 %v2060
    %2786 = vmatpush1.bf16.msra.mxu0 %v2059
    %2787 = vmatprep.subr.bf16.mxu0 %v2064
    %2788 = vmatpush1.bf16.msra.mxu0 %v2063
    %2789 = vmatprep.subr.bf16.mxu0 %v2068
    %2790 = vmatpush1.bf16.msra.mxu0 %v2067
    %2791 = vmatprep.subr.bf16.mxu0 %v2072
    %2792 = vmatpush1.bf16.msra.mxu0 %v2071
    %2793 = vmatprep.subr.bf16.mxu0 %v2076
    %2794 = vmatpush1.bf16.msra.mxu0 %v2075
    %2795 = vmatprep.subr.bf16.mxu0 %v2080
    %2796 = vmatpush1.bf16.msra.mxu0 %v2079
    %2797 = vmatprep.mubr.bf16.mxu0 %v314
    %2798 = vmatmul.mubr.bf16.gmra.mrb[0].mxu0 %v313
    %v2799 = vpop.f32.mrb[0].mxu0
    %v2800 = vadd.f32 %v2747, %v2799
    %v2801 = vpop.f32.mrb[0].mxu0
    %v2802 = vadd.f32 %v2749, %v2801
    %v2803 = vpop.f32.mrb[0].mxu0
    %v2804 = vadd.f32 %v2751, %v2803
    %v2805 = vpop.f32.mrb[0].mxu0
    %v2806 = vadd.f32 %v2753, %v2805
    %2807 = vmatprep.mubr.bf16.mxu0 %v326
    %2808 = vmatmul.mubr.bf16.gmra.mrb[0].mxu0 %v325
    %v2809 = vpop.f32.mrb[0].mxu0
    %v2810 = vadd.f32 %v2757, %v2809
    %v2811 = vpop.f32.mrb[0].mxu0
    %v2812 = vadd.f32 %v2759, %v2811
    %v2813 = vpop.f32.mrb[0].mxu0
    %v2814 = vadd.f32 %v2761, %v2813
    %v2815 = vpop.f32.mrb[0].mxu0
    %v2816 = vadd.f32 %v2763, %v2815
    %2817 = vdwg.mxu0
    %2818 = vmatprep.subr.bf16.mxu0 %v2084
    %2819 = vmatpush1.bf16.msra.mxu0 %v2083
    %2820 = vmatprep.subr.bf16.mxu0 %v2088
    %2821 = vmatpush1.bf16.msra.mxu0 %v2087
    %2822 = vmatprep.subr.bf16.mxu0 %v2092
    %2823 = vmatpush1.bf16.msra.mxu0 %v2091
    %2824 = vmatprep.subr.bf16.mxu0 %v2096
    %2825 = vmatpush1.bf16.msra.mxu0 %v2095
    %2826 = vmatprep.subr.bf16.mxu0 %v2100
    %2827 = vmatpush1.bf16.msra.mxu0 %v2099
    %2828 = vmatprep.subr.bf16.mxu0 %v2104
    %2829 = vmatpush1.bf16.msra.mxu0 %v2103
    %2830 = vmatprep.subr.bf16.mxu0 %v2108
    %2831 = vmatpush1.bf16.msra.mxu0 %v2107
    %2832 = vmatprep.subr.bf16.mxu0 %v2112
    %2833 = vmatpush1.bf16.msra.mxu0 %v2111
    %2834 = vmatprep.subr.bf16.mxu0 %v2116
    %2835 = vmatpush1.bf16.msra.mxu0 %v2115
    %2836 = vmatprep.subr.bf16.mxu0 %v2120
    %2837 = vmatpush1.bf16.msra.mxu0 %v2119
    %2838 = vmatprep.subr.bf16.mxu0 %v2124
    %2839 = vmatpush1.bf16.msra.mxu0 %v2123
    %2840 = vmatprep.subr.bf16.mxu0 %v2128
    %2841 = vmatpush1.bf16.msra.mxu0 %v2127
    %2842 = vmatprep.subr.bf16.mxu0 %v2132
    %2843 = vmatpush1.bf16.msra.mxu0 %v2131
    %2844 = vmatprep.subr.bf16.mxu0 %v2136
    %2845 = vmatpush1.bf16.msra.mxu0 %v2135
    %2846 = vmatprep.subr.bf16.mxu0 %v2140
    %2847 = vmatpush1.bf16.msra.mxu0 %v2139
    %2848 = vmatprep.subr.bf16.mxu0 %v2144
    %2849 = vmatpush1.bf16.msra.mxu0 %v2143
    %2850 = vmatprep.mubr.bf16.mxu0 %v316
    %2851 = vmatmul.mubr.bf16.gmra.mrb[0].mxu0 %v315
    %v2852 = vpop.f32.mrb[0].mxu0
    %v2853 = vadd.f32 %v2800, %v2852
    %v2854 = vpop.f32.mrb[0].mxu0
    %v2855 = vadd.f32 %v2802, %v2854
    %v2856 = vpop.f32.mrb[0].mxu0
    %v2857 = vadd.f32 %v2804, %v2856
    %v2858 = vpop.f32.mrb[0].mxu0
    %v2859 = vadd.f32 %v2806, %v2858
    %2860 = vmatprep.mubr.bf16.mxu0 %v328
    %2861 = vmatmul.mubr.bf16.gmra.mrb[0].mxu0 %v327
    %v2862 = vpop.f32.mrb[0].mxu0
    %v2863 = vadd.f32 %v2810, %v2862
    %v2864 = vpop.f32.mrb[0].mxu0
    %v2865 = vadd.f32 %v2812, %v2864
    %v2866 = vpop.f32.mrb[0].mxu0
    %v2867 = vadd.f32 %v2814, %v2866
    %v2868 = vpop.f32.mrb[0].mxu0
    %v2869 = vadd.f32 %v2816, %v2868
    %2870 = vdwg.mxu0
    %2871 = vmatprep.subr.bf16.mxu0 %v2148
    %2872 = vmatpush1.bf16.msra.mxu0 %v2147
    %2873 = vmatprep.subr.bf16.mxu0 %v2152
    %2874 = vmatpush1.bf16.msra.mxu0 %v2151
    %2875 = vmatprep.subr.bf16.mxu0 %v2156
    %2876 = vmatpush1.bf16.msra.mxu0 %v2155
    %2877 = vmatprep.subr.bf16.mxu0 %v2160
    %2878 = vmatpush1.bf16.msra.mxu0 %v2159
    %2879 = vmatprep.subr.bf16.mxu0 %v2164
    %2880 = vmatpush1.bf16.msra.mxu0 %v2163
    %2881 = vmatprep.subr.bf16.mxu0 %v2168
    %2882 = vmatpush1.bf16.msra.mxu0 %v2167
    %2883 = vmatprep.subr.bf16.mxu0 %v2172
    %2884 = vmatpush1.bf16.msra.mxu0 %v2171
    %2885 = vmatprep.subr.bf16.mxu0 %v2176
    %2886 = vmatpush1.bf16.msra.mxu0 %v2175
    %2887 = vmatprep.subr.bf16.mxu0 %v2180
    %2888 = vmatpush1.bf16.msra.mxu0 %v2179
    %2889 = vmatprep.subr.bf16.mxu0 %v2184
    %2890 = vmatpush1.bf16.msra.mxu0 %v2183
    %2891 = vmatprep.subr.bf16.mxu0 %v2188
    %2892 = vmatpush1.bf16.msra.mxu0 %v2187
    %2893 = vmatprep.subr.bf16.mxu0 %v2192
    %2894 = vmatpush1.bf16.msra.mxu0 %v2191
    %2895 = vmatprep.subr.bf16.mxu0 %v2196
    %2896 = vmatpush1.bf16.msra.mxu0 %v2195
    %2897 = vmatprep.subr.bf16.mxu0 %v2200
    %2898 = vmatpush1.bf16.msra.mxu0 %v2199
    %2899 = vmatprep.subr.bf16.mxu0 %v2204
    %2900 = vmatpush1.bf16.msra.mxu0 %v2203
    %2901 = vmatprep.subr.bf16.mxu0 %v2208
    %2902 = vmatpush1.bf16.msra.mxu0 %v2207
    %2903 = vmatprep.mubr.bf16.mxu0 %v318
    %2904 = vmatmul.mubr.bf16.gmra.mrb[0].mxu0 %v317
    %v2905 = vpop.f32.mrb[0].mxu0
    %v2906 = vadd.f32 %v2853, %v2905
    %v2907 = vpop.f32.mrb[0].mxu0
    %v2908 = vadd.f32 %v2855, %v2907
    %v2909 = vpop.f32.mrb[0].mxu0
    %v2910 = vadd.f32 %v2857, %v2909
    %v2911 = vpop.f32.mrb[0].mxu0
    %v2912 = vadd.f32 %v2859, %v2911
    %2913 = vmatprep.mubr.bf16.mxu0 %v330
    %2914 = vmatmul.mubr.bf16.gmra.mrb[0].mxu0 %v329
    %v2915 = vpop.f32.mrb[0].mxu0
    %v2916 = vadd.f32 %v2863, %v2915
    %v2917 = vpop.f32.mrb[0].mxu0
    %v2918 = vadd.f32 %v2865, %v2917
    %v2919 = vpop.f32.mrb[0].mxu0
    %v2920 = vadd.f32 %v2867, %v2919
    %v2921 = vpop.f32.mrb[0].mxu0
    %v2922 = vadd.f32 %v2869, %v2921
    %2923 = vdwg.mxu0
    %2924 = vmatprep.subr.bf16.mxu0 %v2212
    %2925 = vmatpush1.bf16.msra.mxu0 %v2211
    %2926 = vmatprep.subr.bf16.mxu0 %v2216
    %2927 = vmatpush1.bf16.msra.mxu0 %v2215
    %2928 = vmatprep.subr.bf16.mxu0 %v2220
    %2929 = vmatpush1.bf16.msra.mxu0 %v2219
    %2930 = vmatprep.subr.bf16.mxu0 %v2224
    %2931 = vmatpush1.bf16.msra.mxu0 %v2223
    %2932 = vmatprep.subr.bf16.mxu0 %v2228
    %2933 = vmatpush1.bf16.msra.mxu0 %v2227
    %2934 = vmatprep.subr.bf16.mxu0 %v2232
    %2935 = vmatpush1.bf16.msra.mxu0 %v2231
    %2936 = vmatprep.subr.bf16.mxu0 %v2236
    %2937 = vmatpush1.bf16.msra.mxu0 %v2235
    %2938 = vmatprep.subr.bf16.mxu0 %v2240
    %2939 = vmatpush1.bf16.msra.mxu0 %v2239
    %2940 = vmatprep.subr.bf16.mxu0 %v2244
    %2941 = vmatpush1.bf16.msra.mxu0 %v2243
    %2942 = vmatprep.subr.bf16.mxu0 %v2248
    %2943 = vmatpush1.bf16.msra.mxu0 %v2247
    %2944 = vmatprep.subr.bf16.mxu0 %v2252
    %2945 = vmatpush1.bf16.msra.mxu0 %v2251
    %2946 = vmatprep.subr.bf16.mxu0 %v2256
    %2947 = vmatpush1.bf16.msra.mxu0 %v2255
    %2948 = vmatprep.subr.bf16.mxu0 %v2260
    %2949 = vmatpush1.bf16.msra.mxu0 %v2259
    %2950 = vmatprep.subr.bf16.mxu0 %v2264
    %2951 = vmatpush1.bf16.msra.mxu0 %v2263
    %2952 = vmatprep.subr.bf16.mxu0 %v2268
    %2953 = vmatpush1.bf16.msra.mxu0 %v2267
    %2954 = vmatprep.subr.bf16.mxu0 %v2272
    %2955 = vmatpush1.bf16.msra.mxu0 %v2271
    %2956 = vmatprep.mubr.bf16.mxu0 %v320
    %2957 = vmatmul.mubr.bf16.gmra.mrb[0].mxu0 %v319
    %v2958 = vpop.f32.mrb[0].mxu0
    %v2959 = vadd.f32 %v2906, %v2958
    %v2960 = vpop.f32.mrb[0].mxu0
    %v2961 = vadd.f32 %v2908, %v2960
    %v2962 = vpop.f32.mrb[0].mxu0
    %v2963 = vadd.f32 %v2910, %v2962
    %v2964 = vpop.f32.mrb[0].mxu0
    %v2965 = vadd.f32 %v2912, %v2964
    %2966 = vmatprep.mubr.bf16.mxu0 %v332
    %2967 = vmatmul.mubr.bf16.gmra.mrb[0].mxu0 %v331
    %v2968 = vpop.f32.mrb[0].mxu0
    %v2969 = vadd.f32 %v2916, %v2968
    %v2970 = vpop.f32.mrb[0].mxu0
    %v2971 = vadd.f32 %v2918, %v2970
    %v2972 = vpop.f32.mrb[0].mxu0
    %v2973 = vadd.f32 %v2920, %v2972
    %v2974 = vpop.f32.mrb[0].mxu0
    %v2975 = vadd.f32 %v2922, %v2974
    %2976 = vdwg.mxu0
    %2977 = vmatprep.subr.bf16.mxu0 %v1894
    %2978 = vmatpush1.bf16.msra.mxu0 %v1893
    %2979 = vmatprep.subr.bf16.mxu0 %v1898
    %2980 = vmatpush1.bf16.msra.mxu0 %v1897
    %2981 = vmatprep.subr.bf16.mxu0 %v1902
    %2982 = vmatpush1.bf16.msra.mxu0 %v1901
    %2983 = vmatprep.subr.bf16.mxu0 %v1906
    %2984 = vmatpush1.bf16.msra.mxu0 %v1905
    %2985 = vmatprep.subr.bf16.mxu0 %v1910
    %2986 = vmatpush1.bf16.msra.mxu0 %v1909
    %2987 = vmatprep.subr.bf16.mxu0 %v1914
    %2988 = vmatpush1.bf16.msra.mxu0 %v1913
    %2989 = vmatprep.subr.bf16.mxu0 %v1918
    %2990 = vmatpush1.bf16.msra.mxu0 %v1917
    %2991 = vmatprep.subr.bf16.mxu0 %v1922
    %2992 = vmatpush1.bf16.msra.mxu0 %v1921
    %2993 = vmatprep.subr.bf16.mxu0 %v1926
    %2994 = vmatpush1.bf16.msra.mxu0 %v1925
    %2995 = vmatprep.subr.bf16.mxu0 %v1930
    %2996 = vmatpush1.bf16.msra.mxu0 %v1929
    %2997 = vmatprep.subr.bf16.mxu0 %v1934
    %2998 = vmatpush1.bf16.msra.mxu0 %v1933
    %2999 = vmatprep.subr.bf16.mxu0 %v1938
    %3000 = vmatpush1.bf16.msra.mxu0 %v1937
    %3001 = vmatprep.subr.bf16.mxu0 %v1942
    %3002 = vmatpush1.bf16.msra.mxu0 %v1941
    %3003 = vmatprep.subr.bf16.mxu0 %v1946
    %3004 = vmatpush1.bf16.msra.mxu0 %v1945
    %3005 = vmatprep.subr.bf16.mxu0 %v1950
    %3006 = vmatpush1.bf16.msra.mxu0 %v1949
    %3007 = vmatprep.subr.bf16.mxu0 %v1954
    %3008 = vmatpush1.bf16.msra.mxu0 %v1953
    %3009 = vmatprep.mubr.bf16.mxu0 %v310
    %3010 = vmatmul.mubr.bf16.gmra.mrb[0].mxu0 %v309
    %v3011 = vpop.f32.mrb[0].mxu0
    %v3012 = vadd.f32 %v730, %v3011
    %v3013 = vpop.f32.mrb[0].mxu0
    %v3014 = vadd.f32 %v734, %v3013
    %v3015 = vpop.f32.mrb[0].mxu0
    %v3016 = vadd.f32 %v730, %v3015
    %v3017 = vpop.f32.mrb[0].mxu0
    %v3018 = vadd.f32 %v734, %v3017
    %3019 = vmatprep.mubr.bf16.mxu0 %v322
    %3020 = vmatmul.mubr.bf16.gmra.mrb[0].mxu0 %v321
    %v3021 = vpop.f32.mrb[0].mxu0
    %v3022 = vadd.f32 %v730, %v3021
    %v3023 = vpop.f32.mrb[0].mxu0
    %v3024 = vadd.f32 %v734, %v3023
    %v3025 = vpop.f32.mrb[0].mxu0
    %v3026 = vadd.f32 %v730, %v3025
    %v3027 = vpop.f32.mrb[0].mxu0
    %v3028 = vadd.f32 %v734, %v3027
    %3029 = vdwg.mxu0
    %3030 = vmatprep.subr.bf16.mxu0 %v1958
    %3031 = vmatpush1.bf16.msra.mxu0 %v1957
    %3032 = vmatprep.subr.bf16.mxu0 %v1962
    %3033 = vmatpush1.bf16.msra.mxu0 %v1961
    %3034 = vmatprep.subr.bf16.mxu0 %v1966
    %3035 = vmatpush1.bf16.msra.mxu0 %v1965
    %3036 = vmatprep.subr.bf16.mxu0 %v1970
    %3037 = vmatpush1.bf16.msra.mxu0 %v1969
    %3038 = vmatprep.subr.bf16.mxu0 %v1974
    %3039 = vmatpush1.bf16.msra.mxu0 %v1973
    %3040 = vmatprep.subr.bf16.mxu0 %v1978
    %3041 = vmatpush1.bf16.msra.mxu0 %v1977
    %3042 = vmatprep.subr.bf16.mxu0 %v1982
    %3043 = vmatpush1.bf16.msra.mxu0 %v1981
    %3044 = vmatprep.subr.bf16.mxu0 %v1986
    %3045 = vmatpush1.bf16.msra.mxu0 %v1985
    %3046 = vmatprep.subr.bf16.mxu0 %v1990
    %3047 = vmatpush1.bf16.msra.mxu0 %v1989
    %3048 = vmatprep.subr.bf16.mxu0 %v1994
    %3049 = vmatpush1.bf16.msra.mxu0 %v1993
    %3050 = vmatprep.subr.bf16.mxu0 %v1998
    %3051 = vmatpush1.bf16.msra.mxu0 %v1997
    %3052 = vmatprep.subr.bf16.mxu0 %v2002
    %3053 = vmatpush1.bf16.msra.mxu0 %v2001
    %3054 = vmatprep.subr.bf16.mxu0 %v2006
    %3055 = vmatpush1.bf16.msra.mxu0 %v2005
    %3056 = vmatprep.subr.bf16.mxu0 %v2010
    %3057 = vmatpush1.bf16.msra.mxu0 %v2009
    %3058 = vmatprep.subr.bf16.mxu0 %v2014
    %3059 = vmatpush1.bf16.msra.mxu0 %v2013
    %3060 = vmatprep.subr.bf16.mxu0 %v2018
    %3061 = vmatpush1.bf16.msra.mxu0 %v2017
    %3062 = vmatprep.mubr.bf16.mxu0 %v312
    %3063 = vmatmul.mubr.bf16.gmra.mrb[0].mxu0 %v311
    %v3064 = vpop.f32.mrb[0].mxu0
    %v3065 = vadd.f32 %v3012, %v3064
    %v3066 = vpop.f32.mrb[0].mxu0
    %v3067 = vadd.f32 %v3014, %v3066
    %v3068 = vpop.f32.mrb[0].mxu0
    %v3069 = vadd.f32 %v3016, %v3068
    %v3070 = vpop.f32.mrb[0].mxu0
    %v3071 = vadd.f32 %v3018, %v3070
    %3072 = vmatprep.mubr.bf16.mxu0 %v324
    %3073 = vmatmul.mubr.bf16.gmra.mrb[0].mxu0 %v323
    %v3074 = vpop.f32.mrb[0].mxu0
    %v3075 = vadd.f32 %v3022, %v3074
    %v3076 = vpop.f32.mrb[0].mxu0
    %v3077 = vadd.f32 %v3024, %v3076
    %v3078 = vpop.f32.mrb[0].mxu0
    %v3079 = vadd.f32 %v3026, %v3078
    %v3080 = vpop.f32.mrb[0].mxu0
    %v3081 = vadd.f32 %v3028, %v3080
    %3082 = vdwg.mxu0
    %3083 = vmatprep.subr.bf16.mxu0 %v2022
    %3084 = vmatpush1.bf16.msra.mxu0 %v2021
    %3085 = vmatprep.subr.bf16.mxu0 %v2026
    %3086 = vmatpush1.bf16.msra.mxu0 %v2025
    %3087 = vmatprep.subr.bf16.mxu0 %v2030
    %3088 = vmatpush1.bf16.msra.mxu0 %v2029
    %3089 = vmatprep.subr.bf16.mxu0 %v2034
    %3090 = vmatpush1.bf16.msra.mxu0 %v2033
    %3091 = vmatprep.subr.bf16.mxu0 %v2038
    %3092 = vmatpush1.bf16.msra.mxu0 %v2037
    %3093 = vmatprep.subr.bf16.mxu0 %v2042
    %3094 = vmatpush1.bf16.msra.mxu0 %v2041
    %3095 = vmatprep.subr.bf16.mxu0 %v2046
    %3096 = vmatpush1.bf16.msra.mxu0 %v2045
    %3097 = vmatprep.subr.bf16.mxu0 %v2050
    %3098 = vmatpush1.bf16.msra.mxu0 %v2049
    %3099 = vmatprep.subr.bf16.mxu0 %v2054
    %3100 = vmatpush1.bf16.msra.mxu0 %v2053
    %3101 = vmatprep.subr.bf16.mxu0 %v2058
    %3102 = vmatpush1.bf16.msra.mxu0 %v2057
    %3103 = vmatprep.subr.bf16.mxu0 %v2062
    %3104 = vmatpush1.bf16.msra.mxu0 %v2061
    %3105 = vmatprep.subr.bf16.mxu0 %v2066
    %3106 = vmatpush1.bf16.msra.mxu0 %v2065
    %3107 = vmatprep.subr.bf16.mxu0 %v2070
    %3108 = vmatpush1.bf16.msra.mxu0 %v2069
    %3109 = vmatprep.subr.bf16.mxu0 %v2074
    %3110 = vmatpush1.bf16.msra.mxu0 %v2073
    %3111 = vmatprep.subr.bf16.mxu0 %v2078
    %3112 = vmatpush1.bf16.msra.mxu0 %v2077
    %3113 = vmatprep.subr.bf16.mxu0 %v2082
    %3114 = vmatpush1.bf16.msra.mxu0 %v2081
    %3115 = vmatprep.mubr.bf16.mxu0 %v314
    %3116 = vmatmul.mubr.bf16.gmra.mrb[0].mxu0 %v313
    %v3117 = vpop.f32.mrb[0].mxu0
    %v3118 = vadd.f32 %v3065, %v3117
    %v3119 = vpop.f32.mrb[0].mxu0
    %v3120 = vadd.f32 %v3067, %v3119
    %v3121 = vpop.f32.mrb[0].mxu0
    %v3122 = vadd.f32 %v3069, %v3121
    %v3123 = vpop.f32.mrb[0].mxu0
    %v3124 = vadd.f32 %v3071, %v3123
    %3125 = vmatprep.mubr.bf16.mxu0 %v326
    %3126 = vmatmul.mubr.bf16.gmra.mrb[0].mxu0 %v325
    %v3127 = vpop.f32.mrb[0].mxu0
    %v3128 = vadd.f32 %v3075, %v3127
    %v3129 = vpop.f32.mrb[0].mxu0
    %v3130 = vadd.f32 %v3077, %v3129
    %v3131 = vpop.f32.mrb[0].mxu0
    %v3132 = vadd.f32 %v3079, %v3131
    %v3133 = vpop.f32.mrb[0].mxu0
    %v3134 = vadd.f32 %v3081, %v3133
    %3135 = vdwg.mxu0
    %3136 = vmatprep.subr.bf16.mxu0 %v2086
    %3137 = vmatpush1.bf16.msra.mxu0 %v2085
    %3138 = vmatprep.subr.bf16.mxu0 %v2090
    %3139 = vmatpush1.bf16.msra.mxu0 %v2089
    %3140 = vmatprep.subr.bf16.mxu0 %v2094
    %3141 = vmatpush1.bf16.msra.mxu0 %v2093
    %3142 = vmatprep.subr.bf16.mxu0 %v2098
    %3143 = vmatpush1.bf16.msra.mxu0 %v2097
    %3144 = vmatprep.subr.bf16.mxu0 %v2102
    %3145 = vmatpush1.bf16.msra.mxu0 %v2101
    %3146 = vmatprep.subr.bf16.mxu0 %v2106
    %3147 = vmatpush1.bf16.msra.mxu0 %v2105
    %3148 = vmatprep.subr.bf16.mxu0 %v2110
    %3149 = vmatpush1.bf16.msra.mxu0 %v2109
    %3150 = vmatprep.subr.bf16.mxu0 %v2114
    %3151 = vmatpush1.bf16.msra.mxu0 %v2113
    %3152 = vmatprep.subr.bf16.mxu0 %v2118
    %3153 = vmatpush1.bf16.msra.mxu0 %v2117
    %3154 = vmatprep.subr.bf16.mxu0 %v2122
    %3155 = vmatpush1.bf16.msra.mxu0 %v2121
    %3156 = vmatprep.subr.bf16.mxu0 %v2126
    %3157 = vmatpush1.bf16.msra.mxu0 %v2125
    %3158 = vmatprep.subr.bf16.mxu0 %v2130
    %3159 = vmatpush1.bf16.msra.mxu0 %v2129
    %3160 = vmatprep.subr.bf16.mxu0 %v2134
    %3161 = vmatpush1.bf16.msra.mxu0 %v2133
    %3162 = vmatprep.subr.bf16.mxu0 %v2138
    %3163 = vmatpush1.bf16.msra.mxu0 %v2137
    %3164 = vmatprep.subr.bf16.mxu0 %v2142
    %3165 = vmatpush1.bf16.msra.mxu0 %v2141
    %3166 = vmatprep.subr.bf16.mxu0 %v2146
    %3167 = vmatpush1.bf16.msra.mxu0 %v2145
    %3168 = vmatprep.mubr.bf16.mxu0 %v316
    %3169 = vmatmul.mubr.bf16.gmra.mrb[0].mxu0 %v315
    %v3170 = vpop.f32.mrb[0].mxu0
    %v3171 = vadd.f32 %v3118, %v3170
    %v3172 = vpop.f32.mrb[0].mxu0
    %v3173 = vadd.f32 %v3120, %v3172
    %v3174 = vpop.f32.mrb[0].mxu0
    %v3175 = vadd.f32 %v3122, %v3174
    %v3176 = vpop.f32.mrb[0].mxu0
    %v3177 = vadd.f32 %v3124, %v3176
    %3178 = vmatprep.mubr.bf16.mxu0 %v328
    %3179 = vmatmul.mubr.bf16.gmra.mrb[0].mxu0 %v327
    %v3180 = vpop.f32.mrb[0].mxu0
    %v3181 = vadd.f32 %v3128, %v3180
    %v3182 = vpop.f32.mrb[0].mxu0
    %v3183 = vadd.f32 %v3130, %v3182
    %v3184 = vpop.f32.mrb[0].mxu0
    %v3185 = vadd.f32 %v3132, %v3184
    %v3186 = vpop.f32.mrb[0].mxu0
    %v3187 = vadd.f32 %v3134, %v3186
    %3188 = vdwg.mxu0
    %3189 = vmatprep.subr.bf16.mxu0 %v2150
    %3190 = vmatpush1.bf16.msra.mxu0 %v2149
    %3191 = vmatprep.subr.bf16.mxu0 %v2154
    %3192 = vmatpush1.bf16.msra.mxu0 %v2153
    %3193 = vmatprep.subr.bf16.mxu0 %v2158
    %3194 = vmatpush1.bf16.msra.mxu0 %v2157
    %3195 = vmatprep.subr.bf16.mxu0 %v2162
    %3196 = vmatpush1.bf16.msra.mxu0 %v2161
    %3197 = vmatprep.subr.bf16.mxu0 %v2166
    %3198 = vmatpush1.bf16.msra.mxu0 %v2165
    %3199 = vmatprep.subr.bf16.mxu0 %v2170
    %3200 = vmatpush1.bf16.msra.mxu0 %v2169
    %3201 = vmatprep.subr.bf16.mxu0 %v2174
    %3202 = vmatpush1.bf16.msra.mxu0 %v2173
    %3203 = vmatprep.subr.bf16.mxu0 %v2178
    %3204 = vmatpush1.bf16.msra.mxu0 %v2177
    %3205 = vmatprep.subr.bf16.mxu0 %v2182
    %3206 = vmatpush1.bf16.msra.mxu0 %v2181
    %3207 = vmatprep.subr.bf16.mxu0 %v2186
    %3208 = vmatpush1.bf16.msra.mxu0 %v2185
    %3209 = vmatprep.subr.bf16.mxu0 %v2190
    %3210 = vmatpush1.bf16.msra.mxu0 %v2189
    %3211 = vmatprep.subr.bf16.mxu0 %v2194
    %3212 = vmatpush1.bf16.msra.mxu0 %v2193
    %3213 = vmatprep.subr.bf16.mxu0 %v2198
    %3214 = vmatpush1.bf16.msra.mxu0 %v2197
    %3215 = vmatprep.subr.bf16.mxu0 %v2202
    %3216 = vmatpush1.bf16.msra.mxu0 %v2201
    %3217 = vmatprep.subr.bf16.mxu0 %v2206
    %3218 = vmatpush1.bf16.msra.mxu0 %v2205
    %3219 = vmatprep.subr.bf16.mxu0 %v2210
    %3220 = vmatpush1.bf16.msra.mxu0 %v2209
    %3221 = vmatprep.mubr.bf16.mxu0 %v318
    %3222 = vmatmul.mubr.bf16.gmra.mrb[0].mxu0 %v317
    %v3223 = vpop.f32.mrb[0].mxu0
    %v3224 = vadd.f32 %v3171, %v3223
    %v3225 = vpop.f32.mrb[0].mxu0
    %v3226 = vadd.f32 %v3173, %v3225
    %v3227 = vpop.f32.mrb[0].mxu0
    %v3228 = vadd.f32 %v3175, %v3227
    %v3229 = vpop.f32.mrb[0].mxu0
    %v3230 = vadd.f32 %v3177, %v3229
    %3231 = vmatprep.mubr.bf16.mxu0 %v330
    %3232 = vmatmul.mubr.bf16.gmra.mrb[0].mxu0 %v329
    %v3233 = vpop.f32.mrb[0].mxu0
    %v3234 = vadd.f32 %v3181, %v3233
    %v3235 = vpop.f32.mrb[0].mxu0
    %v3236 = vadd.f32 %v3183, %v3235
    %v3237 = vpop.f32.mrb[0].mxu0
    %v3238 = vadd.f32 %v3185, %v3237
    %v3239 = vpop.f32.mrb[0].mxu0
    %v3240 = vadd.f32 %v3187, %v3239
    %3241 = vdwg.mxu0
    %3242 = vmatprep.subr.bf16.mxu0 %v2214
    %3243 = vmatpush1.bf16.msra.mxu0 %v2213
    %3244 = vmatprep.subr.bf16.mxu0 %v2218
    %3245 = vmatpush1.bf16.msra.mxu0 %v2217
    %3246 = vmatprep.subr.bf16.mxu0 %v2222
    %3247 = vmatpush1.bf16.msra.mxu0 %v2221
    %3248 = vmatprep.subr.bf16.mxu0 %v2226
    %3249 = vmatpush1.bf16.msra.mxu0 %v2225
    %3250 = vmatprep.subr.bf16.mxu0 %v2230
    %3251 = vmatpush1.bf16.msra.mxu0 %v2229
    %3252 = vmatprep.subr.bf16.mxu0 %v2234
    %3253 = vmatpush1.bf16.msra.mxu0 %v2233
    %3254 = vmatprep.subr.bf16.mxu0 %v2238
    %3255 = vmatpush1.bf16.msra.mxu0 %v2237
    %3256 = vmatprep.subr.bf16.mxu0 %v2242
    %3257 = vmatpush1.bf16.msra.mxu0 %v2241
    %3258 = vmatprep.subr.bf16.mxu0 %v2246
    %3259 = vmatpush1.bf16.msra.mxu0 %v2245
    %3260 = vmatprep.subr.bf16.mxu0 %v2250
    %3261 = vmatpush1.bf16.msra.mxu0 %v2249
    %3262 = vmatprep.subr.bf16.mxu0 %v2254
    %3263 = vmatpush1.bf16.msra.mxu0 %v2253
    %3264 = vmatprep.subr.bf16.mxu0 %v2258
    %3265 = vmatpush1.bf16.msra.mxu0 %v2257
    %3266 = vmatprep.subr.bf16.mxu0 %v2262
    %3267 = vmatpush1.bf16.msra.mxu0 %v2261
    %3268 = vmatprep.subr.bf16.mxu0 %v2266
    %3269 = vmatpush1.bf16.msra.mxu0 %v2265
    %3270 = vmatprep.subr.bf16.mxu0 %v2270
    %3271 = vmatpush1.bf16.msra.mxu0 %v2269
    %3272 = vmatprep.subr.bf16.mxu0 %v2274
    %3273 = vmatpush1.bf16.msra.mxu0 %v2273
    %3274 = vmatprep.mubr.bf16.mxu0 %v320
    %3275 = vmatmul.mubr.bf16.gmra.mrb[0].mxu0 %v319
    %v3276 = vpop.f32.mrb[0].mxu0
    %v3277 = vadd.f32 %v3224, %v3276
    %v3278 = vpop.f32.mrb[0].mxu0
    %v3279 = vadd.f32 %v3226, %v3278
    %v3280 = vpop.f32.mrb[0].mxu0
    %v3281 = vadd.f32 %v3228, %v3280
    %v3282 = vpop.f32.mrb[0].mxu0
    %v3283 = vadd.f32 %v3230, %v3282
    %3284 = vmatprep.mubr.bf16.mxu0 %v332
    %3285 = vmatmul.mubr.bf16.gmra.mrb[0].mxu0 %v331
    %v3286 = vpop.f32.mrb[0].mxu0
    %v3287 = vadd.f32 %v3234, %v3286
    %v3288 = vpop.f32.mrb[0].mxu0
    %v3289 = vadd.f32 %v3236, %v3288
    %v3290 = vpop.f32.mrb[0].mxu0
    %v3291 = vadd.f32 %v3238, %v3290
    %v3292 = vpop.f32.mrb[0].mxu0
    %v3293 = vadd.f32 %v3240, %v3292
    %3294 = vdwg.mxu0
    %v3295 = vmul.f32 %v2959, %v2959
    %v3296 = vmul.f32 %v2961, %v2961
    %v3297 = vmul.f32 %v3277, %v3277
    %v3298 = vmul.f32 %v3279, %v3279
    %v3299 = vmul.f32 %v2963, %v2963
    %v3300 = vmul.f32 %v2965, %v2965
    %v3301 = vmul.f32 %v3281, %v3281
    %v3302 = vmul.f32 %v3283, %v3283
    %v3303 = vmul.f32 %v2969, %v2969
    %v3304 = vmul.f32 %v2971, %v2971
    %v3305 = vmul.f32 %v3287, %v3287
    %v3306 = vmul.f32 %v3289, %v3289
    %v3307 = vmul.f32 %v2973, %v2973
    %v3308 = vmul.f32 %v2975, %v2975
    %v3309 = vmul.f32 %v3291, %v3291
    %v3310 = vmul.f32 %v3293, %v3293
    %v3311 = vadd.f32 %v2959, %v2963
    %v3312 = vrot.slane %v3311, 4
    %v3313 = vadd.f32 %v3311, %v3312
    %v3314 = vrot.slane %v3313, 2
    %v3315 = vadd.f32 %v3313, %v3314
    %v3316 = vrot.slane %v3315, 1
    %v3317 = vadd.f32 %v3315, %v3316
    %v3318 = vadd.f32 %v2961, %v2965
    %v3319 = vrot.slane %v3318, 4
    %v3320 = vadd.f32 %v3318, %v3319
    %v3321 = vrot.slane %v3320, 2
    %v3322 = vadd.f32 %v3320, %v3321
    %v3323 = vrot.slane %v3322, 1
    %v3324 = vadd.f32 %v3322, %v3323
    %v3325 = vadd.f32 %v3277, %v3281
    %v3326 = vrot.slane %v3325, 4
    %v3327 = vadd.f32 %v3325, %v3326
    %v3328 = vrot.slane %v3327, 2
    %v3329 = vadd.f32 %v3327, %v3328
    %v3330 = vrot.slane %v3329, 1
    %v3331 = vadd.f32 %v3329, %v3330
    %v3332 = vadd.f32 %v3279, %v3283
    %v3333 = vrot.slane %v3332, 4
    %v3334 = vadd.f32 %v3332, %v3333
    %v3335 = vrot.slane %v3334, 2
    %v3336 = vadd.f32 %v3334, %v3335
    %v3337 = vrot.slane %v3336, 1
    %v3338 = vadd.f32 %v3336, %v3337
    %v3339 = vadd.f32 %v2969, %v2973
    %v3340 = vrot.slane %v3339, 4
    %v3341 = vadd.f32 %v3339, %v3340
    %v3342 = vrot.slane %v3341, 2
    %v3343 = vadd.f32 %v3341, %v3342
    %v3344 = vrot.slane %v3343, 1
    %v3345 = vadd.f32 %v3343, %v3344
    %v3346 = vadd.f32 %v2971, %v2975
    %v3347 = vrot.slane %v3346, 4
    %v3348 = vadd.f32 %v3346, %v3347
    %v3349 = vrot.slane %v3348, 2
    %v3350 = vadd.f32 %v3348, %v3349
    %v3351 = vrot.slane %v3350, 1
    %v3352 = vadd.f32 %v3350, %v3351
    %v3353 = vadd.f32 %v3287, %v3291
    %v3354 = vrot.slane %v3353, 4
    %v3355 = vadd.f32 %v3353, %v3354
    %v3356 = vrot.slane %v3355, 2
    %v3357 = vadd.f32 %v3355, %v3356
    %v3358 = vrot.slane %v3357, 1
    %v3359 = vadd.f32 %v3357, %v3358
    %v3360 = vadd.f32 %v3289, %v3293
    %v3361 = vrot.slane %v3360, 4
    %v3362 = vadd.f32 %v3360, %v3361
    %v3363 = vrot.slane %v3362, 2
    %v3364 = vadd.f32 %v3362, %v3363
    %v3365 = vrot.slane %v3364, 1
    %v3366 = vadd.f32 %v3364, %v3365
    %v3367 = vadd.f32 %v3295, %v3299
    %v3368 = vrot.slane %v3367, 4
    %v3369 = vadd.f32 %v3367, %v3368
    %v3370 = vrot.slane %v3369, 2
    %v3371 = vadd.f32 %v3369, %v3370
    %v3372 = vrot.slane %v3371, 1
    %v3373 = vadd.f32 %v3371, %v3372
    %v3374 = vadd.f32 %v3296, %v3300
    %v3375 = vrot.slane %v3374, 4
    %v3376 = vadd.f32 %v3374, %v3375
    %v3377 = vrot.slane %v3376, 2
    %v3378 = vadd.f32 %v3376, %v3377
    %v3379 = vrot.slane %v3378, 1
    %v3380 = vadd.f32 %v3378, %v3379
    %v3381 = vadd.f32 %v3297, %v3301
    %v3382 = vrot.slane %v3381, 4
    %v3383 = vadd.f32 %v3381, %v3382
    %v3384 = vrot.slane %v3383, 2
    %v3385 = vadd.f32 %v3383, %v3384
    %v3386 = vrot.slane %v3385, 1
    %v3387 = vadd.f32 %v3385, %v3386
    %v3388 = vadd.f32 %v3298, %v3302
    %v3389 = vrot.slane %v3388, 4
    %v3390 = vadd.f32 %v3388, %v3389
    %v3391 = vrot.slane %v3390, 2
    %v3392 = vadd.f32 %v3390, %v3391
    %v3393 = vrot.slane %v3392, 1
    %v3394 = vadd.f32 %v3392, %v3393
    %v3395 = vadd.f32 %v3303, %v3307
    %v3396 = vrot.slane %v3395, 4
    %v3397 = vadd.f32 %v3395, %v3396
    %v3398 = vrot.slane %v3397, 2
    %v3399 = vadd.f32 %v3397, %v3398
    %v3400 = vrot.slane %v3399, 1
    %v3401 = vadd.f32 %v3399, %v3400
    %v3402 = vadd.f32 %v3304, %v3308
    %v3403 = vrot.slane %v3402, 4
    %v3404 = vadd.f32 %v3402, %v3403
    %v3405 = vrot.slane %v3404, 2
    %v3406 = vadd.f32 %v3404, %v3405
    %v3407 = vrot.slane %v3406, 1
    %v3408 = vadd.f32 %v3406, %v3407
    %v3409 = vadd.f32 %v3305, %v3309
    %v3410 = vrot.slane %v3409, 4
    %v3411 = vadd.f32 %v3409, %v3410
    %v3412 = vrot.slane %v3411, 2
    %v3413 = vadd.f32 %v3411, %v3412
    %v3414 = vrot.slane %v3413, 1
    %v3415 = vadd.f32 %v3413, %v3414
    %v3416 = vadd.f32 %v3306, %v3310
    %v3417 = vrot.slane %v3416, 4
    %v3418 = vadd.f32 %v3416, %v3417
    %v3419 = vrot.slane %v3418, 2
    %v3420 = vadd.f32 %v3418, %v3419
    %v3421 = vrot.slane %v3420, 1
    %v3422 = vadd.f32 %v3420, %v3421
    %vm3423 = vcmask 1040384
    %v3424 = vsel %vm3423, %v3317, %v3345
    %v3425 = vsel %vm3423, %v3324, %v3352
    %v3426 = vsel %vm3423, %v3331, %v3359
    %v3427 = vsel %vm3423, %v3338, %v3366
    %vm3428 = vcmask 1041408
    %v3429 = vsel %vm3428, %v3424, %v3373
    %v3430 = vsel %vm3428, %v3425, %v3380
    %v3431 = vsel %vm3428, %v3426, %v3387
    %v3432 = vsel %vm3428, %v3427, %v3394
    %vm3433 = vcmask 1042432
    %v3434 = vsel %vm3433, %v3429, %v3401
    %v3435 = vsel %vm3433, %v3430, %v3408
    %v3436 = vsel %vm3433, %v3431, %v3415
    %v3437 = vsel %vm3433, %v3432, %v3422
    %3438 = vrot.lane.b32.xlu0 %v3434, 32
    %v3439 = vpop.permute.xlu0 %3438
    %3440 = vrot.lane.b32.xlu0 %v3435, 32
    %v3441 = vpop.permute.xlu0 %3440
    %3442 = vrot.lane.b32.xlu0 %v3436, 32
    %v3443 = vpop.permute.xlu0 %3442
    %3444 = vrot.lane.b32.xlu0 %v3437, 32
    %v3445 = vpop.permute.xlu0 %3444
    %v3446 = vlaneseq
    %v3447 = vand.u32 %v3446, 127
    %vm3448 = vcmp.lt.s32.totalorder %v3447, 32
    %v3449 = vsel %vm3448, %v3443, %v3445
    %v3450 = vsel %vm3448, %v3441, %v3443
    %v3451 = vsel %vm3448, %v3439, %v3441
    %v3452 = vsel %vm3448, %v3445, %v3439
    %v3453 = vadd.f32 %v3434, %v3452
    %v3454 = vadd.f32 %v3435, %v3451
    %v3455 = vadd.f32 %v3436, %v3450
    %v3456 = vadd.f32 %v3437, %v3449
    %3457 = vrot.lane.b32.xlu0 %v3453, 64
    %v3458 = vpop.permute.xlu0 %3457
    %3459 = vrot.lane.b32.xlu0 %v3454, 64
    %v3460 = vpop.permute.xlu0 %3459
    %3461 = vrot.lane.b32.xlu0 %v3455, 64
    %v3462 = vpop.permute.xlu0 %3461
    %3463 = vrot.lane.b32.xlu0 %v3456, 64
    %v3464 = vpop.permute.xlu0 %3463
    %vm3465 = vcmp.lt.s32.totalorder %v3447, 64
    %v3466 = vsel %vm3465, %v3462, %v3464
    %v3467 = vsel %vm3465, %v3460, %v3462
    %v3468 = vsel %vm3465, %v3458, %v3460
    %v3469 = vsel %vm3465, %v3464, %v3458
    %v3470 = vadd.f32 %v3453, %v3469
    %v3471 = vadd.f32 %v3454, %v3468
    %v3472 = vadd.f32 %v3455, %v3467
    %v3473 = vadd.f32 %v3456, %v3466
    %v3474 = vadd.f32 %v3470, %v3473
    %v3475 = vadd.f32 %v3471, %v3470
    %v3476 = vadd.f32 %v3472, %v3471
    %v3477 = vadd.f32 %v3473, %v3472
    %v3478 = vadd.f32 %v3474, %v3476
    %v3479 = vadd.f32 %v3475, %v3477
    %v3480 = vadd.s32 %v3447, 128
    %v3481 = vadd.s32 %v3447, 256
    %v3482 = vadd.s32 %v3447, 384
    %vm3483 = vcmp.lt.s32.totalorder %v3447, 0
    %v3484 = vsub.s32 0, %v3447
    %v3485 = vsel %vm3483, %v3484, %v3447
    %v3486 = vshrl.u32 %v3485, 1
    %v3487 = vand.u32 %v3485, 1
    %v3488 = vsub.s32 0, %v3487
    %v3489 = vsel %vm3483, %v3488, %v3487
    %vm3490 = vcmp.lt.s32.totalorder %v3480, 0
    %v3491 = vsub.s32 0, %v3480
    %v3492 = vsel %vm3490, %v3491, %v3480
    %v3493 = vshrl.u32 %v3492, 1
    %v3494 = vand.u32 %v3492, 1
    %v3495 = vsub.s32 0, %v3494
    %v3496 = vsel %vm3490, %v3495, %v3494
    %vm3497 = vcmp.lt.s32.totalorder %v3481, 0
    %v3498 = vsub.s32 0, %v3481
    %v3499 = vsel %vm3497, %v3498, %v3481
    %v3500 = vshrl.u32 %v3499, 1
    %v3501 = vand.u32 %v3499, 1
    %v3502 = vsub.s32 0, %v3501
    %v3503 = vsel %vm3497, %v3502, %v3501
    %vm3504 = vcmp.lt.s32.totalorder %v3482, 0
    %v3505 = vsub.s32 0, %v3482
    %v3506 = vsel %vm3504, %v3505, %v3482
    %v3507 = vshrl.u32 %v3506, 1
    %v3508 = vand.u32 %v3506, 1
    %v3509 = vsub.s32 0, %v3508
    %v3510 = vsel %vm3504, %v3509, %v3508
    %vm3511 = vcmp.ne.s32.totalorder %v3489, 0
    %vm3512 = vcmp.ne.s32.totalorder %v3496, 0
    %vm3513 = vcmp.ne.s32.totalorder %v3503, 0
    %vm3514 = vcmp.ne.s32.totalorder %v3510, 0
    %vm3515 = vcmp.lt.s32.totalorder %v3489, 0
    %vm3516 = vcmp.lt.s32.totalorder %v3496, 0
    %vm3517 = vcmp.lt.s32.totalorder %v3503, 0
    %vm3518 = vcmp.lt.s32.totalorder %v3510, 0
    %vm3519 = vmand %vm3515, %vm3511
    %vm3520 = vmand %vm3516, %vm3512
    %vm3521 = vmand %vm3517, %vm3513
    %vm3522 = vmand %vm3518, %vm3514
    %v3523 = vadd.s32 %v3489, 2
    %v3524 = vadd.s32 %v3496, 2
    %v3525 = vadd.s32 %v3503, 2
    %v3526 = vadd.s32 %v3510, 2
    %v3527 = vsel %vm3519, %v3523, %v3489
    %v3528 = vsel %vm3520, %v3524, %v3496
    %v3529 = vsel %vm3521, %v3525, %v3503
    %v3530 = vsel %vm3522, %v3526, %v3510
    %vm3531 = vcmp.eq.s32.totalorder %v3527, 0
    %vm3532 = vcmp.eq.s32.totalorder %v3528, 0
    %vm3533 = vcmp.eq.s32.totalorder %v3529, 0
    %vm3534 = vcmp.eq.s32.totalorder %v3530, 0
    %3535 = vrot.lane.b32.xlu0 %v3478, 127
    %v3536 = vpop.permute.xlu0 %3535
    %3537 = vrot.lane.b32.xlu0 %v3479, 127
    %v3538 = vpop.permute.xlu0 %3537
    %vm3539 = vcmp.lt.s32.totalorder %v3447, 127
    %v3540 = vsel %vm3539, %v3536, %v3538
    %v3541 = vsel %vm3539, %v3538, %v3536
    %3542 = vrot.lane.b32.xlu0 %v3478, 1
    %v3543 = vpop.permute.xlu0 %3542
    %3544 = vrot.lane.b32.xlu0 %v3479, 1
    %v3545 = vpop.permute.xlu0 %3544
    %vm3546 = vcmp.lt.s32.totalorder %v3447, 1
    %v3547 = vsel %vm3546, %v3543, %v3545
    %v3548 = vsel %vm3546, %v3545, %v3543
    %v3549 = vsel %vm3531, %v3540, %v3548
    %v3550 = vsel %vm3532, %v3541, %v3547
    %v3551 = vsel %vm3533, %v3540, %v3548
    %v3552 = vsel %vm3534, %v3541, %v3547
    %v3553 = vadd.f32 %v3478, %v3549
    %v3554 = vadd.f32 %v3479, %v3550
    %v3555 = vadd.f32 %v3478, %v3551
    %v3556 = vadd.f32 %v3479, %v3552
    %vm3557 = vcmp.lt.s32.totalorder %v3447, 0
    %v3558 = vsub.s32 0, %v3447
    %v3559 = vsel %vm3557, %v3558, %v3447
    %v3560 = vshrl.u32 %v3559, 2
    %v3561 = vand.u32 %v3559, 3
    %v3562 = vsub.s32 0, %v3561
    %v3563 = vsel %vm3557, %v3562, %v3561
    %vm3564 = vcmp.lt.s32.totalorder %v3480, 0
    %v3565 = vsub.s32 0, %v3480
    %v3566 = vsel %vm3564, %v3565, %v3480
    %v3567 = vshrl.u32 %v3566, 2
    %v3568 = vand.u32 %v3566, 3
    %v3569 = vsub.s32 0, %v3568
    %v3570 = vsel %vm3564, %v3569, %v3568
    %vm3571 = vcmp.lt.s32.totalorder %v3481, 0
    %v3572 = vsub.s32 0, %v3481
    %v3573 = vsel %vm3571, %v3572, %v3481
    %v3574 = vshrl.u32 %v3573, 2
    %v3575 = vand.u32 %v3573, 3
    %v3576 = vsub.s32 0, %v3575
    %v3577 = vsel %vm3571, %v3576, %v3575
    %vm3578 = vcmp.lt.s32.totalorder %v3482, 0
    %v3579 = vsub.s32 0, %v3482
    %v3580 = vsel %vm3578, %v3579, %v3482
    %v3581 = vshrl.u32 %v3580, 2
    %v3582 = vand.u32 %v3580, 3
    %v3583 = vsub.s32 0, %v3582
    %v3584 = vsel %vm3578, %v3583, %v3582
    %vm3585 = vcmp.ne.s32.totalorder %v3563, 0
    %vm3586 = vcmp.ne.s32.totalorder %v3570, 0
    %vm3587 = vcmp.ne.s32.totalorder %v3577, 0
    %vm3588 = vcmp.ne.s32.totalorder %v3584, 0
    %vm3589 = vcmp.lt.s32.totalorder %v3563, 0
    %vm3590 = vcmp.lt.s32.totalorder %v3570, 0
    %vm3591 = vcmp.lt.s32.totalorder %v3577, 0
    %vm3592 = vcmp.lt.s32.totalorder %v3584, 0
    %vm3593 = vmand %vm3589, %vm3585
    %vm3594 = vmand %vm3590, %vm3586
    %vm3595 = vmand %vm3591, %vm3587
    %vm3596 = vmand %vm3592, %vm3588
    %v3597 = vadd.s32 %v3563, 4
    %v3598 = vadd.s32 %v3570, 4
    %v3599 = vadd.s32 %v3577, 4
    %v3600 = vadd.s32 %v3584, 4
    %v3601 = vsel %vm3593, %v3597, %v3563
    %v3602 = vsel %vm3594, %v3598, %v3570
    %v3603 = vsel %vm3595, %v3599, %v3577
    %v3604 = vsel %vm3596, %v3600, %v3584
    %vm3605 = vcmp.lt.s32.totalorder %v3601, 2
    %vm3606 = vcmp.lt.s32.totalorder %v3602, 2
    %vm3607 = vcmp.lt.s32.totalorder %v3603, 2
    %vm3608 = vcmp.lt.s32.totalorder %v3604, 2
    %3609 = vrot.lane.b32.xlu0 %v3553, 126
    %v3610 = vpop.permute.xlu0 %3609
    %3611 = vrot.lane.b32.xlu0 %v3554, 126
    %v3612 = vpop.permute.xlu0 %3611
    %3613 = vrot.lane.b32.xlu0 %v3555, 126
    %v3614 = vpop.permute.xlu0 %3613
    %3615 = vrot.lane.b32.xlu0 %v3556, 126
    %v3616 = vpop.permute.xlu0 %3615
    %vm3617 = vcmp.lt.s32.totalorder %v3447, 126
    %v3618 = vsel %vm3617, %v3614, %v3616
    %v3619 = vsel %vm3617, %v3612, %v3614
    %v3620 = vsel %vm3617, %v3610, %v3612
    %v3621 = vsel %vm3617, %v3616, %v3610
    %3622 = vrot.lane.b32.xlu0 %v3553, 2
    %v3623 = vpop.permute.xlu0 %3622
    %3624 = vrot.lane.b32.xlu0 %v3554, 2
    %v3625 = vpop.permute.xlu0 %3624
    %3626 = vrot.lane.b32.xlu0 %v3555, 2
    %v3627 = vpop.permute.xlu0 %3626
    %3628 = vrot.lane.b32.xlu0 %v3556, 2
    %v3629 = vpop.permute.xlu0 %3628
    %vm3630 = vcmp.lt.s32.totalorder %v3447, 2
    %v3631 = vsel %vm3630, %v3627, %v3629
    %v3632 = vsel %vm3630, %v3625, %v3627
    %v3633 = vsel %vm3630, %v3623, %v3625
    %v3634 = vsel %vm3630, %v3629, %v3623
    %v3635 = vsel %vm3605, %v3620, %v3634
    %v3636 = vsel %vm3606, %v3619, %v3633
    %v3637 = vsel %vm3607, %v3618, %v3632
    %v3638 = vsel %vm3608, %v3621, %v3631
    %v3639 = vadd.f32 %v3553, %v3635
    %v3640 = vadd.f32 %v3554, %v3636
    %v3641 = vadd.f32 %v3555, %v3637
    %v3642 = vadd.f32 %v3556, %v3638
    %v3643 = vmul.f32 %v3639, 0.0009765625
    %v3644 = vmul.f32 %v3640, 0.0009765625
    %v3645 = vmul.f32 %v3641, 0.0009765625
    %v3646 = vmul.f32 %v3642, 0.0009765625
    %v3647 = vmul.f32 %v3643, %v3643
    %v3648 = vmul.f32 %v3644, %v3644
    %v3649 = vmul.f32 %v3645, %v3645
    %v3650 = vmul.f32 %v3646, %v3646
    %v3655 = vrot.slane %v3647, 6
    %v3656 = vrot.slane %v3648, 6
    %v3657 = vrot.slane %v3649, 6
    %v3658 = vrot.slane %v3650, 6
    %v3663 = vsub.f32 %v3643, %v3655
    %v3664 = vsub.f32 %v3644, %v3656
    %v3665 = vsub.f32 %v3645, %v3657
    %v3666 = vsub.f32 %v3646, %v3658
    %v3667 = vadd.f32 %v3663, 1e-05
    %v3668 = vadd.f32 %v3664, 1e-05
    %v3669 = vadd.f32 %v3665, 1e-05
    %v3670 = vadd.f32 %v3666, 1e-05
    %v3671 = vrsqrt.pop %v3667
    %v3672 = vrsqrt.pop %v3668
    %v3673 = vrsqrt.pop %v3669
    %v3674 = vrsqrt.pop %v3670
    %v3675 = vld [vmem:[#allocation8] sm:$0xf]
    %v3677 = vlaneseq
    %v3678 = vshrl.u32 %v3677, 7
    %v3679 = vsub.s32 0, %v3678
    %v3680 = vrot.slane %v3675, %v3679
    %v3681 = vlaneseq
    %v3682 = vshrl.u32 %v3681, 7
    %v3683 = vsub.s32 1, %v3682
    %v3684 = vrot.slane %v3675, %v3683
    %v3685 = vlaneseq
    %v3686 = vshrl.u32 %v3685, 7
    %v3687 = vsub.s32 2, %v3686
    %v3688 = vrot.slane %v3675, %v3687
    %v3689 = vlaneseq
    %v3690 = vshrl.u32 %v3689, 7
    %v3691 = vsub.s32 3, %v3690
    %v3692 = vrot.slane %v3675, %v3691
    %v3697 = vmul.f32 %v3671, %v3680
    %v3698 = vmul.f32 %v3672, %v3684
    %v3699 = vmul.f32 %v3673, %v3688
    %v3700 = vmul.f32 %v3674, %v3692
    %v3701 = vld [vmem:[#allocation10] sm:$0xf]
    %v3706 = vrot.slane %v3697, 2
    %v3707 = vrot.slane %v3698, 2
    %v3708 = vrot.slane %v3699, 2
    %v3709 = vrot.slane %v3700, 2
    %v3714 = vmul.f32 %v3643, %v3706
    %v3715 = vmul.f32 %v3644, %v3707
    %v3716 = vmul.f32 %v3645, %v3708
    %v3717 = vmul.f32 %v3646, %v3709
    %v3719 = vlaneseq
    %v3720 = vshrl.u32 %v3719, 7
    %v3721 = vsub.s32 0, %v3720
    %v3722 = vrot.slane %v3701, %v3721
    %v3723 = vlaneseq
    %v3724 = vshrl.u32 %v3723, 7
    %v3725 = vsub.s32 1, %v3724
    %v3726 = vrot.slane %v3701, %v3725
    %v3727 = vlaneseq
    %v3728 = vshrl.u32 %v3727, 7
    %v3729 = vsub.s32 2, %v3728
    %v3730 = vrot.slane %v3701, %v3729
    %v3731 = vlaneseq
    %v3732 = vshrl.u32 %v3731, 7
    %v3733 = vsub.s32 3, %v3732
    %v3734 = vrot.slane %v3701, %v3733
    %v3739 = vsub.f32 %v3722, %v3714
    %v3740 = vsub.f32 %v3726, %v3715
    %v3741 = vsub.f32 %v3730, %v3716
    %v3742 = vsub.f32 %v3734, %v3717
    %v3743 = vlaneseq
    %v3744 = vshrl.u32 %v3743, 7
    %v3745 = vsub.s32 2, %v3744
    %v3746 = vrot.slane %v3697, %v3745
    %v3747 = vlaneseq
    %v3748 = vshrl.u32 %v3747, 7
    %v3749 = vsub.s32 2, %v3748
    %v3750 = vrot.slane %v3698, %v3749
    %v3751 = vlaneseq
    %v3752 = vshrl.u32 %v3751, 7
    %v3753 = vsub.s32 2, %v3752
    %v3754 = vrot.slane %v3699, %v3753
    %v3755 = vlaneseq
    %v3756 = vshrl.u32 %v3755, 7
    %v3757 = vsub.s32 2, %v3756
    %v3758 = vrot.slane %v3700, %v3757
    %v3759 = vlaneseq
    %v3760 = vshrl.u32 %v3759, 7
    %v3761 = vsub.s32 3, %v3760
    %v3762 = vrot.slane %v3697, %v3761
    %v3763 = vlaneseq
    %v3764 = vshrl.u32 %v3763, 7
    %v3765 = vsub.s32 3, %v3764
    %v3766 = vrot.slane %v3698, %v3765
    %v3767 = vlaneseq
    %v3768 = vshrl.u32 %v3767, 7
    %v3769 = vsub.s32 3, %v3768
    %v3770 = vrot.slane %v3699, %v3769
    %v3771 = vlaneseq
    %v3772 = vshrl.u32 %v3771, 7
    %v3773 = vsub.s32 3, %v3772
    %v3774 = vrot.slane %v3700, %v3773
    %v3775 = vsel %vm175, 1, 0
    %v3776 = vsel %vm176, 1, 0
    %v3777 = vsel %vm177, 1, 0
    %v3778 = vsel %vm178, 1, 0
    %vm3779 = vcmp.eq.s32.totalorder %v3775, 1
    %vm3780 = vcmp.eq.s32.totalorder %v3776, 1
    %vm3781 = vcmp.eq.s32.totalorder %v3777, 1
    %vm3782 = vcmp.eq.s32.totalorder %v3778, 1
    %v3783 = vsel %vm3779, %v3746, %v3762
    %v3784 = vsel %vm3779, %v3750, %v3766
    %v3785 = vsel %vm3779, %v3754, %v3770
    %v3786 = vsel %vm3779, %v3758, %v3774
    %v3787 = vsel %vm3780, %v3746, %v3762
    %v3788 = vsel %vm3780, %v3750, %v3766
    %v3789 = vsel %vm3780, %v3754, %v3770
    %v3790 = vsel %vm3780, %v3758, %v3774
    %v3791 = vsel %vm3781, %v3746, %v3762
    %v3792 = vsel %vm3781, %v3750, %v3766
    %v3793 = vsel %vm3781, %v3754, %v3770
    %v3794 = vsel %vm3781, %v3758, %v3774
    %v3795 = vsel %vm3782, %v3746, %v3762
    %v3796 = vsel %vm3782, %v3750, %v3766
    %v3797 = vsel %vm3782, %v3754, %v3770
    %v3798 = vsel %vm3782, %v3758, %v3774
    %v3799 = vlaneseq
    %v3800 = vshrl.u32 %v3799, 7
    %v3801 = vsub.s32 0, %v3800
    %v3802 = vrot.slane %v3739, %v3801
    %v3803 = vlaneseq
    %v3804 = vshrl.u32 %v3803, 7
    %v3805 = vsub.s32 0, %v3804
    %v3806 = vrot.slane %v3740, %v3805
    %v3807 = vlaneseq
    %v3808 = vshrl.u32 %v3807, 7
    %v3809 = vsub.s32 0, %v3808
    %v3810 = vrot.slane %v3741, %v3809
    %v3811 = vlaneseq
    %v3812 = vshrl.u32 %v3811, 7
    %v3813 = vsub.s32 0, %v3812
    %v3814 = vrot.slane %v3742, %v3813
    %v3815 = vlaneseq
    %v3816 = vshrl.u32 %v3815, 7
    %v3817 = vsub.s32 1, %v3816
    %v3818 = vrot.slane %v3739, %v3817
    %v3819 = vlaneseq
    %v3820 = vshrl.u32 %v3819, 7
    %v3821 = vsub.s32 1, %v3820
    %v3822 = vrot.slane %v3740, %v3821
    %v3823 = vlaneseq
    %v3824 = vshrl.u32 %v3823, 7
    %v3825 = vsub.s32 1, %v3824
    %v3826 = vrot.slane %v3741, %v3825
    %v3827 = vlaneseq
    %v3828 = vshrl.u32 %v3827, 7
    %v3829 = vsub.s32 1, %v3828
    %v3830 = vrot.slane %v3742, %v3829
    %v3831 = vsel %vm3779, %v3802, %v3818
    %v3832 = vsel %vm3779, %v3806, %v3822
    %v3833 = vsel %vm3779, %v3810, %v3826
    %v3834 = vsel %vm3779, %v3814, %v3830
    %v3835 = vsel %vm3780, %v3802, %v3818
    %v3836 = vsel %vm3780, %v3806, %v3822
    %v3837 = vsel %vm3780, %v3810, %v3826
    %v3838 = vsel %vm3780, %v3814, %v3830
    %v3839 = vsel %vm3781, %v3802, %v3818
    %v3840 = vsel %vm3781, %v3806, %v3822
    %v3841 = vsel %vm3781, %v3810, %v3826
    %v3842 = vsel %vm3781, %v3814, %v3830
    %v3843 = vsel %vm3782, %v3802, %v3818
    %v3844 = vsel %vm3782, %v3806, %v3822
    %v3845 = vsel %vm3782, %v3810, %v3826
    %v3846 = vsel %vm3782, %v3814, %v3830
    %v3847 = vmul.f32 %v2959, %v3783
    %v3848 = vmul.f32 %v2961, %v3784
    %v3849 = vmul.f32 %v3277, %v3785
    %v3850 = vmul.f32 %v3279, %v3786
    %v3851 = vmul.f32 %v2963, %v3787
    %v3852 = vmul.f32 %v2965, %v3788
    %v3853 = vmul.f32 %v3281, %v3789
    %v3854 = vmul.f32 %v3283, %v3790
    %v3855 = vmul.f32 %v2969, %v3791
    %v3856 = vmul.f32 %v2971, %v3792
    %v3857 = vmul.f32 %v3287, %v3793
    %v3858 = vmul.f32 %v3289, %v3794
    %v3859 = vmul.f32 %v2973, %v3795
    %v3860 = vmul.f32 %v2975, %v3796
    %v3861 = vmul.f32 %v3291, %v3797
    %v3862 = vmul.f32 %v3293, %v3798
    %v3863 = vadd.f32 %v3847, %v3831
    %v3864 = vadd.f32 %v3848, %v3832
    %v3865 = vadd.f32 %v3849, %v3833
    %v3866 = vadd.f32 %v3850, %v3834
    %v3867 = vadd.f32 %v3851, %v3835
    %v3868 = vadd.f32 %v3852, %v3836
    %v3869 = vadd.f32 %v3853, %v3837
    %v3870 = vadd.f32 %v3854, %v3838
    %v3871 = vadd.f32 %v3855, %v3839
    %v3872 = vadd.f32 %v3856, %v3840
    %v3873 = vadd.f32 %v3857, %v3841
    %v3874 = vadd.f32 %v3858, %v3842
    %v3875 = vadd.f32 %v3859, %v3843
    %v3876 = vadd.f32 %v3860, %v3844
    %v3877 = vadd.f32 %v3861, %v3845
    %v3878 = vadd.f32 %v3862, %v3846
    %v3879 = vsub.f32 0.0, %v3863
    %v3880 = vsub.f32 0.0, %v3864
    %v3881 = vsub.f32 0.0, %v3865
    %v3882 = vsub.f32 0.0, %v3866
    %v3883 = vsub.f32 0.0, %v3867
    %v3884 = vsub.f32 0.0, %v3868
    %v3885 = vsub.f32 0.0, %v3869
    %v3886 = vsub.f32 0.0, %v3870
    %v3887 = vsub.f32 0.0, %v3871
    %v3888 = vsub.f32 0.0, %v3872
    %v3889 = vsub.f32 0.0, %v3873
    %v3890 = vsub.f32 0.0, %v3874
    %v3891 = vsub.f32 0.0, %v3875
    %v3892 = vsub.f32 0.0, %v3876
    %v3893 = vsub.f32 0.0, %v3877
    %v3894 = vsub.f32 0.0, %v3878
    %v3895 = vmul.f32 %v3879, 1.442695
    %v3896 = vpow.pop %v3895
    %v3897 = vmul.f32 %v3880, 1.442695
    %v3898 = vpow.pop %v3897
    %v3899 = vmul.f32 %v3881, 1.442695
    %v3900 = vpow.pop %v3899
    %v3901 = vmul.f32 %v3882, 1.442695
    %v3902 = vpow.pop %v3901
    %v3903 = vmul.f32 %v3883, 1.442695
    %v3904 = vpow.pop %v3903
    %v3905 = vmul.f32 %v3884, 1.442695
    %v3906 = vpow.pop %v3905
    %v3907 = vmul.f32 %v3885, 1.442695
    %v3908 = vpow.pop %v3907
    %v3909 = vmul.f32 %v3886, 1.442695
    %v3910 = vpow.pop %v3909
    %v3911 = vmul.f32 %v3887, 1.442695
    %v3912 = vpow.pop %v3911
    %v3913 = vmul.f32 %v3888, 1.442695
    %v3914 = vpow.pop %v3913
    %v3915 = vmul.f32 %v3889, 1.442695
    %v3916 = vpow.pop %v3915
    %v3917 = vmul.f32 %v3890, 1.442695
    %v3918 = vpow.pop %v3917
    %v3919 = vmul.f32 %v3891, 1.442695
    %v3920 = vpow.pop %v3919
    %v3921 = vmul.f32 %v3892, 1.442695
    %v3922 = vpow.pop %v3921
    %v3923 = vmul.f32 %v3893, 1.442695
    %v3924 = vpow.pop %v3923
    %v3925 = vmul.f32 %v3894, 1.442695
    %v3926 = vpow.pop %v3925
    %v3927 = vadd.f32 %v3896, 1.0
    %v3928 = vadd.f32 %v3898, 1.0
    %v3929 = vadd.f32 %v3900, 1.0
    %v3930 = vadd.f32 %v3902, 1.0
    %v3931 = vadd.f32 %v3904, 1.0
    %v3932 = vadd.f32 %v3906, 1.0
    %v3933 = vadd.f32 %v3908, 1.0
    %v3934 = vadd.f32 %v3910, 1.0
    %v3935 = vadd.f32 %v3912, 1.0
    %v3936 = vadd.f32 %v3914, 1.0
    %v3937 = vadd.f32 %v3916, 1.0
    %v3938 = vadd.f32 %v3918, 1.0
    %v3939 = vadd.f32 %v3920, 1.0
    %v3940 = vadd.f32 %v3922, 1.0
    %v3941 = vadd.f32 %v3924, 1.0
    %v3942 = vadd.f32 %v3926, 1.0
    %v3943 = vrcp.pop %v3927
    %v3944 = vrcp.pop %v3928
    %v3945 = vrcp.pop %v3929
    %v3946 = vrcp.pop %v3930
    %v3947 = vrcp.pop %v3931
    %v3948 = vrcp.pop %v3932
    %v3949 = vrcp.pop %v3933
    %v3950 = vrcp.pop %v3934
    %v3951 = vrcp.pop %v3935
    %v3952 = vrcp.pop %v3936
    %v3953 = vrcp.pop %v3937
    %v3954 = vrcp.pop %v3938
    %v3955 = vrcp.pop %v3939
    %v3956 = vrcp.pop %v3940
    %v3957 = vrcp.pop %v3941
    %v3958 = vrcp.pop %v3942
    %v3959 = vmul.f32 %v3863, %v3943
    %v3960 = vmul.f32 %v3864, %v3944
    %v3961 = vmul.f32 %v3865, %v3945
    %v3962 = vmul.f32 %v3866, %v3946
    %v3963 = vmul.f32 %v3867, %v3947
    %v3964 = vmul.f32 %v3868, %v3948
    %v3965 = vmul.f32 %v3869, %v3949
    %v3966 = vmul.f32 %v3870, %v3950
    %v3967 = vmul.f32 %v3871, %v3951
    %v3968 = vmul.f32 %v3872, %v3952
    %v3969 = vmul.f32 %v3873, %v3953
    %v3970 = vmul.f32 %v3874, %v3954
    %v3971 = vmul.f32 %v3875, %v3955
    %v3972 = vmul.f32 %v3876, %v3956
    %v3973 = vmul.f32 %v3877, %v3957
    %v3974 = vmul.f32 %v3878, %v3958
    %v3975 = vrot.slane %v3959, 7
    %v3976 = vrot.slane %v3960, 7
    %v3977 = vrot.slane %v3961, 7
    %v3978 = vrot.slane %v3962, 7
    %v3979 = vrot.slane %v3963, 7
    %v3980 = vrot.slane %v3964, 7
    %v3981 = vrot.slane %v3965, 7
    %v3982 = vrot.slane %v3966, 7
    %v3983 = vrot.slane %v3967, 7
    %v3984 = vrot.slane %v3968, 7
    %v3985 = vrot.slane %v3969, 7
    %v3986 = vrot.slane %v3970, 7
    %v3987 = vrot.slane %v3971, 7
    %v3988 = vrot.slane %v3972, 7
    %v3989 = vrot.slane %v3973, 7
    %v3990 = vrot.slane %v3974, 7
    %v3991 = vsel %vm211, %v3983, %v3987
    %v3992 = vsel %vm211, %v3984, %v3988
    %v3993 = vsel %vm211, %v3985, %v3989
    %v3994 = vsel %vm211, %v3986, %v3990
    %v3995 = vsel %vm211, %v3979, %v3983
    %v3996 = vsel %vm211, %v3980, %v3984
    %v3997 = vsel %vm211, %v3981, %v3985
    %v3998 = vsel %vm211, %v3982, %v3986
    %v3999 = vsel %vm211, %v3975, %v3979
    %v4000 = vsel %vm211, %v3976, %v3980
    %v4001 = vsel %vm211, %v3977, %v3981
    %v4002 = vsel %vm211, %v3978, %v3982
    %v4003 = vsel %vm211, %v3987, %v3975
    %v4004 = vsel %vm211, %v3988, %v3976
    %v4005 = vsel %vm211, %v3989, %v3977
    %v4006 = vsel %vm211, %v3990, %v3978
    %v4007 = vsel %vm232, 0.0, %v4003
    %v4008 = vsel %vm232, 0.0, %v4004
    %v4009 = vsel %vm232, 0.0, %v4005
    %v4010 = vsel %vm232, 0.0, %v4006
    %v4011 = vsel %vm233, 0.0, %v3999
    %v4012 = vsel %vm233, 0.0, %v4000
    %v4013 = vsel %vm233, 0.0, %v4001
    %v4014 = vsel %vm233, 0.0, %v4002
    %v4015 = vsel %vm234, 0.0, %v3995
    %v4016 = vsel %vm234, 0.0, %v3996
    %v4017 = vsel %vm234, 0.0, %v3997
    %v4018 = vsel %vm234, 0.0, %v3998
    %v4019 = vsel %vm235, 0.0, %v3991
    %v4020 = vsel %vm235, 0.0, %v3992
    %v4021 = vsel %vm235, 0.0, %v3993
    %v4022 = vsel %vm235, 0.0, %v3994
    %v4023 = vrot.slane %v3959, 1
    %v4024 = vrot.slane %v3960, 1
    %v4025 = vrot.slane %v3961, 1
    %v4026 = vrot.slane %v3962, 1
    %v4027 = vrot.slane %v3963, 1
    %v4028 = vrot.slane %v3964, 1
    %v4029 = vrot.slane %v3965, 1
    %v4030 = vrot.slane %v3966, 1
    %v4031 = vrot.slane %v3967, 1
    %v4032 = vrot.slane %v3968, 1
    %v4033 = vrot.slane %v3969, 1
    %v4034 = vrot.slane %v3970, 1
    %v4035 = vrot.slane %v3971, 1
    %v4036 = vrot.slane %v3972, 1
    %v4037 = vrot.slane %v3973, 1
    %v4038 = vrot.slane %v3974, 1
    %v4039 = vsel %vm268, %v4031, %v4035
    %v4040 = vsel %vm268, %v4032, %v4036
    %v4041 = vsel %vm268, %v4033, %v4037
    %v4042 = vsel %vm268, %v4034, %v4038
    %v4043 = vsel %vm268, %v4027, %v4031
    %v4044 = vsel %vm268, %v4028, %v4032
    %v4045 = vsel %vm268, %v4029, %v4033
    %v4046 = vsel %vm268, %v4030, %v4034
    %v4047 = vsel %vm268, %v4023, %v4027
    %v4048 = vsel %vm268, %v4024, %v4028
    %v4049 = vsel %vm268, %v4025, %v4029
    %v4050 = vsel %vm268, %v4026, %v4030
    %v4051 = vsel %vm268, %v4035, %v4023
    %v4052 = vsel %vm268, %v4036, %v4024
    %v4053 = vsel %vm268, %v4037, %v4025
    %v4054 = vsel %vm268, %v4038, %v4026
    %v4055 = vsel %vm289, 0.0, %v4047
    %v4056 = vsel %vm289, 0.0, %v4048
    %v4057 = vsel %vm289, 0.0, %v4049
    %v4058 = vsel %vm289, 0.0, %v4050
    %v4059 = vsel %vm290, 0.0, %v4043
    %v4060 = vsel %vm290, 0.0, %v4044
    %v4061 = vsel %vm290, 0.0, %v4045
    %v4062 = vsel %vm290, 0.0, %v4046
    %v4063 = vsel %vm291, 0.0, %v4039
    %v4064 = vsel %vm291, 0.0, %v4040
    %v4065 = vsel %vm291, 0.0, %v4041
    %v4066 = vsel %vm291, 0.0, %v4042
    %v4067 = vsel %vm292, 0.0, %v4051
    %v4068 = vsel %vm292, 0.0, %v4052
    %v4069 = vsel %vm292, 0.0, %v4053
    %v4070 = vsel %vm292, 0.0, %v4054
    %v4071 = vpack.c.bf16 %v4011, %v4007
    %v4072 = vpack.c.bf16 %v4012, %v4008
    %v4073 = vpack.c.bf16 %v4013, %v4009
    %v4074 = vpack.c.bf16 %v4014, %v4010
    %v4075 = vpack.c.bf16 %v3963, %v3959
    %v4076 = vpack.c.bf16 %v3964, %v3960
    %v4077 = vpack.c.bf16 %v3965, %v3961
    %v4078 = vpack.c.bf16 %v3966, %v3962
    %v4079 = vpack.c.bf16 %v4059, %v4055
    %v4080 = vpack.c.bf16 %v4060, %v4056
    %v4081 = vpack.c.bf16 %v4061, %v4057
    %v4082 = vpack.c.bf16 %v4062, %v4058
    %v4083 = vpack.c.bf16 %v4019, %v4015
    %v4084 = vpack.c.bf16 %v4020, %v4016
    %v4085 = vpack.c.bf16 %v4021, %v4017
    %v4086 = vpack.c.bf16 %v4022, %v4018
    %v4087 = vpack.c.bf16 %v3971, %v3967
    %v4088 = vpack.c.bf16 %v3972, %v3968
    %v4089 = vpack.c.bf16 %v3973, %v3969
    %v4090 = vpack.c.bf16 %v3974, %v3970
    %v4091 = vpack.c.bf16 %v4067, %v4063
    %v4092 = vpack.c.bf16 %v4068, %v4064
    %v4093 = vpack.c.bf16 %v4069, %v4065
    %v4094 = vpack.c.bf16 %v4070, %v4066
    %v4095 = vld [vmem:[#allocation11] sm:$0xff]
    %v4096 = vld [vmem:[#allocation11 + $0x8] sm:$0xff]
    %v4097 = vld [vmem:[#allocation11 + $0x10] sm:$0xff]
    %v4098 = vld [vmem:[#allocation11 + $0x18] sm:$0xff]
    %v4099 = vld [vmem:[#allocation11 + $0x20] sm:$0xff]
    %v4100 = vld [vmem:[#allocation11 + $0x28] sm:$0xff]
    %v4101 = vld [vmem:[#allocation11 + $0x30] sm:$0xff]
    %v4102 = vld [vmem:[#allocation11 + $0x38] sm:$0xff]
    %v4103 = vld [vmem:[#allocation11 + $0x40] sm:$0xff]
    %v4104 = vld [vmem:[#allocation11 + $0x48] sm:$0xff]
    %v4105 = vld [vmem:[#allocation11 + $0x50] sm:$0xff]
    %v4106 = vld [vmem:[#allocation11 + $0x58] sm:$0xff]
    %v4107 = vld [vmem:[#allocation11 + $0x60] sm:$0xff]
    %v4108 = vld [vmem:[#allocation11 + $0x68] sm:$0xff]
    %v4109 = vld [vmem:[#allocation11 + $0x70] sm:$0xff]
    %v4110 = vld [vmem:[#allocation11 + $0x78] sm:$0xff]
    %v4111 = vld [vmem:[#allocation11 + $0x80] sm:$0xff]
    %v4112 = vld [vmem:[#allocation11 + $0x88] sm:$0xff]
    %v4113 = vld [vmem:[#allocation11 + $0x90] sm:$0xff]
    %v4114 = vld [vmem:[#allocation11 + $0x98] sm:$0xff]
    %v4115 = vld [vmem:[#allocation11 + $0xa0] sm:$0xff]
    %v4116 = vld [vmem:[#allocation11 + $0xa8] sm:$0xff]
    %v4117 = vld [vmem:[#allocation11 + $0xb0] sm:$0xff]
    %v4118 = vld [vmem:[#allocation11 + $0xb8] sm:$0xff]
    %v4119 = vld [vmem:[#allocation11 + $0xc0] sm:$0xff]
    %v4120 = vld [vmem:[#allocation11 + $0xc8] sm:$0xff]
    %v4121 = vld [vmem:[#allocation11 + $0xd0] sm:$0xff]
    %v4122 = vld [vmem:[#allocation11 + $0xd8] sm:$0xff]
    %v4123 = vld [vmem:[#allocation11 + $0xe0] sm:$0xff]
    %v4124 = vld [vmem:[#allocation11 + $0xe8] sm:$0xff]
    %v4125 = vld [vmem:[#allocation11 + $0xf0] sm:$0xff]
    %v4126 = vld [vmem:[#allocation11 + $0xf8] sm:$0xff]
    %v4127 = vld [vmem:[#allocation11 + $0x100] sm:$0xff]
    %v4128 = vld [vmem:[#allocation11 + $0x108] sm:$0xff]
    %v4129 = vld [vmem:[#allocation11 + $0x110] sm:$0xff]
    %v4130 = vld [vmem:[#allocation11 + $0x118] sm:$0xff]
    %v4131 = vld [vmem:[#allocation11 + $0x120] sm:$0xff]
    %v4132 = vld [vmem:[#allocation11 + $0x128] sm:$0xff]
    %v4133 = vld [vmem:[#allocation11 + $0x130] sm:$0xff]
    %v4134 = vld [vmem:[#allocation11 + $0x138] sm:$0xff]
    %v4135 = vld [vmem:[#allocation11 + $0x140] sm:$0xff]
    %v4136 = vld [vmem:[#allocation11 + $0x148] sm:$0xff]
    %v4137 = vld [vmem:[#allocation11 + $0x150] sm:$0xff]
    %v4138 = vld [vmem:[#allocation11 + $0x158] sm:$0xff]
    %v4139 = vld [vmem:[#allocation11 + $0x160] sm:$0xff]
    %v4140 = vld [vmem:[#allocation11 + $0x168] sm:$0xff]
    %v4141 = vld [vmem:[#allocation11 + $0x170] sm:$0xff]
    %v4142 = vld [vmem:[#allocation11 + $0x178] sm:$0xff]
    %v4143 = vld [vmem:[#allocation11 + $0x180] sm:$0xff]
    %v4144 = vld [vmem:[#allocation11 + $0x188] sm:$0xff]
    %v4145 = vld [vmem:[#allocation11 + $0x190] sm:$0xff]
    %v4146 = vld [vmem:[#allocation11 + $0x198] sm:$0xff]
    %v4147 = vld [vmem:[#allocation11 + $0x1a0] sm:$0xff]
    %v4148 = vld [vmem:[#allocation11 + $0x1a8] sm:$0xff]
    %v4149 = vld [vmem:[#allocation11 + $0x1b0] sm:$0xff]
    %v4150 = vld [vmem:[#allocation11 + $0x1b8] sm:$0xff]
    %v4151 = vld [vmem:[#allocation11 + $0x1c0] sm:$0xff]
    %v4152 = vld [vmem:[#allocation11 + $0x1c8] sm:$0xff]
    %v4153 = vld [vmem:[#allocation11 + $0x1d0] sm:$0xff]
    %v4154 = vld [vmem:[#allocation11 + $0x1d8] sm:$0xff]
    %v4155 = vld [vmem:[#allocation11 + $0x1e0] sm:$0xff]
    %v4156 = vld [vmem:[#allocation11 + $0x1e8] sm:$0xff]
    %v4157 = vld [vmem:[#allocation11 + $0x1f0] sm:$0xff]
    %v4158 = vld [vmem:[#allocation11 + $0x1f8] sm:$0xff]
    %v4159 = vld [vmem:[#allocation11 + $0x200] sm:$0xff]
    %v4160 = vld [vmem:[#allocation11 + $0x208] sm:$0xff]
    %v4161 = vld [vmem:[#allocation11 + $0x210] sm:$0xff]
    %v4162 = vld [vmem:[#allocation11 + $0x218] sm:$0xff]
    %v4163 = vld [vmem:[#allocation11 + $0x220] sm:$0xff]
    %v4164 = vld [vmem:[#allocation11 + $0x228] sm:$0xff]
    %v4165 = vld [vmem:[#allocation11 + $0x230] sm:$0xff]
    %v4166 = vld [vmem:[#allocation11 + $0x238] sm:$0xff]
    %v4167 = vld [vmem:[#allocation11 + $0x240] sm:$0xff]
    %v4168 = vld [vmem:[#allocation11 + $0x248] sm:$0xff]
    %v4169 = vld [vmem:[#allocation11 + $0x250] sm:$0xff]
    %v4170 = vld [vmem:[#allocation11 + $0x258] sm:$0xff]
    %v4171 = vld [vmem:[#allocation11 + $0x260] sm:$0xff]
    %v4172 = vld [vmem:[#allocation11 + $0x268] sm:$0xff]
    %v4173 = vld [vmem:[#allocation11 + $0x270] sm:$0xff]
    %v4174 = vld [vmem:[#allocation11 + $0x278] sm:$0xff]
    %v4175 = vld [vmem:[#allocation11 + $0x280] sm:$0xff]
    %v4176 = vld [vmem:[#allocation11 + $0x288] sm:$0xff]
    %v4177 = vld [vmem:[#allocation11 + $0x290] sm:$0xff]
    %v4178 = vld [vmem:[#allocation11 + $0x298] sm:$0xff]
    %v4179 = vld [vmem:[#allocation11 + $0x2a0] sm:$0xff]
    %v4180 = vld [vmem:[#allocation11 + $0x2a8] sm:$0xff]
    %v4181 = vld [vmem:[#allocation11 + $0x2b0] sm:$0xff]
    %v4182 = vld [vmem:[#allocation11 + $0x2b8] sm:$0xff]
    %v4183 = vld [vmem:[#allocation11 + $0x2c0] sm:$0xff]
    %v4184 = vld [vmem:[#allocation11 + $0x2c8] sm:$0xff]
    %v4185 = vld [vmem:[#allocation11 + $0x2d0] sm:$0xff]
    %v4186 = vld [vmem:[#allocation11 + $0x2d8] sm:$0xff]
    %v4187 = vld [vmem:[#allocation11 + $0x2e0] sm:$0xff]
    %v4188 = vld [vmem:[#allocation11 + $0x2e8] sm:$0xff]
    %v4189 = vld [vmem:[#allocation11 + $0x2f0] sm:$0xff]
    %v4190 = vld [vmem:[#allocation11 + $0x2f8] sm:$0xff]
    %v4191 = vld [vmem:[#allocation11 + $0x300] sm:$0xff]
    %v4192 = vld [vmem:[#allocation11 + $0x308] sm:$0xff]
    %v4193 = vld [vmem:[#allocation11 + $0x310] sm:$0xff]
    %v4194 = vld [vmem:[#allocation11 + $0x318] sm:$0xff]
    %v4195 = vld [vmem:[#allocation11 + $0x320] sm:$0xff]
    %v4196 = vld [vmem:[#allocation11 + $0x328] sm:$0xff]
    %v4197 = vld [vmem:[#allocation11 + $0x330] sm:$0xff]
    %v4198 = vld [vmem:[#allocation11 + $0x338] sm:$0xff]
    %v4199 = vld [vmem:[#allocation11 + $0x340] sm:$0xff]
    %v4200 = vld [vmem:[#allocation11 + $0x348] sm:$0xff]
    %v4201 = vld [vmem:[#allocation11 + $0x350] sm:$0xff]
    %v4202 = vld [vmem:[#allocation11 + $0x358] sm:$0xff]
    %v4203 = vld [vmem:[#allocation11 + $0x360] sm:$0xff]
    %v4204 = vld [vmem:[#allocation11 + $0x368] sm:$0xff]
    %v4205 = vld [vmem:[#allocation11 + $0x370] sm:$0xff]
    %v4206 = vld [vmem:[#allocation11 + $0x378] sm:$0xff]
    %v4207 = vld [vmem:[#allocation11 + $0x380] sm:$0xff]
    %v4208 = vld [vmem:[#allocation11 + $0x388] sm:$0xff]
    %v4209 = vld [vmem:[#allocation11 + $0x390] sm:$0xff]
    %v4210 = vld [vmem:[#allocation11 + $0x398] sm:$0xff]
    %v4211 = vld [vmem:[#allocation11 + $0x3a0] sm:$0xff]
    %v4212 = vld [vmem:[#allocation11 + $0x3a8] sm:$0xff]
    %v4213 = vld [vmem:[#allocation11 + $0x3b0] sm:$0xff]
    %v4214 = vld [vmem:[#allocation11 + $0x3b8] sm:$0xff]
    %v4215 = vld [vmem:[#allocation11 + $0x3c0] sm:$0xff]
    %v4216 = vld [vmem:[#allocation11 + $0x3c8] sm:$0xff]
    %v4217 = vld [vmem:[#allocation11 + $0x3d0] sm:$0xff]
    %v4218 = vld [vmem:[#allocation11 + $0x3d8] sm:$0xff]
    %v4219 = vld [vmem:[#allocation11 + $0x3e0] sm:$0xff]
    %v4220 = vld [vmem:[#allocation11 + $0x3e8] sm:$0xff]
    %v4221 = vld [vmem:[#allocation11 + $0x3f0] sm:$0xff]
    %v4222 = vld [vmem:[#allocation11 + $0x3f8] sm:$0xff]
    %v4223 = vld [vmem:[#allocation11 + $0x400] sm:$0xff]
    %v4224 = vld [vmem:[#allocation11 + $0x408] sm:$0xff]
    %v4225 = vld [vmem:[#allocation11 + $0x410] sm:$0xff]
    %v4226 = vld [vmem:[#allocation11 + $0x418] sm:$0xff]
    %v4227 = vld [vmem:[#allocation11 + $0x420] sm:$0xff]
    %v4228 = vld [vmem:[#allocation11 + $0x428] sm:$0xff]
    %v4229 = vld [vmem:[#allocation11 + $0x430] sm:$0xff]
    %v4230 = vld [vmem:[#allocation11 + $0x438] sm:$0xff]
    %v4231 = vld [vmem:[#allocation11 + $0x440] sm:$0xff]
    %v4232 = vld [vmem:[#allocation11 + $0x448] sm:$0xff]
    %v4233 = vld [vmem:[#allocation11 + $0x450] sm:$0xff]
    %v4234 = vld [vmem:[#allocation11 + $0x458] sm:$0xff]
    %v4235 = vld [vmem:[#allocation11 + $0x460] sm:$0xff]
    %v4236 = vld [vmem:[#allocation11 + $0x468] sm:$0xff]
    %v4237 = vld [vmem:[#allocation11 + $0x470] sm:$0xff]
    %v4238 = vld [vmem:[#allocation11 + $0x478] sm:$0xff]
    %v4239 = vld [vmem:[#allocation11 + $0x480] sm:$0xff]
    %v4240 = vld [vmem:[#allocation11 + $0x488] sm:$0xff]
    %v4241 = vld [vmem:[#allocation11 + $0x490] sm:$0xff]
    %v4242 = vld [vmem:[#allocation11 + $0x498] sm:$0xff]
    %v4243 = vld [vmem:[#allocation11 + $0x4a0] sm:$0xff]
    %v4244 = vld [vmem:[#allocation11 + $0x4a8] sm:$0xff]
    %v4245 = vld [vmem:[#allocation11 + $0x4b0] sm:$0xff]
    %v4246 = vld [vmem:[#allocation11 + $0x4b8] sm:$0xff]
    %v4247 = vld [vmem:[#allocation11 + $0x4c0] sm:$0xff]
    %v4248 = vld [vmem:[#allocation11 + $0x4c8] sm:$0xff]
    %v4249 = vld [vmem:[#allocation11 + $0x4d0] sm:$0xff]
    %v4250 = vld [vmem:[#allocation11 + $0x4d8] sm:$0xff]
    %v4251 = vld [vmem:[#allocation11 + $0x4e0] sm:$0xff]
    %v4252 = vld [vmem:[#allocation11 + $0x4e8] sm:$0xff]
    %v4253 = vld [vmem:[#allocation11 + $0x4f0] sm:$0xff]
    %v4254 = vld [vmem:[#allocation11 + $0x4f8] sm:$0xff]
    %v4255 = vld [vmem:[#allocation11 + $0x500] sm:$0xff]
    %v4256 = vld [vmem:[#allocation11 + $0x508] sm:$0xff]
    %v4257 = vld [vmem:[#allocation11 + $0x510] sm:$0xff]
    %v4258 = vld [vmem:[#allocation11 + $0x518] sm:$0xff]
    %v4259 = vld [vmem:[#allocation11 + $0x520] sm:$0xff]
    %v4260 = vld [vmem:[#allocation11 + $0x528] sm:$0xff]
    %v4261 = vld [vmem:[#allocation11 + $0x530] sm:$0xff]
    %v4262 = vld [vmem:[#allocation11 + $0x538] sm:$0xff]
    %v4263 = vld [vmem:[#allocation11 + $0x540] sm:$0xff]
    %v4264 = vld [vmem:[#allocation11 + $0x548] sm:$0xff]
    %v4265 = vld [vmem:[#allocation11 + $0x550] sm:$0xff]
    %v4266 = vld [vmem:[#allocation11 + $0x558] sm:$0xff]
    %v4267 = vld [vmem:[#allocation11 + $0x560] sm:$0xff]
    %v4268 = vld [vmem:[#allocation11 + $0x568] sm:$0xff]
    %v4269 = vld [vmem:[#allocation11 + $0x570] sm:$0xff]
    %v4270 = vld [vmem:[#allocation11 + $0x578] sm:$0xff]
    %v4271 = vld [vmem:[#allocation11 + $0x580] sm:$0xff]
    %v4272 = vld [vmem:[#allocation11 + $0x588] sm:$0xff]
    %v4273 = vld [vmem:[#allocation11 + $0x590] sm:$0xff]
    %v4274 = vld [vmem:[#allocation11 + $0x598] sm:$0xff]
    %v4275 = vld [vmem:[#allocation11 + $0x5a0] sm:$0xff]
    %v4276 = vld [vmem:[#allocation11 + $0x5a8] sm:$0xff]
    %v4277 = vld [vmem:[#allocation11 + $0x5b0] sm:$0xff]
    %v4278 = vld [vmem:[#allocation11 + $0x5b8] sm:$0xff]
    %v4279 = vld [vmem:[#allocation11 + $0x5c0] sm:$0xff]
    %v4280 = vld [vmem:[#allocation11 + $0x5c8] sm:$0xff]
    %v4281 = vld [vmem:[#allocation11 + $0x5d0] sm:$0xff]
    %v4282 = vld [vmem:[#allocation11 + $0x5d8] sm:$0xff]
    %v4283 = vld [vmem:[#allocation11 + $0x5e0] sm:$0xff]
    %v4284 = vld [vmem:[#allocation11 + $0x5e8] sm:$0xff]
    %v4285 = vld [vmem:[#allocation11 + $0x5f0] sm:$0xff]
    %v4286 = vld [vmem:[#allocation11 + $0x5f8] sm:$0xff]
    %v4287 = vld [vmem:[#allocation11 + $0x600] sm:$0xff]
    %v4288 = vld [vmem:[#allocation11 + $0x608] sm:$0xff]
    %v4289 = vld [vmem:[#allocation11 + $0x610] sm:$0xff]
    %v4290 = vld [vmem:[#allocation11 + $0x618] sm:$0xff]
    %v4291 = vld [vmem:[#allocation11 + $0x620] sm:$0xff]
    %v4292 = vld [vmem:[#allocation11 + $0x628] sm:$0xff]
    %v4293 = vld [vmem:[#allocation11 + $0x630] sm:$0xff]
    %v4294 = vld [vmem:[#allocation11 + $0x638] sm:$0xff]
    %v4295 = vld [vmem:[#allocation11 + $0x640] sm:$0xff]
    %v4296 = vld [vmem:[#allocation11 + $0x648] sm:$0xff]
    %v4297 = vld [vmem:[#allocation11 + $0x650] sm:$0xff]
    %v4298 = vld [vmem:[#allocation11 + $0x658] sm:$0xff]
    %v4299 = vld [vmem:[#allocation11 + $0x660] sm:$0xff]
    %v4300 = vld [vmem:[#allocation11 + $0x668] sm:$0xff]
    %v4301 = vld [vmem:[#allocation11 + $0x670] sm:$0xff]
    %v4302 = vld [vmem:[#allocation11 + $0x678] sm:$0xff]
    %v4303 = vld [vmem:[#allocation11 + $0x680] sm:$0xff]
    %v4304 = vld [vmem:[#allocation11 + $0x688] sm:$0xff]
    %v4305 = vld [vmem:[#allocation11 + $0x690] sm:$0xff]
    %v4306 = vld [vmem:[#allocation11 + $0x698] sm:$0xff]
    %v4307 = vld [vmem:[#allocation11 + $0x6a0] sm:$0xff]
    %v4308 = vld [vmem:[#allocation11 + $0x6a8] sm:$0xff]
    %v4309 = vld [vmem:[#allocation11 + $0x6b0] sm:$0xff]
    %v4310 = vld [vmem:[#allocation11 + $0x6b8] sm:$0xff]
    %v4311 = vld [vmem:[#allocation11 + $0x6c0] sm:$0xff]
    %v4312 = vld [vmem:[#allocation11 + $0x6c8] sm:$0xff]
    %v4313 = vld [vmem:[#allocation11 + $0x6d0] sm:$0xff]
    %v4314 = vld [vmem:[#allocation11 + $0x6d8] sm:$0xff]
    %v4315 = vld [vmem:[#allocation11 + $0x6e0] sm:$0xff]
    %v4316 = vld [vmem:[#allocation11 + $0x6e8] sm:$0xff]
    %v4317 = vld [vmem:[#allocation11 + $0x6f0] sm:$0xff]
    %v4318 = vld [vmem:[#allocation11 + $0x6f8] sm:$0xff]
    %v4319 = vld [vmem:[#allocation11 + $0x700] sm:$0xff]
    %v4320 = vld [vmem:[#allocation11 + $0x708] sm:$0xff]
    %v4321 = vld [vmem:[#allocation11 + $0x710] sm:$0xff]
    %v4322 = vld [vmem:[#allocation11 + $0x718] sm:$0xff]
    %v4323 = vld [vmem:[#allocation11 + $0x720] sm:$0xff]
    %v4324 = vld [vmem:[#allocation11 + $0x728] sm:$0xff]
    %v4325 = vld [vmem:[#allocation11 + $0x730] sm:$0xff]
    %v4326 = vld [vmem:[#allocation11 + $0x738] sm:$0xff]
    %v4327 = vld [vmem:[#allocation11 + $0x740] sm:$0xff]
    %v4328 = vld [vmem:[#allocation11 + $0x748] sm:$0xff]
    %v4329 = vld [vmem:[#allocation11 + $0x750] sm:$0xff]
    %v4330 = vld [vmem:[#allocation11 + $0x758] sm:$0xff]
    %v4331 = vld [vmem:[#allocation11 + $0x760] sm:$0xff]
    %v4332 = vld [vmem:[#allocation11 + $0x768] sm:$0xff]
    %v4333 = vld [vmem:[#allocation11 + $0x770] sm:$0xff]
    %v4334 = vld [vmem:[#allocation11 + $0x778] sm:$0xff]
    %v4335 = vld [vmem:[#allocation11 + $0x780] sm:$0xff]
    %v4336 = vld [vmem:[#allocation11 + $0x788] sm:$0xff]
    %v4337 = vld [vmem:[#allocation11 + $0x790] sm:$0xff]
    %v4338 = vld [vmem:[#allocation11 + $0x798] sm:$0xff]
    %v4339 = vld [vmem:[#allocation11 + $0x7a0] sm:$0xff]
    %v4340 = vld [vmem:[#allocation11 + $0x7a8] sm:$0xff]
    %v4341 = vld [vmem:[#allocation11 + $0x7b0] sm:$0xff]
    %v4342 = vld [vmem:[#allocation11 + $0x7b8] sm:$0xff]
    %v4343 = vld [vmem:[#allocation11 + $0x7c0] sm:$0xff]
    %v4344 = vld [vmem:[#allocation11 + $0x7c8] sm:$0xff]
    %v4345 = vld [vmem:[#allocation11 + $0x7d0] sm:$0xff]
    %v4346 = vld [vmem:[#allocation11 + $0x7d8] sm:$0xff]
    %v4347 = vld [vmem:[#allocation11 + $0x7e0] sm:$0xff]
    %v4348 = vld [vmem:[#allocation11 + $0x7e8] sm:$0xff]
    %v4349 = vld [vmem:[#allocation11 + $0x7f0] sm:$0xff]
    %v4350 = vld [vmem:[#allocation11 + $0x7f8] sm:$0xff]
    %v4351 = vld [vmem:[#allocation11 + $0x800] sm:$0xff]
    %v4352 = vld [vmem:[#allocation11 + $0x808] sm:$0xff]
    %v4353 = vld [vmem:[#allocation11 + $0x810] sm:$0xff]
    %v4354 = vld [vmem:[#allocation11 + $0x818] sm:$0xff]
    %v4355 = vld [vmem:[#allocation11 + $0x820] sm:$0xff]
    %v4356 = vld [vmem:[#allocation11 + $0x828] sm:$0xff]
    %v4357 = vld [vmem:[#allocation11 + $0x830] sm:$0xff]
    %v4358 = vld [vmem:[#allocation11 + $0x838] sm:$0xff]
    %v4359 = vld [vmem:[#allocation11 + $0x840] sm:$0xff]
    %v4360 = vld [vmem:[#allocation11 + $0x848] sm:$0xff]
    %v4361 = vld [vmem:[#allocation11 + $0x850] sm:$0xff]
    %v4362 = vld [vmem:[#allocation11 + $0x858] sm:$0xff]
    %v4363 = vld [vmem:[#allocation11 + $0x860] sm:$0xff]
    %v4364 = vld [vmem:[#allocation11 + $0x868] sm:$0xff]
    %v4365 = vld [vmem:[#allocation11 + $0x870] sm:$0xff]
    %v4366 = vld [vmem:[#allocation11 + $0x878] sm:$0xff]
    %v4367 = vld [vmem:[#allocation11 + $0x880] sm:$0xff]
    %v4368 = vld [vmem:[#allocation11 + $0x888] sm:$0xff]
    %v4369 = vld [vmem:[#allocation11 + $0x890] sm:$0xff]
    %v4370 = vld [vmem:[#allocation11 + $0x898] sm:$0xff]
    %v4371 = vld [vmem:[#allocation11 + $0x8a0] sm:$0xff]
    %v4372 = vld [vmem:[#allocation11 + $0x8a8] sm:$0xff]
    %v4373 = vld [vmem:[#allocation11 + $0x8b0] sm:$0xff]
    %v4374 = vld [vmem:[#allocation11 + $0x8b8] sm:$0xff]
    %v4375 = vld [vmem:[#allocation11 + $0x8c0] sm:$0xff]
    %v4376 = vld [vmem:[#allocation11 + $0x8c8] sm:$0xff]
    %v4377 = vld [vmem:[#allocation11 + $0x8d0] sm:$0xff]
    %v4378 = vld [vmem:[#allocation11 + $0x8d8] sm:$0xff]
    %v4379 = vld [vmem:[#allocation11 + $0x8e0] sm:$0xff]
    %v4380 = vld [vmem:[#allocation11 + $0x8e8] sm:$0xff]
    %v4381 = vld [vmem:[#allocation11 + $0x8f0] sm:$0xff]
    %v4382 = vld [vmem:[#allocation11 + $0x8f8] sm:$0xff]
    %v4383 = vld [vmem:[#allocation11 + $0x900] sm:$0xff]
    %v4384 = vld [vmem:[#allocation11 + $0x908] sm:$0xff]
    %v4385 = vld [vmem:[#allocation11 + $0x910] sm:$0xff]
    %v4386 = vld [vmem:[#allocation11 + $0x918] sm:$0xff]
    %v4387 = vld [vmem:[#allocation11 + $0x920] sm:$0xff]
    %v4388 = vld [vmem:[#allocation11 + $0x928] sm:$0xff]
    %v4389 = vld [vmem:[#allocation11 + $0x930] sm:$0xff]
    %v4390 = vld [vmem:[#allocation11 + $0x938] sm:$0xff]
    %v4391 = vld [vmem:[#allocation11 + $0x940] sm:$0xff]
    %v4392 = vld [vmem:[#allocation11 + $0x948] sm:$0xff]
    %v4393 = vld [vmem:[#allocation11 + $0x950] sm:$0xff]
    %v4394 = vld [vmem:[#allocation11 + $0x958] sm:$0xff]
    %v4395 = vld [vmem:[#allocation11 + $0x960] sm:$0xff]
    %v4396 = vld [vmem:[#allocation11 + $0x968] sm:$0xff]
    %v4397 = vld [vmem:[#allocation11 + $0x970] sm:$0xff]
    %v4398 = vld [vmem:[#allocation11 + $0x978] sm:$0xff]
    %v4399 = vld [vmem:[#allocation11 + $0x980] sm:$0xff]
    %v4400 = vld [vmem:[#allocation11 + $0x988] sm:$0xff]
    %v4401 = vld [vmem:[#allocation11 + $0x990] sm:$0xff]
    %v4402 = vld [vmem:[#allocation11 + $0x998] sm:$0xff]
    %v4403 = vld [vmem:[#allocation11 + $0x9a0] sm:$0xff]
    %v4404 = vld [vmem:[#allocation11 + $0x9a8] sm:$0xff]
    %v4405 = vld [vmem:[#allocation11 + $0x9b0] sm:$0xff]
    %v4406 = vld [vmem:[#allocation11 + $0x9b8] sm:$0xff]
    %v4407 = vld [vmem:[#allocation11 + $0x9c0] sm:$0xff]
    %v4408 = vld [vmem:[#allocation11 + $0x9c8] sm:$0xff]
    %v4409 = vld [vmem:[#allocation11 + $0x9d0] sm:$0xff]
    %v4410 = vld [vmem:[#allocation11 + $0x9d8] sm:$0xff]
    %v4411 = vld [vmem:[#allocation11 + $0x9e0] sm:$0xff]
    %v4412 = vld [vmem:[#allocation11 + $0x9e8] sm:$0xff]
    %v4413 = vld [vmem:[#allocation11 + $0x9f0] sm:$0xff]
    %v4414 = vld [vmem:[#allocation11 + $0x9f8] sm:$0xff]
    %v4415 = vld [vmem:[#allocation11 + $0xa00] sm:$0xff]
    %v4416 = vld [vmem:[#allocation11 + $0xa08] sm:$0xff]
    %v4417 = vld [vmem:[#allocation11 + $0xa10] sm:$0xff]
    %v4418 = vld [vmem:[#allocation11 + $0xa18] sm:$0xff]
    %v4419 = vld [vmem:[#allocation11 + $0xa20] sm:$0xff]
    %v4420 = vld [vmem:[#allocation11 + $0xa28] sm:$0xff]
    %v4421 = vld [vmem:[#allocation11 + $0xa30] sm:$0xff]
    %v4422 = vld [vmem:[#allocation11 + $0xa38] sm:$0xff]
    %v4423 = vld [vmem:[#allocation11 + $0xa40] sm:$0xff]
    %v4424 = vld [vmem:[#allocation11 + $0xa48] sm:$0xff]
    %v4425 = vld [vmem:[#allocation11 + $0xa50] sm:$0xff]
    %v4426 = vld [vmem:[#allocation11 + $0xa58] sm:$0xff]
    %v4427 = vld [vmem:[#allocation11 + $0xa60] sm:$0xff]
    %v4428 = vld [vmem:[#allocation11 + $0xa68] sm:$0xff]
    %v4429 = vld [vmem:[#allocation11 + $0xa70] sm:$0xff]
    %v4430 = vld [vmem:[#allocation11 + $0xa78] sm:$0xff]
    %v4431 = vld [vmem:[#allocation11 + $0xa80] sm:$0xff]
    %v4432 = vld [vmem:[#allocation11 + $0xa88] sm:$0xff]
    %v4433 = vld [vmem:[#allocation11 + $0xa90] sm:$0xff]
    %v4434 = vld [vmem:[#allocation11 + $0xa98] sm:$0xff]
    %v4435 = vld [vmem:[#allocation11 + $0xaa0] sm:$0xff]
    %v4436 = vld [vmem:[#allocation11 + $0xaa8] sm:$0xff]
    %v4437 = vld [vmem:[#allocation11 + $0xab0] sm:$0xff]
    %v4438 = vld [vmem:[#allocation11 + $0xab8] sm:$0xff]
    %v4439 = vld [vmem:[#allocation11 + $0xac0] sm:$0xff]
    %v4440 = vld [vmem:[#allocation11 + $0xac8] sm:$0xff]
    %v4441 = vld [vmem:[#allocation11 + $0xad0] sm:$0xff]
    %v4442 = vld [vmem:[#allocation11 + $0xad8] sm:$0xff]
    %v4443 = vld [vmem:[#allocation11 + $0xae0] sm:$0xff]
    %v4444 = vld [vmem:[#allocation11 + $0xae8] sm:$0xff]
    %v4445 = vld [vmem:[#allocation11 + $0xaf0] sm:$0xff]
    %v4446 = vld [vmem:[#allocation11 + $0xaf8] sm:$0xff]
    %v4447 = vld [vmem:[#allocation11 + $0xb00] sm:$0xff]
    %v4448 = vld [vmem:[#allocation11 + $0xb08] sm:$0xff]
    %v4449 = vld [vmem:[#allocation11 + $0xb10] sm:$0xff]
    %v4450 = vld [vmem:[#allocation11 + $0xb18] sm:$0xff]
    %v4451 = vld [vmem:[#allocation11 + $0xb20] sm:$0xff]
    %v4452 = vld [vmem:[#allocation11 + $0xb28] sm:$0xff]
    %v4453 = vld [vmem:[#allocation11 + $0xb30] sm:$0xff]
    %v4454 = vld [vmem:[#allocation11 + $0xb38] sm:$0xff]
    %v4455 = vld [vmem:[#allocation11 + $0xb40] sm:$0xff]
    %v4456 = vld [vmem:[#allocation11 + $0xb48] sm:$0xff]
    %v4457 = vld [vmem:[#allocation11 + $0xb50] sm:$0xff]
    %v4458 = vld [vmem:[#allocation11 + $0xb58] sm:$0xff]
    %v4459 = vld [vmem:[#allocation11 + $0xb60] sm:$0xff]
    %v4460 = vld [vmem:[#allocation11 + $0xb68] sm:$0xff]
    %v4461 = vld [vmem:[#allocation11 + $0xb70] sm:$0xff]
    %v4462 = vld [vmem:[#allocation11 + $0xb78] sm:$0xff]
    %v4463 = vld [vmem:[#allocation11 + $0xb80] sm:$0xff]
    %v4464 = vld [vmem:[#allocation11 + $0xb88] sm:$0xff]
    %v4465 = vld [vmem:[#allocation11 + $0xb90] sm:$0xff]
    %v4466 = vld [vmem:[#allocation11 + $0xb98] sm:$0xff]
    %v4467 = vld [vmem:[#allocation11 + $0xba0] sm:$0xff]
    %v4468 = vld [vmem:[#allocation11 + $0xba8] sm:$0xff]
    %v4469 = vld [vmem:[#allocation11 + $0xbb0] sm:$0xff]
    %v4470 = vld [vmem:[#allocation11 + $0xbb8] sm:$0xff]
    %v4471 = vld [vmem:[#allocation11 + $0xbc0] sm:$0xff]
    %v4472 = vld [vmem:[#allocation11 + $0xbc8] sm:$0xff]
    %v4473 = vld [vmem:[#allocation11 + $0xbd0] sm:$0xff]
    %v4474 = vld [vmem:[#allocation11 + $0xbd8] sm:$0xff]
    %v4475 = vld [vmem:[#allocation11 + $0xbe0] sm:$0xff]
    %v4476 = vld [vmem:[#allocation11 + $0xbe8] sm:$0xff]
    %v4477 = vld [vmem:[#allocation11 + $0xbf0] sm:$0xff]
    %v4478 = vld [vmem:[#allocation11 + $0xbf8] sm:$0xff]
    %v4479 = vld [vmem:[#allocation13] sm:$0xf]
    %v4481 = vlaneseq
    %v4482 = vshrl.u32 %v4481, 7
    %v4483 = vsub.s32 0, %v4482
    %v4484 = vrot.slane %v4479, %v4483
    %v4485 = vlaneseq
    %v4486 = vshrl.u32 %v4485, 7
    %v4487 = vsub.s32 1, %v4486
    %v4488 = vrot.slane %v4479, %v4487
    %v4489 = vlaneseq
    %v4490 = vshrl.u32 %v4489, 7
    %v4491 = vsub.s32 2, %v4490
    %v4492 = vrot.slane %v4479, %v4491
    %v4493 = vlaneseq
    %v4494 = vshrl.u32 %v4493, 7
    %v4495 = vsub.s32 3, %v4494
    %v4496 = vrot.slane %v4479, %v4495
    %v4885 = vunpack.c.l.b16 %v4095
    %v4886 = vunpack.c.h.b16 %v4095
    %v4887 = vunpack.c.l.b16 %v4096
    %v4888 = vunpack.c.h.b16 %v4096
    %v4889 = vunpack.c.l.b16 %v4097
    %v4890 = vunpack.c.h.b16 %v4097
    %v4891 = vunpack.c.l.b16 %v4098
    %v4892 = vunpack.c.h.b16 %v4098
    %v4893 = vunpack.c.l.b16 %v4099
    %v4894 = vunpack.c.h.b16 %v4099
    %v4895 = vunpack.c.l.b16 %v4100
    %v4896 = vunpack.c.h.b16 %v4100
    %v4897 = vunpack.c.l.b16 %v4101
    %v4898 = vunpack.c.h.b16 %v4101
    %v4899 = vunpack.c.l.b16 %v4102
    %v4900 = vunpack.c.h.b16 %v4102
    %v4901 = vunpack.c.l.b16 %v4103
    %v4902 = vunpack.c.h.b16 %v4103
    %v4903 = vunpack.c.l.b16 %v4104
    %v4904 = vunpack.c.h.b16 %v4104
    %v4905 = vunpack.c.l.b16 %v4105
    %v4906 = vunpack.c.h.b16 %v4105
    %v4907 = vunpack.c.l.b16 %v4106
    %v4908 = vunpack.c.h.b16 %v4106
    %v4909 = vunpack.c.l.b16 %v4107
    %v4910 = vunpack.c.h.b16 %v4107
    %v4911 = vunpack.c.l.b16 %v4108
    %v4912 = vunpack.c.h.b16 %v4108
    %v4913 = vunpack.c.l.b16 %v4109
    %v4914 = vunpack.c.h.b16 %v4109
    %v4915 = vunpack.c.l.b16 %v4110
    %v4916 = vunpack.c.h.b16 %v4110
    %v4917 = vunpack.c.l.b16 %v4111
    %v4918 = vunpack.c.h.b16 %v4111
    %v4919 = vunpack.c.l.b16 %v4112
    %v4920 = vunpack.c.h.b16 %v4112
    %v4921 = vunpack.c.l.b16 %v4113
    %v4922 = vunpack.c.h.b16 %v4113
    %v4923 = vunpack.c.l.b16 %v4114
    %v4924 = vunpack.c.h.b16 %v4114
    %v4925 = vunpack.c.l.b16 %v4115
    %v4926 = vunpack.c.h.b16 %v4115
    %v4927 = vunpack.c.l.b16 %v4116
    %v4928 = vunpack.c.h.b16 %v4116
    %v4929 = vunpack.c.l.b16 %v4117
    %v4930 = vunpack.c.h.b16 %v4117
    %v4931 = vunpack.c.l.b16 %v4118
    %v4932 = vunpack.c.h.b16 %v4118
    %v4933 = vunpack.c.l.b16 %v4119
    %v4934 = vunpack.c.h.b16 %v4119
    %v4935 = vunpack.c.l.b16 %v4120
    %v4936 = vunpack.c.h.b16 %v4120
    %v4937 = vunpack.c.l.b16 %v4121
    %v4938 = vunpack.c.h.b16 %v4121
    %v4939 = vunpack.c.l.b16 %v4122
    %v4940 = vunpack.c.h.b16 %v4122
    %v4941 = vunpack.c.l.b16 %v4123
    %v4942 = vunpack.c.h.b16 %v4123
    %v4943 = vunpack.c.l.b16 %v4124
    %v4944 = vunpack.c.h.b16 %v4124
    %v4945 = vunpack.c.l.b16 %v4125
    %v4946 = vunpack.c.h.b16 %v4125
    %v4947 = vunpack.c.l.b16 %v4126
    %v4948 = vunpack.c.h.b16 %v4126
    %v4949 = vunpack.c.l.b16 %v4127
    %v4950 = vunpack.c.h.b16 %v4127
    %v4951 = vunpack.c.l.b16 %v4128
    %v4952 = vunpack.c.h.b16 %v4128
    %v4953 = vunpack.c.l.b16 %v4129
    %v4954 = vunpack.c.h.b16 %v4129
    %v4955 = vunpack.c.l.b16 %v4130
    %v4956 = vunpack.c.h.b16 %v4130
    %v4957 = vunpack.c.l.b16 %v4131
    %v4958 = vunpack.c.h.b16 %v4131
    %v4959 = vunpack.c.l.b16 %v4132
    %v4960 = vunpack.c.h.b16 %v4132
    %v4961 = vunpack.c.l.b16 %v4133
    %v4962 = vunpack.c.h.b16 %v4133
    %v4963 = vunpack.c.l.b16 %v4134
    %v4964 = vunpack.c.h.b16 %v4134
    %v4965 = vunpack.c.l.b16 %v4135
    %v4966 = vunpack.c.h.b16 %v4135
    %v4967 = vunpack.c.l.b16 %v4136
    %v4968 = vunpack.c.h.b16 %v4136
    %v4969 = vunpack.c.l.b16 %v4137
    %v4970 = vunpack.c.h.b16 %v4137
    %v4971 = vunpack.c.l.b16 %v4138
    %v4972 = vunpack.c.h.b16 %v4138
    %v4973 = vunpack.c.l.b16 %v4139
    %v4974 = vunpack.c.h.b16 %v4139
    %v4975 = vunpack.c.l.b16 %v4140
    %v4976 = vunpack.c.h.b16 %v4140
    %v4977 = vunpack.c.l.b16 %v4141
    %v4978 = vunpack.c.h.b16 %v4141
    %v4979 = vunpack.c.l.b16 %v4142
    %v4980 = vunpack.c.h.b16 %v4142
    %v4981 = vunpack.c.l.b16 %v4143
    %v4982 = vunpack.c.h.b16 %v4143
    %v4983 = vunpack.c.l.b16 %v4144
    %v4984 = vunpack.c.h.b16 %v4144
    %v4985 = vunpack.c.l.b16 %v4145
    %v4986 = vunpack.c.h.b16 %v4145
    %v4987 = vunpack.c.l.b16 %v4146
    %v4988 = vunpack.c.h.b16 %v4146
    %v4989 = vunpack.c.l.b16 %v4147
    %v4990 = vunpack.c.h.b16 %v4147
    %v4991 = vunpack.c.l.b16 %v4148
    %v4992 = vunpack.c.h.b16 %v4148
    %v4993 = vunpack.c.l.b16 %v4149
    %v4994 = vunpack.c.h.b16 %v4149
    %v4995 = vunpack.c.l.b16 %v4150
    %v4996 = vunpack.c.h.b16 %v4150
    %v4997 = vunpack.c.l.b16 %v4151
    %v4998 = vunpack.c.h.b16 %v4151
    %v4999 = vunpack.c.l.b16 %v4152
    %v5000 = vunpack.c.h.b16 %v4152
    %v5001 = vunpack.c.l.b16 %v4153
    %v5002 = vunpack.c.h.b16 %v4153
    %v5003 = vunpack.c.l.b16 %v4154
    %v5004 = vunpack.c.h.b16 %v4154
    %v5005 = vunpack.c.l.b16 %v4155
    %v5006 = vunpack.c.h.b16 %v4155
    %v5007 = vunpack.c.l.b16 %v4156
    %v5008 = vunpack.c.h.b16 %v4156
    %v5009 = vunpack.c.l.b16 %v4157
    %v5010 = vunpack.c.h.b16 %v4157
    %v5011 = vunpack.c.l.b16 %v4158
    %v5012 = vunpack.c.h.b16 %v4158
    %v5013 = vunpack.c.l.b16 %v4159
    %v5014 = vunpack.c.h.b16 %v4159
    %v5015 = vunpack.c.l.b16 %v4160
    %v5016 = vunpack.c.h.b16 %v4160
    %v5017 = vunpack.c.l.b16 %v4161
    %v5018 = vunpack.c.h.b16 %v4161
    %v5019 = vunpack.c.l.b16 %v4162
    %v5020 = vunpack.c.h.b16 %v4162
    %v5021 = vunpack.c.l.b16 %v4163
    %v5022 = vunpack.c.h.b16 %v4163
    %v5023 = vunpack.c.l.b16 %v4164
    %v5024 = vunpack.c.h.b16 %v4164
    %v5025 = vunpack.c.l.b16 %v4165
    %v5026 = vunpack.c.h.b16 %v4165
    %v5027 = vunpack.c.l.b16 %v4166
    %v5028 = vunpack.c.h.b16 %v4166
    %v5029 = vunpack.c.l.b16 %v4167
    %v5030 = vunpack.c.h.b16 %v4167
    %v5031 = vunpack.c.l.b16 %v4168
    %v5032 = vunpack.c.h.b16 %v4168
    %v5033 = vunpack.c.l.b16 %v4169
    %v5034 = vunpack.c.h.b16 %v4169
    %v5035 = vunpack.c.l.b16 %v4170
    %v5036 = vunpack.c.h.b16 %v4170
    %v5037 = vunpack.c.l.b16 %v4171
    %v5038 = vunpack.c.h.b16 %v4171
    %v5039 = vunpack.c.l.b16 %v4172
    %v5040 = vunpack.c.h.b16 %v4172
    %v5041 = vunpack.c.l.b16 %v4173
    %v5042 = vunpack.c.h.b16 %v4173
    %v5043 = vunpack.c.l.b16 %v4174
    %v5044 = vunpack.c.h.b16 %v4174
    %v5045 = vunpack.c.l.b16 %v4175
    %v5046 = vunpack.c.h.b16 %v4175
    %v5047 = vunpack.c.l.b16 %v4176
    %v5048 = vunpack.c.h.b16 %v4176
    %v5049 = vunpack.c.l.b16 %v4177
    %v5050 = vunpack.c.h.b16 %v4177
    %v5051 = vunpack.c.l.b16 %v4178
    %v5052 = vunpack.c.h.b16 %v4178
    %v5053 = vunpack.c.l.b16 %v4179
    %v5054 = vunpack.c.h.b16 %v4179
    %v5055 = vunpack.c.l.b16 %v4180
    %v5056 = vunpack.c.h.b16 %v4180
    %v5057 = vunpack.c.l.b16 %v4181
    %v5058 = vunpack.c.h.b16 %v4181
    %v5059 = vunpack.c.l.b16 %v4182
    %v5060 = vunpack.c.h.b16 %v4182
    %v5061 = vunpack.c.l.b16 %v4183
    %v5062 = vunpack.c.h.b16 %v4183
    %v5063 = vunpack.c.l.b16 %v4184
    %v5064 = vunpack.c.h.b16 %v4184
    %v5065 = vunpack.c.l.b16 %v4185
    %v5066 = vunpack.c.h.b16 %v4185
    %v5067 = vunpack.c.l.b16 %v4186
    %v5068 = vunpack.c.h.b16 %v4186
    %v5069 = vunpack.c.l.b16 %v4187
    %v5070 = vunpack.c.h.b16 %v4187
    %v5071 = vunpack.c.l.b16 %v4188
    %v5072 = vunpack.c.h.b16 %v4188
    %v5073 = vunpack.c.l.b16 %v4189
    %v5074 = vunpack.c.h.b16 %v4189
    %v5075 = vunpack.c.l.b16 %v4190
    %v5076 = vunpack.c.h.b16 %v4190
    %v5077 = vunpack.c.l.b16 %v4191
    %v5078 = vunpack.c.h.b16 %v4191
    %v5079 = vunpack.c.l.b16 %v4192
    %v5080 = vunpack.c.h.b16 %v4192
    %v5081 = vunpack.c.l.b16 %v4193
    %v5082 = vunpack.c.h.b16 %v4193
    %v5083 = vunpack.c.l.b16 %v4194
    %v5084 = vunpack.c.h.b16 %v4194
    %v5085 = vunpack.c.l.b16 %v4195
    %v5086 = vunpack.c.h.b16 %v4195
    %v5087 = vunpack.c.l.b16 %v4196
    %v5088 = vunpack.c.h.b16 %v4196
    %v5089 = vunpack.c.l.b16 %v4197
    %v5090 = vunpack.c.h.b16 %v4197
    %v5091 = vunpack.c.l.b16 %v4198
    %v5092 = vunpack.c.h.b16 %v4198
    %v5093 = vunpack.c.l.b16 %v4199
    %v5094 = vunpack.c.h.b16 %v4199
    %v5095 = vunpack.c.l.b16 %v4200
    %v5096 = vunpack.c.h.b16 %v4200
    %v5097 = vunpack.c.l.b16 %v4201
    %v5098 = vunpack.c.h.b16 %v4201
    %v5099 = vunpack.c.l.b16 %v4202
    %v5100 = vunpack.c.h.b16 %v4202
    %v5101 = vunpack.c.l.b16 %v4203
    %v5102 = vunpack.c.h.b16 %v4203
    %v5103 = vunpack.c.l.b16 %v4204
    %v5104 = vunpack.c.h.b16 %v4204
    %v5105 = vunpack.c.l.b16 %v4205
    %v5106 = vunpack.c.h.b16 %v4205
    %v5107 = vunpack.c.l.b16 %v4206
    %v5108 = vunpack.c.h.b16 %v4206
    %v5109 = vunpack.c.l.b16 %v4207
    %v5110 = vunpack.c.h.b16 %v4207
    %v5111 = vunpack.c.l.b16 %v4208
    %v5112 = vunpack.c.h.b16 %v4208
    %v5113 = vunpack.c.l.b16 %v4209
    %v5114 = vunpack.c.h.b16 %v4209
    %v5115 = vunpack.c.l.b16 %v4210
    %v5116 = vunpack.c.h.b16 %v4210
    %v5117 = vunpack.c.l.b16 %v4211
    %v5118 = vunpack.c.h.b16 %v4211
    %v5119 = vunpack.c.l.b16 %v4212
    %v5120 = vunpack.c.h.b16 %v4212
    %v5121 = vunpack.c.l.b16 %v4213
    %v5122 = vunpack.c.h.b16 %v4213
    %v5123 = vunpack.c.l.b16 %v4214
    %v5124 = vunpack.c.h.b16 %v4214
    %v5125 = vunpack.c.l.b16 %v4215
    %v5126 = vunpack.c.h.b16 %v4215
    %v5127 = vunpack.c.l.b16 %v4216
    %v5128 = vunpack.c.h.b16 %v4216
    %v5129 = vunpack.c.l.b16 %v4217
    %v5130 = vunpack.c.h.b16 %v4217
    %v5131 = vunpack.c.l.b16 %v4218
    %v5132 = vunpack.c.h.b16 %v4218
    %v5133 = vunpack.c.l.b16 %v4219
    %v5134 = vunpack.c.h.b16 %v4219
    %v5135 = vunpack.c.l.b16 %v4220
    %v5136 = vunpack.c.h.b16 %v4220
    %v5137 = vunpack.c.l.b16 %v4221
    %v5138 = vunpack.c.h.b16 %v4221
    %v5139 = vunpack.c.l.b16 %v4222
    %v5140 = vunpack.c.h.b16 %v4222
    %v5141 = vunpack.c.l.b16 %v4223
    %v5142 = vunpack.c.h.b16 %v4223
    %v5143 = vunpack.c.l.b16 %v4224
    %v5144 = vunpack.c.h.b16 %v4224
    %v5145 = vunpack.c.l.b16 %v4225
    %v5146 = vunpack.c.h.b16 %v4225
    %v5147 = vunpack.c.l.b16 %v4226
    %v5148 = vunpack.c.h.b16 %v4226
    %v5149 = vunpack.c.l.b16 %v4227
    %v5150 = vunpack.c.h.b16 %v4227
    %v5151 = vunpack.c.l.b16 %v4228
    %v5152 = vunpack.c.h.b16 %v4228
    %v5153 = vunpack.c.l.b16 %v4229
    %v5154 = vunpack.c.h.b16 %v4229
    %v5155 = vunpack.c.l.b16 %v4230
    %v5156 = vunpack.c.h.b16 %v4230
    %v5157 = vunpack.c.l.b16 %v4231
    %v5158 = vunpack.c.h.b16 %v4231
    %v5159 = vunpack.c.l.b16 %v4232
    %v5160 = vunpack.c.h.b16 %v4232
    %v5161 = vunpack.c.l.b16 %v4233
    %v5162 = vunpack.c.h.b16 %v4233
    %v5163 = vunpack.c.l.b16 %v4234
    %v5164 = vunpack.c.h.b16 %v4234
    %v5165 = vunpack.c.l.b16 %v4235
    %v5166 = vunpack.c.h.b16 %v4235
    %v5167 = vunpack.c.l.b16 %v4236
    %v5168 = vunpack.c.h.b16 %v4236
    %v5169 = vunpack.c.l.b16 %v4237
    %v5170 = vunpack.c.h.b16 %v4237
    %v5171 = vunpack.c.l.b16 %v4238
    %v5172 = vunpack.c.h.b16 %v4238
    %v5173 = vunpack.c.l.b16 %v4239
    %v5174 = vunpack.c.h.b16 %v4239
    %v5175 = vunpack.c.l.b16 %v4240
    %v5176 = vunpack.c.h.b16 %v4240
    %v5177 = vunpack.c.l.b16 %v4241
    %v5178 = vunpack.c.h.b16 %v4241
    %v5179 = vunpack.c.l.b16 %v4242
    %v5180 = vunpack.c.h.b16 %v4242
    %v5181 = vunpack.c.l.b16 %v4243
    %v5182 = vunpack.c.h.b16 %v4243
    %v5183 = vunpack.c.l.b16 %v4244
    %v5184 = vunpack.c.h.b16 %v4244
    %v5185 = vunpack.c.l.b16 %v4245
    %v5186 = vunpack.c.h.b16 %v4245
    %v5187 = vunpack.c.l.b16 %v4246
    %v5188 = vunpack.c.h.b16 %v4246
    %v5189 = vunpack.c.l.b16 %v4247
    %v5190 = vunpack.c.h.b16 %v4247
    %v5191 = vunpack.c.l.b16 %v4248
    %v5192 = vunpack.c.h.b16 %v4248
    %v5193 = vunpack.c.l.b16 %v4249
    %v5194 = vunpack.c.h.b16 %v4249
    %v5195 = vunpack.c.l.b16 %v4250
    %v5196 = vunpack.c.h.b16 %v4250
    %v5197 = vunpack.c.l.b16 %v4251
    %v5198 = vunpack.c.h.b16 %v4251
    %v5199 = vunpack.c.l.b16 %v4252
    %v5200 = vunpack.c.h.b16 %v4252
    %v5201 = vunpack.c.l.b16 %v4253
    %v5202 = vunpack.c.h.b16 %v4253
    %v5203 = vunpack.c.l.b16 %v4254
    %v5204 = vunpack.c.h.b16 %v4254
    %v5205 = vunpack.c.l.b16 %v4255
    %v5206 = vunpack.c.h.b16 %v4255
    %v5207 = vunpack.c.l.b16 %v4256
    %v5208 = vunpack.c.h.b16 %v4256
    %v5209 = vunpack.c.l.b16 %v4257
    %v5210 = vunpack.c.h.b16 %v4257
    %v5211 = vunpack.c.l.b16 %v4258
    %v5212 = vunpack.c.h.b16 %v4258
    %v5213 = vunpack.c.l.b16 %v4259
    %v5214 = vunpack.c.h.b16 %v4259
    %v5215 = vunpack.c.l.b16 %v4260
    %v5216 = vunpack.c.h.b16 %v4260
    %v5217 = vunpack.c.l.b16 %v4261
    %v5218 = vunpack.c.h.b16 %v4261
    %v5219 = vunpack.c.l.b16 %v4262
    %v5220 = vunpack.c.h.b16 %v4262
    %v5221 = vunpack.c.l.b16 %v4263
    %v5222 = vunpack.c.h.b16 %v4263
    %v5223 = vunpack.c.l.b16 %v4264
    %v5224 = vunpack.c.h.b16 %v4264
    %v5225 = vunpack.c.l.b16 %v4265
    %v5226 = vunpack.c.h.b16 %v4265
    %v5227 = vunpack.c.l.b16 %v4266
    %v5228 = vunpack.c.h.b16 %v4266
    %v5229 = vunpack.c.l.b16 %v4267
    %v5230 = vunpack.c.h.b16 %v4267
    %v5231 = vunpack.c.l.b16 %v4268
    %v5232 = vunpack.c.h.b16 %v4268
    %v5233 = vunpack.c.l.b16 %v4269
    %v5234 = vunpack.c.h.b16 %v4269
    %v5235 = vunpack.c.l.b16 %v4270
    %v5236 = vunpack.c.h.b16 %v4270
    %v5237 = vunpack.c.l.b16 %v4271
    %v5238 = vunpack.c.h.b16 %v4271
    %v5239 = vunpack.c.l.b16 %v4272
    %v5240 = vunpack.c.h.b16 %v4272
    %v5241 = vunpack.c.l.b16 %v4273
    %v5242 = vunpack.c.h.b16 %v4273
    %v5243 = vunpack.c.l.b16 %v4274
    %v5244 = vunpack.c.h.b16 %v4274
    %v5245 = vunpack.c.l.b16 %v4275
    %v5246 = vunpack.c.h.b16 %v4275
    %v5247 = vunpack.c.l.b16 %v4276
    %v5248 = vunpack.c.h.b16 %v4276
    %v5249 = vunpack.c.l.b16 %v4277
    %v5250 = vunpack.c.h.b16 %v4277
    %v5251 = vunpack.c.l.b16 %v4278
    %v5252 = vunpack.c.h.b16 %v4278
    %v5253 = vunpack.c.l.b16 %v4279
    %v5254 = vunpack.c.h.b16 %v4279
    %v5255 = vunpack.c.l.b16 %v4280
    %v5256 = vunpack.c.h.b16 %v4280
    %v5257 = vunpack.c.l.b16 %v4281
    %v5258 = vunpack.c.h.b16 %v4281
    %v5259 = vunpack.c.l.b16 %v4282
    %v5260 = vunpack.c.h.b16 %v4282
    %v5261 = vunpack.c.l.b16 %v4283
    %v5262 = vunpack.c.h.b16 %v4283
    %v5263 = vunpack.c.l.b16 %v4284
    %v5264 = vunpack.c.h.b16 %v4284
    %v5265 = vunpack.c.l.b16 %v4285
    %v5266 = vunpack.c.h.b16 %v4285
    %v5267 = vunpack.c.l.b16 %v4286
    %v5268 = vunpack.c.h.b16 %v4286
    %v5269 = vunpack.c.l.b16 %v4287
    %v5270 = vunpack.c.h.b16 %v4287
    %v5271 = vunpack.c.l.b16 %v4288
    %v5272 = vunpack.c.h.b16 %v4288
    %v5273 = vunpack.c.l.b16 %v4289
    %v5274 = vunpack.c.h.b16 %v4289
    %v5275 = vunpack.c.l.b16 %v4290
    %v5276 = vunpack.c.h.b16 %v4290
    %v5277 = vunpack.c.l.b16 %v4291
    %v5278 = vunpack.c.h.b16 %v4291
    %v5279 = vunpack.c.l.b16 %v4292
    %v5280 = vunpack.c.h.b16 %v4292
    %v5281 = vunpack.c.l.b16 %v4293
    %v5282 = vunpack.c.h.b16 %v4293
    %v5283 = vunpack.c.l.b16 %v4294
    %v5284 = vunpack.c.h.b16 %v4294
    %v5285 = vunpack.c.l.b16 %v4295
    %v5286 = vunpack.c.h.b16 %v4295
    %v5287 = vunpack.c.l.b16 %v4296
    %v5288 = vunpack.c.h.b16 %v4296
    %v5289 = vunpack.c.l.b16 %v4297
    %v5290 = vunpack.c.h.b16 %v4297
    %v5291 = vunpack.c.l.b16 %v4298
    %v5292 = vunpack.c.h.b16 %v4298
    %v5293 = vunpack.c.l.b16 %v4299
    %v5294 = vunpack.c.h.b16 %v4299
    %v5295 = vunpack.c.l.b16 %v4300
    %v5296 = vunpack.c.h.b16 %v4300
    %v5297 = vunpack.c.l.b16 %v4301
    %v5298 = vunpack.c.h.b16 %v4301
    %v5299 = vunpack.c.l.b16 %v4302
    %v5300 = vunpack.c.h.b16 %v4302
    %v5301 = vunpack.c.l.b16 %v4303
    %v5302 = vunpack.c.h.b16 %v4303
    %v5303 = vunpack.c.l.b16 %v4304
    %v5304 = vunpack.c.h.b16 %v4304
    %v5305 = vunpack.c.l.b16 %v4305
    %v5306 = vunpack.c.h.b16 %v4305
    %v5307 = vunpack.c.l.b16 %v4306
    %v5308 = vunpack.c.h.b16 %v4306
    %v5309 = vunpack.c.l.b16 %v4307
    %v5310 = vunpack.c.h.b16 %v4307
    %v5311 = vunpack.c.l.b16 %v4308
    %v5312 = vunpack.c.h.b16 %v4308
    %v5313 = vunpack.c.l.b16 %v4309
    %v5314 = vunpack.c.h.b16 %v4309
    %v5315 = vunpack.c.l.b16 %v4310
    %v5316 = vunpack.c.h.b16 %v4310
    %v5317 = vunpack.c.l.b16 %v4311
    %v5318 = vunpack.c.h.b16 %v4311
    %v5319 = vunpack.c.l.b16 %v4312
    %v5320 = vunpack.c.h.b16 %v4312
    %v5321 = vunpack.c.l.b16 %v4313
    %v5322 = vunpack.c.h.b16 %v4313
    %v5323 = vunpack.c.l.b16 %v4314
    %v5324 = vunpack.c.h.b16 %v4314
    %v5325 = vunpack.c.l.b16 %v4315
    %v5326 = vunpack.c.h.b16 %v4315
    %v5327 = vunpack.c.l.b16 %v4316
    %v5328 = vunpack.c.h.b16 %v4316
    %v5329 = vunpack.c.l.b16 %v4317
    %v5330 = vunpack.c.h.b16 %v4317
    %v5331 = vunpack.c.l.b16 %v4318
    %v5332 = vunpack.c.h.b16 %v4318
    %v5333 = vunpack.c.l.b16 %v4319
    %v5334 = vunpack.c.h.b16 %v4319
    %v5335 = vunpack.c.l.b16 %v4320
    %v5336 = vunpack.c.h.b16 %v4320
    %v5337 = vunpack.c.l.b16 %v4321
    %v5338 = vunpack.c.h.b16 %v4321
    %v5339 = vunpack.c.l.b16 %v4322
    %v5340 = vunpack.c.h.b16 %v4322
    %v5341 = vunpack.c.l.b16 %v4323
    %v5342 = vunpack.c.h.b16 %v4323
    %v5343 = vunpack.c.l.b16 %v4324
    %v5344 = vunpack.c.h.b16 %v4324
    %v5345 = vunpack.c.l.b16 %v4325
    %v5346 = vunpack.c.h.b16 %v4325
    %v5347 = vunpack.c.l.b16 %v4326
    %v5348 = vunpack.c.h.b16 %v4326
    %v5349 = vunpack.c.l.b16 %v4327
    %v5350 = vunpack.c.h.b16 %v4327
    %v5351 = vunpack.c.l.b16 %v4328
    %v5352 = vunpack.c.h.b16 %v4328
    %v5353 = vunpack.c.l.b16 %v4329
    %v5354 = vunpack.c.h.b16 %v4329
    %v5355 = vunpack.c.l.b16 %v4330
    %v5356 = vunpack.c.h.b16 %v4330
    %v5357 = vunpack.c.l.b16 %v4331
    %v5358 = vunpack.c.h.b16 %v4331
    %v5359 = vunpack.c.l.b16 %v4332
    %v5360 = vunpack.c.h.b16 %v4332
    %v5361 = vunpack.c.l.b16 %v4333
    %v5362 = vunpack.c.h.b16 %v4333
    %v5363 = vunpack.c.l.b16 %v4334
    %v5364 = vunpack.c.h.b16 %v4334
    %v5365 = vunpack.c.l.b16 %v4335
    %v5366 = vunpack.c.h.b16 %v4335
    %v5367 = vunpack.c.l.b16 %v4336
    %v5368 = vunpack.c.h.b16 %v4336
    %v5369 = vunpack.c.l.b16 %v4337
    %v5370 = vunpack.c.h.b16 %v4337
    %v5371 = vunpack.c.l.b16 %v4338
    %v5372 = vunpack.c.h.b16 %v4338
    %v5373 = vunpack.c.l.b16 %v4339
    %v5374 = vunpack.c.h.b16 %v4339
    %v5375 = vunpack.c.l.b16 %v4340
    %v5376 = vunpack.c.h.b16 %v4340
    %v5377 = vunpack.c.l.b16 %v4341
    %v5378 = vunpack.c.h.b16 %v4341
    %v5379 = vunpack.c.l.b16 %v4342
    %v5380 = vunpack.c.h.b16 %v4342
    %v5381 = vunpack.c.l.b16 %v4343
    %v5382 = vunpack.c.h.b16 %v4343
    %v5383 = vunpack.c.l.b16 %v4344
    %v5384 = vunpack.c.h.b16 %v4344
    %v5385 = vunpack.c.l.b16 %v4345
    %v5386 = vunpack.c.h.b16 %v4345
    %v5387 = vunpack.c.l.b16 %v4346
    %v5388 = vunpack.c.h.b16 %v4346
    %v5389 = vunpack.c.l.b16 %v4347
    %v5390 = vunpack.c.h.b16 %v4347
    %v5391 = vunpack.c.l.b16 %v4348
    %v5392 = vunpack.c.h.b16 %v4348
    %v5393 = vunpack.c.l.b16 %v4349
    %v5394 = vunpack.c.h.b16 %v4349
    %v5395 = vunpack.c.l.b16 %v4350
    %v5396 = vunpack.c.h.b16 %v4350
    %v5397 = vunpack.c.l.b16 %v4351
    %v5398 = vunpack.c.h.b16 %v4351
    %v5399 = vunpack.c.l.b16 %v4352
    %v5400 = vunpack.c.h.b16 %v4352
    %v5401 = vunpack.c.l.b16 %v4353
    %v5402 = vunpack.c.h.b16 %v4353
    %v5403 = vunpack.c.l.b16 %v4354
    %v5404 = vunpack.c.h.b16 %v4354
    %v5405 = vunpack.c.l.b16 %v4355
    %v5406 = vunpack.c.h.b16 %v4355
    %v5407 = vunpack.c.l.b16 %v4356
    %v5408 = vunpack.c.h.b16 %v4356
    %v5409 = vunpack.c.l.b16 %v4357
    %v5410 = vunpack.c.h.b16 %v4357
    %v5411 = vunpack.c.l.b16 %v4358
    %v5412 = vunpack.c.h.b16 %v4358
    %v5413 = vunpack.c.l.b16 %v4359
    %v5414 = vunpack.c.h.b16 %v4359
    %v5415 = vunpack.c.l.b16 %v4360
    %v5416 = vunpack.c.h.b16 %v4360
    %v5417 = vunpack.c.l.b16 %v4361
    %v5418 = vunpack.c.h.b16 %v4361
    %v5419 = vunpack.c.l.b16 %v4362
    %v5420 = vunpack.c.h.b16 %v4362
    %v5421 = vunpack.c.l.b16 %v4363
    %v5422 = vunpack.c.h.b16 %v4363
    %v5423 = vunpack.c.l.b16 %v4364
    %v5424 = vunpack.c.h.b16 %v4364
    %v5425 = vunpack.c.l.b16 %v4365
    %v5426 = vunpack.c.h.b16 %v4365
    %v5427 = vunpack.c.l.b16 %v4366
    %v5428 = vunpack.c.h.b16 %v4366
    %v5429 = vunpack.c.l.b16 %v4367
    %v5430 = vunpack.c.h.b16 %v4367
    %v5431 = vunpack.c.l.b16 %v4368
    %v5432 = vunpack.c.h.b16 %v4368
    %v5433 = vunpack.c.l.b16 %v4369
    %v5434 = vunpack.c.h.b16 %v4369
    %v5435 = vunpack.c.l.b16 %v4370
    %v5436 = vunpack.c.h.b16 %v4370
    %v5437 = vunpack.c.l.b16 %v4371
    %v5438 = vunpack.c.h.b16 %v4371
    %v5439 = vunpack.c.l.b16 %v4372
    %v5440 = vunpack.c.h.b16 %v4372
    %v5441 = vunpack.c.l.b16 %v4373
    %v5442 = vunpack.c.h.b16 %v4373
    %v5443 = vunpack.c.l.b16 %v4374
    %v5444 = vunpack.c.h.b16 %v4374
    %v5445 = vunpack.c.l.b16 %v4375
    %v5446 = vunpack.c.h.b16 %v4375
    %v5447 = vunpack.c.l.b16 %v4376
    %v5448 = vunpack.c.h.b16 %v4376
    %v5449 = vunpack.c.l.b16 %v4377
    %v5450 = vunpack.c.h.b16 %v4377
    %v5451 = vunpack.c.l.b16 %v4378
    %v5452 = vunpack.c.h.b16 %v4378
    %v5453 = vunpack.c.l.b16 %v4379
    %v5454 = vunpack.c.h.b16 %v4379
    %v5455 = vunpack.c.l.b16 %v4380
    %v5456 = vunpack.c.h.b16 %v4380
    %v5457 = vunpack.c.l.b16 %v4381
    %v5458 = vunpack.c.h.b16 %v4381
    %v5459 = vunpack.c.l.b16 %v4382
    %v5460 = vunpack.c.h.b16 %v4382
    %v5461 = vunpack.c.l.b16 %v4383
    %v5462 = vunpack.c.h.b16 %v4383
    %v5463 = vunpack.c.l.b16 %v4384
    %v5464 = vunpack.c.h.b16 %v4384
    %v5465 = vunpack.c.l.b16 %v4385
    %v5466 = vunpack.c.h.b16 %v4385
    %v5467 = vunpack.c.l.b16 %v4386
    %v5468 = vunpack.c.h.b16 %v4386
    %v5469 = vunpack.c.l.b16 %v4387
    %v5470 = vunpack.c.h.b16 %v4387
    %v5471 = vunpack.c.l.b16 %v4388
    %v5472 = vunpack.c.h.b16 %v4388
    %v5473 = vunpack.c.l.b16 %v4389
    %v5474 = vunpack.c.h.b16 %v4389
    %v5475 = vunpack.c.l.b16 %v4390
    %v5476 = vunpack.c.h.b16 %v4390
    %v5477 = vunpack.c.l.b16 %v4391
    %v5478 = vunpack.c.h.b16 %v4391
    %v5479 = vunpack.c.l.b16 %v4392
    %v5480 = vunpack.c.h.b16 %v4392
    %v5481 = vunpack.c.l.b16 %v4393
    %v5482 = vunpack.c.h.b16 %v4393
    %v5483 = vunpack.c.l.b16 %v4394
    %v5484 = vunpack.c.h.b16 %v4394
    %v5485 = vunpack.c.l.b16 %v4395
    %v5486 = vunpack.c.h.b16 %v4395
    %v5487 = vunpack.c.l.b16 %v4396
    %v5488 = vunpack.c.h.b16 %v4396
    %v5489 = vunpack.c.l.b16 %v4397
    %v5490 = vunpack.c.h.b16 %v4397
    %v5491 = vunpack.c.l.b16 %v4398
    %v5492 = vunpack.c.h.b16 %v4398
    %v5493 = vunpack.c.l.b16 %v4399
    %v5494 = vunpack.c.h.b16 %v4399
    %v5495 = vunpack.c.l.b16 %v4400
    %v5496 = vunpack.c.h.b16 %v4400
    %v5497 = vunpack.c.l.b16 %v4401
    %v5498 = vunpack.c.h.b16 %v4401
    %v5499 = vunpack.c.l.b16 %v4402
    %v5500 = vunpack.c.h.b16 %v4402
    %v5501 = vunpack.c.l.b16 %v4403
    %v5502 = vunpack.c.h.b16 %v4403
    %v5503 = vunpack.c.l.b16 %v4404
    %v5504 = vunpack.c.h.b16 %v4404
    %v5505 = vunpack.c.l.b16 %v4405
    %v5506 = vunpack.c.h.b16 %v4405
    %v5507 = vunpack.c.l.b16 %v4406
    %v5508 = vunpack.c.h.b16 %v4406
    %v5509 = vunpack.c.l.b16 %v4407
    %v5510 = vunpack.c.h.b16 %v4407
    %v5511 = vunpack.c.l.b16 %v4408
    %v5512 = vunpack.c.h.b16 %v4408
    %v5513 = vunpack.c.l.b16 %v4409
    %v5514 = vunpack.c.h.b16 %v4409
    %v5515 = vunpack.c.l.b16 %v4410
    %v5516 = vunpack.c.h.b16 %v4410
    %v5517 = vunpack.c.l.b16 %v4411
    %v5518 = vunpack.c.h.b16 %v4411
    %v5519 = vunpack.c.l.b16 %v4412
    %v5520 = vunpack.c.h.b16 %v4412
    %v5521 = vunpack.c.l.b16 %v4413
    %v5522 = vunpack.c.h.b16 %v4413
    %v5523 = vunpack.c.l.b16 %v4414
    %v5524 = vunpack.c.h.b16 %v4414
    %v5525 = vunpack.c.l.b16 %v4415
    %v5526 = vunpack.c.h.b16 %v4415
    %v5527 = vunpack.c.l.b16 %v4416
    %v5528 = vunpack.c.h.b16 %v4416
    %v5529 = vunpack.c.l.b16 %v4417
    %v5530 = vunpack.c.h.b16 %v4417
    %v5531 = vunpack.c.l.b16 %v4418
    %v5532 = vunpack.c.h.b16 %v4418
    %v5533 = vunpack.c.l.b16 %v4419
    %v5534 = vunpack.c.h.b16 %v4419
    %v5535 = vunpack.c.l.b16 %v4420
    %v5536 = vunpack.c.h.b16 %v4420
    %v5537 = vunpack.c.l.b16 %v4421
    %v5538 = vunpack.c.h.b16 %v4421
    %v5539 = vunpack.c.l.b16 %v4422
    %v5540 = vunpack.c.h.b16 %v4422
    %v5541 = vunpack.c.l.b16 %v4423
    %v5542 = vunpack.c.h.b16 %v4423
    %v5543 = vunpack.c.l.b16 %v4424
    %v5544 = vunpack.c.h.b16 %v4424
    %v5545 = vunpack.c.l.b16 %v4425
    %v5546 = vunpack.c.h.b16 %v4425
    %v5547 = vunpack.c.l.b16 %v4426
    %v5548 = vunpack.c.h.b16 %v4426
    %v5549 = vunpack.c.l.b16 %v4427
    %v5550 = vunpack.c.h.b16 %v4427
    %v5551 = vunpack.c.l.b16 %v4428
    %v5552 = vunpack.c.h.b16 %v4428
    %v5553 = vunpack.c.l.b16 %v4429
    %v5554 = vunpack.c.h.b16 %v4429
    %v5555 = vunpack.c.l.b16 %v4430
    %v5556 = vunpack.c.h.b16 %v4430
    %v5557 = vunpack.c.l.b16 %v4431
    %v5558 = vunpack.c.h.b16 %v4431
    %v5559 = vunpack.c.l.b16 %v4432
    %v5560 = vunpack.c.h.b16 %v4432
    %v5561 = vunpack.c.l.b16 %v4433
    %v5562 = vunpack.c.h.b16 %v4433
    %v5563 = vunpack.c.l.b16 %v4434
    %v5564 = vunpack.c.h.b16 %v4434
    %v5565 = vunpack.c.l.b16 %v4435
    %v5566 = vunpack.c.h.b16 %v4435
    %v5567 = vunpack.c.l.b16 %v4436
    %v5568 = vunpack.c.h.b16 %v4436
    %v5569 = vunpack.c.l.b16 %v4437
    %v5570 = vunpack.c.h.b16 %v4437
    %v5571 = vunpack.c.l.b16 %v4438
    %v5572 = vunpack.c.h.b16 %v4438
    %v5573 = vunpack.c.l.b16 %v4439
    %v5574 = vunpack.c.h.b16 %v4439
    %v5575 = vunpack.c.l.b16 %v4440
    %v5576 = vunpack.c.h.b16 %v4440
    %v5577 = vunpack.c.l.b16 %v4441
    %v5578 = vunpack.c.h.b16 %v4441
    %v5579 = vunpack.c.l.b16 %v4442
    %v5580 = vunpack.c.h.b16 %v4442
    %v5581 = vunpack.c.l.b16 %v4443
    %v5582 = vunpack.c.h.b16 %v4443
    %v5583 = vunpack.c.l.b16 %v4444
    %v5584 = vunpack.c.h.b16 %v4444
    %v5585 = vunpack.c.l.b16 %v4445
    %v5586 = vunpack.c.h.b16 %v4445
    %v5587 = vunpack.c.l.b16 %v4446
    %v5588 = vunpack.c.h.b16 %v4446
    %v5589 = vunpack.c.l.b16 %v4447
    %v5590 = vunpack.c.h.b16 %v4447
    %v5591 = vunpack.c.l.b16 %v4448
    %v5592 = vunpack.c.h.b16 %v4448
    %v5593 = vunpack.c.l.b16 %v4449
    %v5594 = vunpack.c.h.b16 %v4449
    %v5595 = vunpack.c.l.b16 %v4450
    %v5596 = vunpack.c.h.b16 %v4450
    %v5597 = vunpack.c.l.b16 %v4451
    %v5598 = vunpack.c.h.b16 %v4451
    %v5599 = vunpack.c.l.b16 %v4452
    %v5600 = vunpack.c.h.b16 %v4452
    %v5601 = vunpack.c.l.b16 %v4453
    %v5602 = vunpack.c.h.b16 %v4453
    %v5603 = vunpack.c.l.b16 %v4454
    %v5604 = vunpack.c.h.b16 %v4454
    %v5605 = vunpack.c.l.b16 %v4455
    %v5606 = vunpack.c.h.b16 %v4455
    %v5607 = vunpack.c.l.b16 %v4456
    %v5608 = vunpack.c.h.b16 %v4456
    %v5609 = vunpack.c.l.b16 %v4457
    %v5610 = vunpack.c.h.b16 %v4457
    %v5611 = vunpack.c.l.b16 %v4458
    %v5612 = vunpack.c.h.b16 %v4458
    %v5613 = vunpack.c.l.b16 %v4459
    %v5614 = vunpack.c.h.b16 %v4459
    %v5615 = vunpack.c.l.b16 %v4460
    %v5616 = vunpack.c.h.b16 %v4460
    %v5617 = vunpack.c.l.b16 %v4461
    %v5618 = vunpack.c.h.b16 %v4461
    %v5619 = vunpack.c.l.b16 %v4462
    %v5620 = vunpack.c.h.b16 %v4462
    %v5621 = vunpack.c.l.b16 %v4463
    %v5622 = vunpack.c.h.b16 %v4463
    %v5623 = vunpack.c.l.b16 %v4464
    %v5624 = vunpack.c.h.b16 %v4464
    %v5625 = vunpack.c.l.b16 %v4465
    %v5626 = vunpack.c.h.b16 %v4465
    %v5627 = vunpack.c.l.b16 %v4466
    %v5628 = vunpack.c.h.b16 %v4466
    %v5629 = vunpack.c.l.b16 %v4467
    %v5630 = vunpack.c.h.b16 %v4467
    %v5631 = vunpack.c.l.b16 %v4468
    %v5632 = vunpack.c.h.b16 %v4468
    %v5633 = vunpack.c.l.b16 %v4469
    %v5634 = vunpack.c.h.b16 %v4469
    %v5635 = vunpack.c.l.b16 %v4470
    %v5636 = vunpack.c.h.b16 %v4470
    %v5637 = vunpack.c.l.b16 %v4471
    %v5638 = vunpack.c.h.b16 %v4471
    %v5639 = vunpack.c.l.b16 %v4472
    %v5640 = vunpack.c.h.b16 %v4472
    %v5641 = vunpack.c.l.b16 %v4473
    %v5642 = vunpack.c.h.b16 %v4473
    %v5643 = vunpack.c.l.b16 %v4474
    %v5644 = vunpack.c.h.b16 %v4474
    %v5645 = vunpack.c.l.b16 %v4475
    %v5646 = vunpack.c.h.b16 %v4475
    %v5647 = vunpack.c.l.b16 %v4476
    %v5648 = vunpack.c.h.b16 %v4476
    %v5649 = vunpack.c.l.b16 %v4477
    %v5650 = vunpack.c.h.b16 %v4477
    %v5651 = vunpack.c.l.b16 %v4478
    %v5652 = vunpack.c.h.b16 %v4478
    %v5653 = vpack.c.b16 %v4889, %v4885
    %v5654 = vpack.c.b16 %v4890, %v4886
    %v5655 = vpack.c.b16 %v4891, %v4887
    %v5656 = vpack.c.b16 %v4892, %v4888
    %v5657 = vpack.c.b16 %v4897, %v4893
    %v5658 = vpack.c.b16 %v4898, %v4894
    %v5659 = vpack.c.b16 %v4899, %v4895
    %v5660 = vpack.c.b16 %v4900, %v4896
    %v5661 = vpack.c.b16 %v4905, %v4901
    %v5662 = vpack.c.b16 %v4906, %v4902
    %v5663 = vpack.c.b16 %v4907, %v4903
    %v5664 = vpack.c.b16 %v4908, %v4904
    %v5665 = vpack.c.b16 %v4913, %v4909
    %v5666 = vpack.c.b16 %v4914, %v4910
    %v5667 = vpack.c.b16 %v4915, %v4911
    %v5668 = vpack.c.b16 %v4916, %v4912
    %v5669 = vpack.c.b16 %v4921, %v4917
    %v5670 = vpack.c.b16 %v4922, %v4918
    %v5671 = vpack.c.b16 %v4923, %v4919
    %v5672 = vpack.c.b16 %v4924, %v4920
    %v5673 = vpack.c.b16 %v4929, %v4925
    %v5674 = vpack.c.b16 %v4930, %v4926
    %v5675 = vpack.c.b16 %v4931, %v4927
    %v5676 = vpack.c.b16 %v4932, %v4928
    %v5677 = vpack.c.b16 %v4937, %v4933
    %v5678 = vpack.c.b16 %v4938, %v4934
    %v5679 = vpack.c.b16 %v4939, %v4935
    %v5680 = vpack.c.b16 %v4940, %v4936
    %v5681 = vpack.c.b16 %v4945, %v4941
    %v5682 = vpack.c.b16 %v4946, %v4942
    %v5683 = vpack.c.b16 %v4947, %v4943
    %v5684 = vpack.c.b16 %v4948, %v4944
    %v5685 = vpack.c.b16 %v4953, %v4949
    %v5686 = vpack.c.b16 %v4954, %v4950
    %v5687 = vpack.c.b16 %v4955, %v4951
    %v5688 = vpack.c.b16 %v4956, %v4952
    %v5689 = vpack.c.b16 %v4961, %v4957
    %v5690 = vpack.c.b16 %v4962, %v4958
    %v5691 = vpack.c.b16 %v4963, %v4959
    %v5692 = vpack.c.b16 %v4964, %v4960
    %v5693 = vpack.c.b16 %v4969, %v4965
    %v5694 = vpack.c.b16 %v4970, %v4966
    %v5695 = vpack.c.b16 %v4971, %v4967
    %v5696 = vpack.c.b16 %v4972, %v4968
    %v5697 = vpack.c.b16 %v4977, %v4973
    %v5698 = vpack.c.b16 %v4978, %v4974
    %v5699 = vpack.c.b16 %v4979, %v4975
    %v5700 = vpack.c.b16 %v4980, %v4976
    %v5701 = vpack.c.b16 %v4985, %v4981
    %v5702 = vpack.c.b16 %v4986, %v4982
    %v5703 = vpack.c.b16 %v4987, %v4983
    %v5704 = vpack.c.b16 %v4988, %v4984
    %v5705 = vpack.c.b16 %v4993, %v4989
    %v5706 = vpack.c.b16 %v4994, %v4990
    %v5707 = vpack.c.b16 %v4995, %v4991
    %v5708 = vpack.c.b16 %v4996, %v4992
    %v5709 = vpack.c.b16 %v5001, %v4997
    %v5710 = vpack.c.b16 %v5002, %v4998
    %v5711 = vpack.c.b16 %v5003, %v4999
    %v5712 = vpack.c.b16 %v5004, %v5000
    %v5713 = vpack.c.b16 %v5009, %v5005
    %v5714 = vpack.c.b16 %v5010, %v5006
    %v5715 = vpack.c.b16 %v5011, %v5007
    %v5716 = vpack.c.b16 %v5012, %v5008
    %v5717 = vpack.c.b16 %v5017, %v5013
    %v5718 = vpack.c.b16 %v5018, %v5014
    %v5719 = vpack.c.b16 %v5019, %v5015
    %v5720 = vpack.c.b16 %v5020, %v5016
    %v5721 = vpack.c.b16 %v5025, %v5021
    %v5722 = vpack.c.b16 %v5026, %v5022
    %v5723 = vpack.c.b16 %v5027, %v5023
    %v5724 = vpack.c.b16 %v5028, %v5024
    %v5725 = vpack.c.b16 %v5033, %v5029
    %v5726 = vpack.c.b16 %v5034, %v5030
    %v5727 = vpack.c.b16 %v5035, %v5031
    %v5728 = vpack.c.b16 %v5036, %v5032
    %v5729 = vpack.c.b16 %v5041, %v5037
    %v5730 = vpack.c.b16 %v5042, %v5038
    %v5731 = vpack.c.b16 %v5043, %v5039
    %v5732 = vpack.c.b16 %v5044, %v5040
    %v5733 = vpack.c.b16 %v5049, %v5045
    %v5734 = vpack.c.b16 %v5050, %v5046
    %v5735 = vpack.c.b16 %v5051, %v5047
    %v5736 = vpack.c.b16 %v5052, %v5048
    %v5737 = vpack.c.b16 %v5057, %v5053
    %v5738 = vpack.c.b16 %v5058, %v5054
    %v5739 = vpack.c.b16 %v5059, %v5055
    %v5740 = vpack.c.b16 %v5060, %v5056
    %v5741 = vpack.c.b16 %v5065, %v5061
    %v5742 = vpack.c.b16 %v5066, %v5062
    %v5743 = vpack.c.b16 %v5067, %v5063
    %v5744 = vpack.c.b16 %v5068, %v5064
    %v5745 = vpack.c.b16 %v5073, %v5069
    %v5746 = vpack.c.b16 %v5074, %v5070
    %v5747 = vpack.c.b16 %v5075, %v5071
    %v5748 = vpack.c.b16 %v5076, %v5072
    %v5749 = vpack.c.b16 %v5081, %v5077
    %v5750 = vpack.c.b16 %v5082, %v5078
    %v5751 = vpack.c.b16 %v5083, %v5079
    %v5752 = vpack.c.b16 %v5084, %v5080
    %v5753 = vpack.c.b16 %v5089, %v5085
    %v5754 = vpack.c.b16 %v5090, %v5086
    %v5755 = vpack.c.b16 %v5091, %v5087
    %v5756 = vpack.c.b16 %v5092, %v5088
    %v5757 = vpack.c.b16 %v5097, %v5093
    %v5758 = vpack.c.b16 %v5098, %v5094
    %v5759 = vpack.c.b16 %v5099, %v5095
    %v5760 = vpack.c.b16 %v5100, %v5096
    %v5761 = vpack.c.b16 %v5105, %v5101
    %v5762 = vpack.c.b16 %v5106, %v5102
    %v5763 = vpack.c.b16 %v5107, %v5103
    %v5764 = vpack.c.b16 %v5108, %v5104
    %v5765 = vpack.c.b16 %v5113, %v5109
    %v5766 = vpack.c.b16 %v5114, %v5110
    %v5767 = vpack.c.b16 %v5115, %v5111
    %v5768 = vpack.c.b16 %v5116, %v5112
    %v5769 = vpack.c.b16 %v5121, %v5117
    %v5770 = vpack.c.b16 %v5122, %v5118
    %v5771 = vpack.c.b16 %v5123, %v5119
    %v5772 = vpack.c.b16 %v5124, %v5120
    %v5773 = vpack.c.b16 %v5129, %v5125
    %v5774 = vpack.c.b16 %v5130, %v5126
    %v5775 = vpack.c.b16 %v5131, %v5127
    %v5776 = vpack.c.b16 %v5132, %v5128
    %v5777 = vpack.c.b16 %v5137, %v5133
    %v5778 = vpack.c.b16 %v5138, %v5134
    %v5779 = vpack.c.b16 %v5139, %v5135
    %v5780 = vpack.c.b16 %v5140, %v5136
    %v5781 = vpack.c.b16 %v5145, %v5141
    %v5782 = vpack.c.b16 %v5146, %v5142
    %v5783 = vpack.c.b16 %v5147, %v5143
    %v5784 = vpack.c.b16 %v5148, %v5144
    %v5785 = vpack.c.b16 %v5153, %v5149
    %v5786 = vpack.c.b16 %v5154, %v5150
    %v5787 = vpack.c.b16 %v5155, %v5151
    %v5788 = vpack.c.b16 %v5156, %v5152
    %v5789 = vpack.c.b16 %v5161, %v5157
    %v5790 = vpack.c.b16 %v5162, %v5158
    %v5791 = vpack.c.b16 %v5163, %v5159
    %v5792 = vpack.c.b16 %v5164, %v5160
    %v5793 = vpack.c.b16 %v5169, %v5165
    %v5794 = vpack.c.b16 %v5170, %v5166
    %v5795 = vpack.c.b16 %v5171, %v5167
    %v5796 = vpack.c.b16 %v5172, %v5168
    %v5797 = vpack.c.b16 %v5177, %v5173
    %v5798 = vpack.c.b16 %v5178, %v5174
    %v5799 = vpack.c.b16 %v5179, %v5175
    %v5800 = vpack.c.b16 %v5180, %v5176
    %v5801 = vpack.c.b16 %v5185, %v5181
    %v5802 = vpack.c.b16 %v5186, %v5182
    %v5803 = vpack.c.b16 %v5187, %v5183
    %v5804 = vpack.c.b16 %v5188, %v5184
    %v5805 = vpack.c.b16 %v5193, %v5189
    %v5806 = vpack.c.b16 %v5194, %v5190
    %v5807 = vpack.c.b16 %v5195, %v5191
    %v5808 = vpack.c.b16 %v5196, %v5192
    %v5809 = vpack.c.b16 %v5201, %v5197
    %v5810 = vpack.c.b16 %v5202, %v5198
    %v5811 = vpack.c.b16 %v5203, %v5199
    %v5812 = vpack.c.b16 %v5204, %v5200
    %v5813 = vpack.c.b16 %v5209, %v5205
    %v5814 = vpack.c.b16 %v5210, %v5206
    %v5815 = vpack.c.b16 %v5211, %v5207
    %v5816 = vpack.c.b16 %v5212, %v5208
    %v5817 = vpack.c.b16 %v5217, %v5213
    %v5818 = vpack.c.b16 %v5218, %v5214
    %v5819 = vpack.c.b16 %v5219, %v5215
    %v5820 = vpack.c.b16 %v5220, %v5216
    %v5821 = vpack.c.b16 %v5225, %v5221
    %v5822 = vpack.c.b16 %v5226, %v5222
    %v5823 = vpack.c.b16 %v5227, %v5223
    %v5824 = vpack.c.b16 %v5228, %v5224
    %v5825 = vpack.c.b16 %v5233, %v5229
    %v5826 = vpack.c.b16 %v5234, %v5230
    %v5827 = vpack.c.b16 %v5235, %v5231
    %v5828 = vpack.c.b16 %v5236, %v5232
    %v5829 = vpack.c.b16 %v5241, %v5237
    %v5830 = vpack.c.b16 %v5242, %v5238
    %v5831 = vpack.c.b16 %v5243, %v5239
    %v5832 = vpack.c.b16 %v5244, %v5240
    %v5833 = vpack.c.b16 %v5249, %v5245
    %v5834 = vpack.c.b16 %v5250, %v5246
    %v5835 = vpack.c.b16 %v5251, %v5247
    %v5836 = vpack.c.b16 %v5252, %v5248
    %v5837 = vpack.c.b16 %v5257, %v5253
    %v5838 = vpack.c.b16 %v5258, %v5254
    %v5839 = vpack.c.b16 %v5259, %v5255
    %v5840 = vpack.c.b16 %v5260, %v5256
    %v5841 = vpack.c.b16 %v5265, %v5261
    %v5842 = vpack.c.b16 %v5266, %v5262
    %v5843 = vpack.c.b16 %v5267, %v5263
    %v5844 = vpack.c.b16 %v5268, %v5264
    %v5845 = vpack.c.b16 %v5273, %v5269
    %v5846 = vpack.c.b16 %v5274, %v5270
    %v5847 = vpack.c.b16 %v5275, %v5271
    %v5848 = vpack.c.b16 %v5276, %v5272
    %v5849 = vpack.c.b16 %v5281, %v5277
    %v5850 = vpack.c.b16 %v5282, %v5278
    %v5851 = vpack.c.b16 %v5283, %v5279
    %v5852 = vpack.c.b16 %v5284, %v5280
    %v5853 = vpack.c.b16 %v5289, %v5285
    %v5854 = vpack.c.b16 %v5290, %v5286
    %v5855 = vpack.c.b16 %v5291, %v5287
    %v5856 = vpack.c.b16 %v5292, %v5288
    %v5857 = vpack.c.b16 %v5297, %v5293
    %v5858 = vpack.c.b16 %v5298, %v5294
    %v5859 = vpack.c.b16 %v5299, %v5295
    %v5860 = vpack.c.b16 %v5300, %v5296
    %v5861 = vpack.c.b16 %v5305, %v5301
    %v5862 = vpack.c.b16 %v5306, %v5302
    %v5863 = vpack.c.b16 %v5307, %v5303
    %v5864 = vpack.c.b16 %v5308, %v5304
    %v5865 = vpack.c.b16 %v5313, %v5309
    %v5866 = vpack.c.b16 %v5314, %v5310
    %v5867 = vpack.c.b16 %v5315, %v5311
    %v5868 = vpack.c.b16 %v5316, %v5312
    %v5869 = vpack.c.b16 %v5321, %v5317
    %v5870 = vpack.c.b16 %v5322, %v5318
    %v5871 = vpack.c.b16 %v5323, %v5319
    %v5872 = vpack.c.b16 %v5324, %v5320
    %v5873 = vpack.c.b16 %v5329, %v5325
    %v5874 = vpack.c.b16 %v5330, %v5326
    %v5875 = vpack.c.b16 %v5331, %v5327
    %v5876 = vpack.c.b16 %v5332, %v5328
    %v5877 = vpack.c.b16 %v5337, %v5333
    %v5878 = vpack.c.b16 %v5338, %v5334
    %v5879 = vpack.c.b16 %v5339, %v5335
    %v5880 = vpack.c.b16 %v5340, %v5336
    %v5881 = vpack.c.b16 %v5345, %v5341
    %v5882 = vpack.c.b16 %v5346, %v5342
    %v5883 = vpack.c.b16 %v5347, %v5343
    %v5884 = vpack.c.b16 %v5348, %v5344
    %v5885 = vpack.c.b16 %v5353, %v5349
    %v5886 = vpack.c.b16 %v5354, %v5350
    %v5887 = vpack.c.b16 %v5355, %v5351
    %v5888 = vpack.c.b16 %v5356, %v5352
    %v5889 = vpack.c.b16 %v5361, %v5357
    %v5890 = vpack.c.b16 %v5362, %v5358
    %v5891 = vpack.c.b16 %v5363, %v5359
    %v5892 = vpack.c.b16 %v5364, %v5360
    %v5893 = vpack.c.b16 %v5369, %v5365
    %v5894 = vpack.c.b16 %v5370, %v5366
    %v5895 = vpack.c.b16 %v5371, %v5367
    %v5896 = vpack.c.b16 %v5372, %v5368
    %v5897 = vpack.c.b16 %v5377, %v5373
    %v5898 = vpack.c.b16 %v5378, %v5374
    %v5899 = vpack.c.b16 %v5379, %v5375
    %v5900 = vpack.c.b16 %v5380, %v5376
    %v5901 = vpack.c.b16 %v5385, %v5381
    %v5902 = vpack.c.b16 %v5386, %v5382
    %v5903 = vpack.c.b16 %v5387, %v5383
    %v5904 = vpack.c.b16 %v5388, %v5384
    %v5905 = vpack.c.b16 %v5393, %v5389
    %v5906 = vpack.c.b16 %v5394, %v5390
    %v5907 = vpack.c.b16 %v5395, %v5391
    %v5908 = vpack.c.b16 %v5396, %v5392
    %v5909 = vpack.c.b16 %v5401, %v5397
    %v5910 = vpack.c.b16 %v5402, %v5398
    %v5911 = vpack.c.b16 %v5403, %v5399
    %v5912 = vpack.c.b16 %v5404, %v5400
    %v5913 = vpack.c.b16 %v5409, %v5405
    %v5914 = vpack.c.b16 %v5410, %v5406
    %v5915 = vpack.c.b16 %v5411, %v5407
    %v5916 = vpack.c.b16 %v5412, %v5408
    %v5917 = vpack.c.b16 %v5417, %v5413
    %v5918 = vpack.c.b16 %v5418, %v5414
    %v5919 = vpack.c.b16 %v5419, %v5415
    %v5920 = vpack.c.b16 %v5420, %v5416
    %v5921 = vpack.c.b16 %v5425, %v5421
    %v5922 = vpack.c.b16 %v5426, %v5422
    %v5923 = vpack.c.b16 %v5427, %v5423
    %v5924 = vpack.c.b16 %v5428, %v5424
    %v5925 = vpack.c.b16 %v5433, %v5429
    %v5926 = vpack.c.b16 %v5434, %v5430
    %v5927 = vpack.c.b16 %v5435, %v5431
    %v5928 = vpack.c.b16 %v5436, %v5432
    %v5929 = vpack.c.b16 %v5441, %v5437
    %v5930 = vpack.c.b16 %v5442, %v5438
    %v5931 = vpack.c.b16 %v5443, %v5439
    %v5932 = vpack.c.b16 %v5444, %v5440
    %v5933 = vpack.c.b16 %v5449, %v5445
    %v5934 = vpack.c.b16 %v5450, %v5446
    %v5935 = vpack.c.b16 %v5451, %v5447
    %v5936 = vpack.c.b16 %v5452, %v5448
    %v5937 = vpack.c.b16 %v5457, %v5453
    %v5938 = vpack.c.b16 %v5458, %v5454
    %v5939 = vpack.c.b16 %v5459, %v5455
    %v5940 = vpack.c.b16 %v5460, %v5456
    %v5941 = vpack.c.b16 %v5465, %v5461
    %v5942 = vpack.c.b16 %v5466, %v5462
    %v5943 = vpack.c.b16 %v5467, %v5463
    %v5944 = vpack.c.b16 %v5468, %v5464
    %v5945 = vpack.c.b16 %v5473, %v5469
    %v5946 = vpack.c.b16 %v5474, %v5470
    %v5947 = vpack.c.b16 %v5475, %v5471
    %v5948 = vpack.c.b16 %v5476, %v5472
    %v5949 = vpack.c.b16 %v5481, %v5477
    %v5950 = vpack.c.b16 %v5482, %v5478
    %v5951 = vpack.c.b16 %v5483, %v5479
    %v5952 = vpack.c.b16 %v5484, %v5480
    %v5953 = vpack.c.b16 %v5489, %v5485
    %v5954 = vpack.c.b16 %v5490, %v5486
    %v5955 = vpack.c.b16 %v5491, %v5487
    %v5956 = vpack.c.b16 %v5492, %v5488
    %v5957 = vpack.c.b16 %v5497, %v5493
    %v5958 = vpack.c.b16 %v5498, %v5494
    %v5959 = vpack.c.b16 %v5499, %v5495
    %v5960 = vpack.c.b16 %v5500, %v5496
    %v5961 = vpack.c.b16 %v5505, %v5501
    %v5962 = vpack.c.b16 %v5506, %v5502
    %v5963 = vpack.c.b16 %v5507, %v5503
    %v5964 = vpack.c.b16 %v5508, %v5504
    %v5965 = vpack.c.b16 %v5513, %v5509
    %v5966 = vpack.c.b16 %v5514, %v5510
    %v5967 = vpack.c.b16 %v5515, %v5511
    %v5968 = vpack.c.b16 %v5516, %v5512
    %v5969 = vpack.c.b16 %v5521, %v5517
    %v5970 = vpack.c.b16 %v5522, %v5518
    %v5971 = vpack.c.b16 %v5523, %v5519
    %v5972 = vpack.c.b16 %v5524, %v5520
    %v5973 = vpack.c.b16 %v5529, %v5525
    %v5974 = vpack.c.b16 %v5530, %v5526
    %v5975 = vpack.c.b16 %v5531, %v5527
    %v5976 = vpack.c.b16 %v5532, %v5528
    %v5977 = vpack.c.b16 %v5537, %v5533
    %v5978 = vpack.c.b16 %v5538, %v5534
    %v5979 = vpack.c.b16 %v5539, %v5535
    %v5980 = vpack.c.b16 %v5540, %v5536
    %v5981 = vpack.c.b16 %v5545, %v5541
    %v5982 = vpack.c.b16 %v5546, %v5542
    %v5983 = vpack.c.b16 %v5547, %v5543
    %v5984 = vpack.c.b16 %v5548, %v5544
    %v5985 = vpack.c.b16 %v5553, %v5549
    %v5986 = vpack.c.b16 %v5554, %v5550
    %v5987 = vpack.c.b16 %v5555, %v5551
    %v5988 = vpack.c.b16 %v5556, %v5552
    %v5989 = vpack.c.b16 %v5561, %v5557
    %v5990 = vpack.c.b16 %v5562, %v5558
    %v5991 = vpack.c.b16 %v5563, %v5559
    %v5992 = vpack.c.b16 %v5564, %v5560
    %v5993 = vpack.c.b16 %v5569, %v5565
    %v5994 = vpack.c.b16 %v5570, %v5566
    %v5995 = vpack.c.b16 %v5571, %v5567
    %v5996 = vpack.c.b16 %v5572, %v5568
    %v5997 = vpack.c.b16 %v5577, %v5573
    %v5998 = vpack.c.b16 %v5578, %v5574
    %v5999 = vpack.c.b16 %v5579, %v5575
    %v6000 = vpack.c.b16 %v5580, %v5576
    %v6001 = vpack.c.b16 %v5585, %v5581
    %v6002 = vpack.c.b16 %v5586, %v5582
    %v6003 = vpack.c.b16 %v5587, %v5583
    %v6004 = vpack.c.b16 %v5588, %v5584
    %v6005 = vpack.c.b16 %v5593, %v5589
    %v6006 = vpack.c.b16 %v5594, %v5590
    %v6007 = vpack.c.b16 %v5595, %v5591
    %v6008 = vpack.c.b16 %v5596, %v5592
    %v6009 = vpack.c.b16 %v5601, %v5597
    %v6010 = vpack.c.b16 %v5602, %v5598
    %v6011 = vpack.c.b16 %v5603, %v5599
    %v6012 = vpack.c.b16 %v5604, %v5600
    %v6013 = vpack.c.b16 %v5609, %v5605
    %v6014 = vpack.c.b16 %v5610, %v5606
    %v6015 = vpack.c.b16 %v5611, %v5607
    %v6016 = vpack.c.b16 %v5612, %v5608
    %v6017 = vpack.c.b16 %v5617, %v5613
    %v6018 = vpack.c.b16 %v5618, %v5614
    %v6019 = vpack.c.b16 %v5619, %v5615
    %v6020 = vpack.c.b16 %v5620, %v5616
    %v6021 = vpack.c.b16 %v5625, %v5621
    %v6022 = vpack.c.b16 %v5626, %v5622
    %v6023 = vpack.c.b16 %v5627, %v5623
    %v6024 = vpack.c.b16 %v5628, %v5624
    %v6025 = vpack.c.b16 %v5633, %v5629
    %v6026 = vpack.c.b16 %v5634, %v5630
    %v6027 = vpack.c.b16 %v5635, %v5631
    %v6028 = vpack.c.b16 %v5636, %v5632
    %v6029 = vpack.c.b16 %v5641, %v5637
    %v6030 = vpack.c.b16 %v5642, %v5638
    %v6031 = vpack.c.b16 %v5643, %v5639
    %v6032 = vpack.c.b16 %v5644, %v5640
    %v6033 = vpack.c.b16 %v5649, %v5645
    %v6034 = vpack.c.b16 %v5650, %v5646
    %v6035 = vpack.c.b16 %v5651, %v5647
    %v6036 = vpack.c.b16 %v5652, %v5648
    %6421 = vmatprep.subr.bf16.mxu0 %v5654
    %6422 = vmatpush1.bf16.msra.mxu0 %v5653
    %6423 = vmatprep.subr.bf16.mxu0 %v5658
    %6424 = vmatpush1.bf16.msra.mxu0 %v5657
    %6425 = vmatprep.subr.bf16.mxu0 %v5662
    %6426 = vmatpush1.bf16.msra.mxu0 %v5661
    %6427 = vmatprep.subr.bf16.mxu0 %v5666
    %6428 = vmatpush1.bf16.msra.mxu0 %v5665
    %6429 = vmatprep.subr.bf16.mxu0 %v5670
    %6430 = vmatpush1.bf16.msra.mxu0 %v5669
    %6431 = vmatprep.subr.bf16.mxu0 %v5674
    %6432 = vmatpush1.bf16.msra.mxu0 %v5673
    %6433 = vmatprep.subr.bf16.mxu0 %v5678
    %6434 = vmatpush1.bf16.msra.mxu0 %v5677
    %6435 = vmatprep.subr.bf16.mxu0 %v5682
    %6436 = vmatpush1.bf16.msra.mxu0 %v5681
    %6437 = vmatprep.subr.bf16.mxu0 %v5686
    %6438 = vmatpush1.bf16.msra.mxu0 %v5685
    %6439 = vmatprep.subr.bf16.mxu0 %v5690
    %6440 = vmatpush1.bf16.msra.mxu0 %v5689
    %6441 = vmatprep.subr.bf16.mxu0 %v5694
    %6442 = vmatpush1.bf16.msra.mxu0 %v5693
    %6443 = vmatprep.subr.bf16.mxu0 %v5698
    %6444 = vmatpush1.bf16.msra.mxu0 %v5697
    %6445 = vmatprep.subr.bf16.mxu0 %v5702
    %6446 = vmatpush1.bf16.msra.mxu0 %v5701
    %6447 = vmatprep.subr.bf16.mxu0 %v5706
    %6448 = vmatpush1.bf16.msra.mxu0 %v5705
    %6449 = vmatprep.subr.bf16.mxu0 %v5710
    %6450 = vmatpush1.bf16.msra.mxu0 %v5709
    %6451 = vmatprep.subr.bf16.mxu0 %v5714
    %6452 = vmatpush1.bf16.msra.mxu0 %v5713
    %6453 = vmatprep.mubr.bf16.mxu0 %v4072
    %6454 = vmatmul.mubr.bf16.gmra.mrb[0].mxu0 %v4071
    %v6455 = vpop.f32.mrb[0].mxu0
    %v6456 = vadd.f32 %v4484, %v6455
    %v6457 = vpop.f32.mrb[0].mxu0
    %v6458 = vadd.f32 %v4488, %v6457
    %v6459 = vpop.f32.mrb[0].mxu0
    %v6460 = vadd.f32 %v4484, %v6459
    %v6461 = vpop.f32.mrb[0].mxu0
    %v6462 = vadd.f32 %v4488, %v6461
    %6463 = vmatprep.mubr.bf16.mxu0 %v4084
    %6464 = vmatmul.mubr.bf16.gmra.mrb[0].mxu0 %v4083
    %v6465 = vpop.f32.mrb[0].mxu0
    %v6466 = vadd.f32 %v4484, %v6465
    %v6467 = vpop.f32.mrb[0].mxu0
    %v6468 = vadd.f32 %v4488, %v6467
    %v6469 = vpop.f32.mrb[0].mxu0
    %v6470 = vadd.f32 %v4484, %v6469
    %v6471 = vpop.f32.mrb[0].mxu0
    %v6472 = vadd.f32 %v4488, %v6471
    %6473 = vdwg.mxu0
    %6474 = vmatprep.subr.bf16.mxu0 %v5718
    %6475 = vmatpush1.bf16.msra.mxu0 %v5717
    %6476 = vmatprep.subr.bf16.mxu0 %v5722
    %6477 = vmatpush1.bf16.msra.mxu0 %v5721
    %6478 = vmatprep.subr.bf16.mxu0 %v5726
    %6479 = vmatpush1.bf16.msra.mxu0 %v5725
    %6480 = vmatprep.subr.bf16.mxu0 %v5730
    %6481 = vmatpush1.bf16.msra.mxu0 %v5729
    %6482 = vmatprep.subr.bf16.mxu0 %v5734
    %6483 = vmatpush1.bf16.msra.mxu0 %v5733
    %6484 = vmatprep.subr.bf16.mxu0 %v5738
    %6485 = vmatpush1.bf16.msra.mxu0 %v5737
    %6486 = vmatprep.subr.bf16.mxu0 %v5742
    %6487 = vmatpush1.bf16.msra.mxu0 %v5741
    %6488 = vmatprep.subr.bf16.mxu0 %v5746
    %6489 = vmatpush1.bf16.msra.mxu0 %v5745
    %6490 = vmatprep.subr.bf16.mxu0 %v5750
    %6491 = vmatpush1.bf16.msra.mxu0 %v5749
    %6492 = vmatprep.subr.bf16.mxu0 %v5754
    %6493 = vmatpush1.bf16.msra.mxu0 %v5753
    %6494 = vmatprep.subr.bf16.mxu0 %v5758
    %6495 = vmatpush1.bf16.msra.mxu0 %v5757
    %6496 = vmatprep.subr.bf16.mxu0 %v5762
    %6497 = vmatpush1.bf16.msra.mxu0 %v5761
    %6498 = vmatprep.subr.bf16.mxu0 %v5766
    %6499 = vmatpush1.bf16.msra.mxu0 %v5765
    %6500 = vmatprep.subr.bf16.mxu0 %v5770
    %6501 = vmatpush1.bf16.msra.mxu0 %v5769
    %6502 = vmatprep.subr.bf16.mxu0 %v5774
    %6503 = vmatpush1.bf16.msra.mxu0 %v5773
    %6504 = vmatprep.subr.bf16.mxu0 %v5778
    %6505 = vmatpush1.bf16.msra.mxu0 %v5777
    %6506 = vmatprep.mubr.bf16.mxu0 %v4074
    %6507 = vmatmul.mubr.bf16.gmra.mrb[0].mxu0 %v4073
    %v6508 = vpop.f32.mrb[0].mxu0
    %v6509 = vadd.f32 %v6456, %v6508
    %v6510 = vpop.f32.mrb[0].mxu0
    %v6511 = vadd.f32 %v6458, %v6510
    %v6512 = vpop.f32.mrb[0].mxu0
    %v6513 = vadd.f32 %v6460, %v6512
    %v6514 = vpop.f32.mrb[0].mxu0
    %v6515 = vadd.f32 %v6462, %v6514
    %6516 = vmatprep.mubr.bf16.mxu0 %v4086
    %6517 = vmatmul.mubr.bf16.gmra.mrb[0].mxu0 %v4085
    %v6518 = vpop.f32.mrb[0].mxu0
    %v6519 = vadd.f32 %v6466, %v6518
    %v6520 = vpop.f32.mrb[0].mxu0
    %v6521 = vadd.f32 %v6468, %v6520
    %v6522 = vpop.f32.mrb[0].mxu0
    %v6523 = vadd.f32 %v6470, %v6522
    %v6524 = vpop.f32.mrb[0].mxu0
    %v6525 = vadd.f32 %v6472, %v6524
    %6526 = vdwg.mxu0
    %6527 = vmatprep.subr.bf16.mxu0 %v5782
    %6528 = vmatpush1.bf16.msra.mxu0 %v5781
    %6529 = vmatprep.subr.bf16.mxu0 %v5786
    %6530 = vmatpush1.bf16.msra.mxu0 %v5785
    %6531 = vmatprep.subr.bf16.mxu0 %v5790
    %6532 = vmatpush1.bf16.msra.mxu0 %v5789
    %6533 = vmatprep.subr.bf16.mxu0 %v5794
    %6534 = vmatpush1.bf16.msra.mxu0 %v5793
    %6535 = vmatprep.subr.bf16.mxu0 %v5798
    %6536 = vmatpush1.bf16.msra.mxu0 %v5797
    %6537 = vmatprep.subr.bf16.mxu0 %v5802
    %6538 = vmatpush1.bf16.msra.mxu0 %v5801
    %6539 = vmatprep.subr.bf16.mxu0 %v5806
    %6540 = vmatpush1.bf16.msra.mxu0 %v5805
    %6541 = vmatprep.subr.bf16.mxu0 %v5810
    %6542 = vmatpush1.bf16.msra.mxu0 %v5809
    %6543 = vmatprep.subr.bf16.mxu0 %v5814
    %6544 = vmatpush1.bf16.msra.mxu0 %v5813
    %6545 = vmatprep.subr.bf16.mxu0 %v5818
    %6546 = vmatpush1.bf16.msra.mxu0 %v5817
    %6547 = vmatprep.subr.bf16.mxu0 %v5822
    %6548 = vmatpush1.bf16.msra.mxu0 %v5821
    %6549 = vmatprep.subr.bf16.mxu0 %v5826
    %6550 = vmatpush1.bf16.msra.mxu0 %v5825
    %6551 = vmatprep.subr.bf16.mxu0 %v5830
    %6552 = vmatpush1.bf16.msra.mxu0 %v5829
    %6553 = vmatprep.subr.bf16.mxu0 %v5834
    %6554 = vmatpush1.bf16.msra.mxu0 %v5833
    %6555 = vmatprep.subr.bf16.mxu0 %v5838
    %6556 = vmatpush1.bf16.msra.mxu0 %v5837
    %6557 = vmatprep.subr.bf16.mxu0 %v5842
    %6558 = vmatpush1.bf16.msra.mxu0 %v5841
    %6559 = vmatprep.mubr.bf16.mxu0 %v4076
    %6560 = vmatmul.mubr.bf16.gmra.mrb[0].mxu0 %v4075
    %v6561 = vpop.f32.mrb[0].mxu0
    %v6562 = vadd.f32 %v6509, %v6561
    %v6563 = vpop.f32.mrb[0].mxu0
    %v6564 = vadd.f32 %v6511, %v6563
    %v6565 = vpop.f32.mrb[0].mxu0
    %v6566 = vadd.f32 %v6513, %v6565
    %v6567 = vpop.f32.mrb[0].mxu0
    %v6568 = vadd.f32 %v6515, %v6567
    %6569 = vmatprep.mubr.bf16.mxu0 %v4088
    %6570 = vmatmul.mubr.bf16.gmra.mrb[0].mxu0 %v4087
    %v6571 = vpop.f32.mrb[0].mxu0
    %v6572 = vadd.f32 %v6519, %v6571
    %v6573 = vpop.f32.mrb[0].mxu0
    %v6574 = vadd.f32 %v6521, %v6573
    %v6575 = vpop.f32.mrb[0].mxu0
    %v6576 = vadd.f32 %v6523, %v6575
    %v6577 = vpop.f32.mrb[0].mxu0
    %v6578 = vadd.f32 %v6525, %v6577
    %6579 = vdwg.mxu0
    %6580 = vmatprep.subr.bf16.mxu0 %v5846
    %6581 = vmatpush1.bf16.msra.mxu0 %v5845
    %6582 = vmatprep.subr.bf16.mxu0 %v5850
    %6583 = vmatpush1.bf16.msra.mxu0 %v5849
    %6584 = vmatprep.subr.bf16.mxu0 %v5854
    %6585 = vmatpush1.bf16.msra.mxu0 %v5853
    %6586 = vmatprep.subr.bf16.mxu0 %v5858
    %6587 = vmatpush1.bf16.msra.mxu0 %v5857
    %6588 = vmatprep.subr.bf16.mxu0 %v5862
    %6589 = vmatpush1.bf16.msra.mxu0 %v5861
    %6590 = vmatprep.subr.bf16.mxu0 %v5866
    %6591 = vmatpush1.bf16.msra.mxu0 %v5865
    %6592 = vmatprep.subr.bf16.mxu0 %v5870
    %6593 = vmatpush1.bf16.msra.mxu0 %v5869
    %6594 = vmatprep.subr.bf16.mxu0 %v5874
    %6595 = vmatpush1.bf16.msra.mxu0 %v5873
    %6596 = vmatprep.subr.bf16.mxu0 %v5878
    %6597 = vmatpush1.bf16.msra.mxu0 %v5877
    %6598 = vmatprep.subr.bf16.mxu0 %v5882
    %6599 = vmatpush1.bf16.msra.mxu0 %v5881
    %6600 = vmatprep.subr.bf16.mxu0 %v5886
    %6601 = vmatpush1.bf16.msra.mxu0 %v5885
    %6602 = vmatprep.subr.bf16.mxu0 %v5890
    %6603 = vmatpush1.bf16.msra.mxu0 %v5889
    %6604 = vmatprep.subr.bf16.mxu0 %v5894
    %6605 = vmatpush1.bf16.msra.mxu0 %v5893
    %6606 = vmatprep.subr.bf16.mxu0 %v5898
    %6607 = vmatpush1.bf16.msra.mxu0 %v5897
    %6608 = vmatprep.subr.bf16.mxu0 %v5902
    %6609 = vmatpush1.bf16.msra.mxu0 %v5901
    %6610 = vmatprep.subr.bf16.mxu0 %v5906
    %6611 = vmatpush1.bf16.msra.mxu0 %v5905
    %6612 = vmatprep.mubr.bf16.mxu0 %v4078
    %6613 = vmatmul.mubr.bf16.gmra.mrb[0].mxu0 %v4077
    %v6614 = vpop.f32.mrb[0].mxu0
    %v6615 = vadd.f32 %v6562, %v6614
    %v6616 = vpop.f32.mrb[0].mxu0
    %v6617 = vadd.f32 %v6564, %v6616
    %v6618 = vpop.f32.mrb[0].mxu0
    %v6619 = vadd.f32 %v6566, %v6618
    %v6620 = vpop.f32.mrb[0].mxu0
    %v6621 = vadd.f32 %v6568, %v6620
    %6622 = vmatprep.mubr.bf16.mxu0 %v4090
    %6623 = vmatmul.mubr.bf16.gmra.mrb[0].mxu0 %v4089
    %v6624 = vpop.f32.mrb[0].mxu0
    %v6625 = vadd.f32 %v6572, %v6624
    %v6626 = vpop.f32.mrb[0].mxu0
    %v6627 = vadd.f32 %v6574, %v6626
    %v6628 = vpop.f32.mrb[0].mxu0
    %v6629 = vadd.f32 %v6576, %v6628
    %v6630 = vpop.f32.mrb[0].mxu0
    %v6631 = vadd.f32 %v6578, %v6630
    %6632 = vdwg.mxu0
    %6633 = vmatprep.subr.bf16.mxu0 %v5910
    %6634 = vmatpush1.bf16.msra.mxu0 %v5909
    %6635 = vmatprep.subr.bf16.mxu0 %v5914
    %6636 = vmatpush1.bf16.msra.mxu0 %v5913
    %6637 = vmatprep.subr.bf16.mxu0 %v5918
    %6638 = vmatpush1.bf16.msra.mxu0 %v5917
    %6639 = vmatprep.subr.bf16.mxu0 %v5922
    %6640 = vmatpush1.bf16.msra.mxu0 %v5921
    %6641 = vmatprep.subr.bf16.mxu0 %v5926
    %6642 = vmatpush1.bf16.msra.mxu0 %v5925
    %6643 = vmatprep.subr.bf16.mxu0 %v5930
    %6644 = vmatpush1.bf16.msra.mxu0 %v5929
    %6645 = vmatprep.subr.bf16.mxu0 %v5934
    %6646 = vmatpush1.bf16.msra.mxu0 %v5933
    %6647 = vmatprep.subr.bf16.mxu0 %v5938
    %6648 = vmatpush1.bf16.msra.mxu0 %v5937
    %6649 = vmatprep.subr.bf16.mxu0 %v5942
    %6650 = vmatpush1.bf16.msra.mxu0 %v5941
    %6651 = vmatprep.subr.bf16.mxu0 %v5946
    %6652 = vmatpush1.bf16.msra.mxu0 %v5945
    %6653 = vmatprep.subr.bf16.mxu0 %v5950
    %6654 = vmatpush1.bf16.msra.mxu0 %v5949
    %6655 = vmatprep.subr.bf16.mxu0 %v5954
    %6656 = vmatpush1.bf16.msra.mxu0 %v5953
    %6657 = vmatprep.subr.bf16.mxu0 %v5958
    %6658 = vmatpush1.bf16.msra.mxu0 %v5957
    %6659 = vmatprep.subr.bf16.mxu0 %v5962
    %6660 = vmatpush1.bf16.msra.mxu0 %v5961
    %6661 = vmatprep.subr.bf16.mxu0 %v5966
    %6662 = vmatpush1.bf16.msra.mxu0 %v5965
    %6663 = vmatprep.subr.bf16.mxu0 %v5970
    %6664 = vmatpush1.bf16.msra.mxu0 %v5969
    %6665 = vmatprep.mubr.bf16.mxu0 %v4080
    %6666 = vmatmul.mubr.bf16.gmra.mrb[0].mxu0 %v4079
    %v6667 = vpop.f32.mrb[0].mxu0
    %v6668 = vadd.f32 %v6615, %v6667
    %v6669 = vpop.f32.mrb[0].mxu0
    %v6670 = vadd.f32 %v6617, %v6669
    %v6671 = vpop.f32.mrb[0].mxu0
    %v6672 = vadd.f32 %v6619, %v6671
    %v6673 = vpop.f32.mrb[0].mxu0
    %v6674 = vadd.f32 %v6621, %v6673
    %6675 = vmatprep.mubr.bf16.mxu0 %v4092
    %6676 = vmatmul.mubr.bf16.gmra.mrb[0].mxu0 %v4091
    %v6677 = vpop.f32.mrb[0].mxu0
    %v6678 = vadd.f32 %v6625, %v6677
    %v6679 = vpop.f32.mrb[0].mxu0
    %v6680 = vadd.f32 %v6627, %v6679
    %v6681 = vpop.f32.mrb[0].mxu0
    %v6682 = vadd.f32 %v6629, %v6681
    %v6683 = vpop.f32.mrb[0].mxu0
    %v6684 = vadd.f32 %v6631, %v6683
    %6685 = vdwg.mxu0
    %6686 = vmatprep.subr.bf16.mxu0 %v5974
    %6687 = vmatpush1.bf16.msra.mxu0 %v5973
    %6688 = vmatprep.subr.bf16.mxu0 %v5978
    %6689 = vmatpush1.bf16.msra.mxu0 %v5977
    %6690 = vmatprep.subr.bf16.mxu0 %v5982
    %6691 = vmatpush1.bf16.msra.mxu0 %v5981
    %6692 = vmatprep.subr.bf16.mxu0 %v5986
    %6693 = vmatpush1.bf16.msra.mxu0 %v5985
    %6694 = vmatprep.subr.bf16.mxu0 %v5990
    %6695 = vmatpush1.bf16.msra.mxu0 %v5989
    %6696 = vmatprep.subr.bf16.mxu0 %v5994
    %6697 = vmatpush1.bf16.msra.mxu0 %v5993
    %6698 = vmatprep.subr.bf16.mxu0 %v5998
    %6699 = vmatpush1.bf16.msra.mxu0 %v5997
    %6700 = vmatprep.subr.bf16.mxu0 %v6002
    %6701 = vmatpush1.bf16.msra.mxu0 %v6001
    %6702 = vmatprep.subr.bf16.mxu0 %v6006
    %6703 = vmatpush1.bf16.msra.mxu0 %v6005
    %6704 = vmatprep.subr.bf16.mxu0 %v6010
    %6705 = vmatpush1.bf16.msra.mxu0 %v6009
    %6706 = vmatprep.subr.bf16.mxu0 %v6014
    %6707 = vmatpush1.bf16.msra.mxu0 %v6013
    %6708 = vmatprep.subr.bf16.mxu0 %v6018
    %6709 = vmatpush1.bf16.msra.mxu0 %v6017
    %6710 = vmatprep.subr.bf16.mxu0 %v6022
    %6711 = vmatpush1.bf16.msra.mxu0 %v6021
    %6712 = vmatprep.subr.bf16.mxu0 %v6026
    %6713 = vmatpush1.bf16.msra.mxu0 %v6025
    %6714 = vmatprep.subr.bf16.mxu0 %v6030
    %6715 = vmatpush1.bf16.msra.mxu0 %v6029
    %6716 = vmatprep.subr.bf16.mxu0 %v6034
    %6717 = vmatpush1.bf16.msra.mxu0 %v6033
    %6718 = vmatprep.mubr.bf16.mxu0 %v4082
    %6719 = vmatmul.mubr.bf16.gmra.mrb[0].mxu0 %v4081
    %v6720 = vpop.f32.mrb[0].mxu0
    %v6721 = vadd.f32 %v6668, %v6720
    %v6722 = vpop.f32.mrb[0].mxu0
    %v6723 = vadd.f32 %v6670, %v6722
    %v6724 = vpop.f32.mrb[0].mxu0
    %v6725 = vadd.f32 %v6672, %v6724
    %v6726 = vpop.f32.mrb[0].mxu0
    %v6727 = vadd.f32 %v6674, %v6726
    %6728 = vmatprep.mubr.bf16.mxu0 %v4094
    %6729 = vmatmul.mubr.bf16.gmra.mrb[0].mxu0 %v4093
    %v6730 = vpop.f32.mrb[0].mxu0
    %v6731 = vadd.f32 %v6678, %v6730
    %v6732 = vpop.f32.mrb[0].mxu0
    %v6733 = vadd.f32 %v6680, %v6732
    %v6734 = vpop.f32.mrb[0].mxu0
    %v6735 = vadd.f32 %v6682, %v6734
    %v6736 = vpop.f32.mrb[0].mxu0
    %v6737 = vadd.f32 %v6684, %v6736
    %6738 = vdwg.mxu0
    %6739 = vmatprep.subr.bf16.mxu0 %v5656
    %6740 = vmatpush1.bf16.msra.mxu0 %v5655
    %6741 = vmatprep.subr.bf16.mxu0 %v5660
    %6742 = vmatpush1.bf16.msra.mxu0 %v5659
    %6743 = vmatprep.subr.bf16.mxu0 %v5664
    %6744 = vmatpush1.bf16.msra.mxu0 %v5663
    %6745 = vmatprep.subr.bf16.mxu0 %v5668
    %6746 = vmatpush1.bf16.msra.mxu0 %v5667
    %6747 = vmatprep.subr.bf16.mxu0 %v5672
    %6748 = vmatpush1.bf16.msra.mxu0 %v5671
    %6749 = vmatprep.subr.bf16.mxu0 %v5676
    %6750 = vmatpush1.bf16.msra.mxu0 %v5675
    %6751 = vmatprep.subr.bf16.mxu0 %v5680
    %6752 = vmatpush1.bf16.msra.mxu0 %v5679
    %6753 = vmatprep.subr.bf16.mxu0 %v5684
    %6754 = vmatpush1.bf16.msra.mxu0 %v5683
    %6755 = vmatprep.subr.bf16.mxu0 %v5688
    %6756 = vmatpush1.bf16.msra.mxu0 %v5687
    %6757 = vmatprep.subr.bf16.mxu0 %v5692
    %6758 = vmatpush1.bf16.msra.mxu0 %v5691
    %6759 = vmatprep.subr.bf16.mxu0 %v5696
    %6760 = vmatpush1.bf16.msra.mxu0 %v5695
    %6761 = vmatprep.subr.bf16.mxu0 %v5700
    %6762 = vmatpush1.bf16.msra.mxu0 %v5699
    %6763 = vmatprep.subr.bf16.mxu0 %v5704
    %6764 = vmatpush1.bf16.msra.mxu0 %v5703
    %6765 = vmatprep.subr.bf16.mxu0 %v5708
    %6766 = vmatpush1.bf16.msra.mxu0 %v5707
    %6767 = vmatprep.subr.bf16.mxu0 %v5712
    %6768 = vmatpush1.bf16.msra.mxu0 %v5711
    %6769 = vmatprep.subr.bf16.mxu0 %v5716
    %6770 = vmatpush1.bf16.msra.mxu0 %v5715
    %6771 = vmatprep.mubr.bf16.mxu0 %v4072
    %6772 = vmatmul.mubr.bf16.gmra.mrb[0].mxu0 %v4071
    %v6773 = vpop.f32.mrb[0].mxu0
    %v6774 = vadd.f32 %v4492, %v6773
    %v6775 = vpop.f32.mrb[0].mxu0
    %v6776 = vadd.f32 %v4496, %v6775
    %v6777 = vpop.f32.mrb[0].mxu0
    %v6778 = vadd.f32 %v4492, %v6777
    %v6779 = vpop.f32.mrb[0].mxu0
    %v6780 = vadd.f32 %v4496, %v6779
    %6781 = vmatprep.mubr.bf16.mxu0 %v4084
    %6782 = vmatmul.mubr.bf16.gmra.mrb[0].mxu0 %v4083
    %v6783 = vpop.f32.mrb[0].mxu0
    %v6784 = vadd.f32 %v4492, %v6783
    %v6785 = vpop.f32.mrb[0].mxu0
    %v6786 = vadd.f32 %v4496, %v6785
    %v6787 = vpop.f32.mrb[0].mxu0
    %v6788 = vadd.f32 %v4492, %v6787
    %v6789 = vpop.f32.mrb[0].mxu0
    %v6790 = vadd.f32 %v4496, %v6789
    %6791 = vdwg.mxu0
    %6792 = vmatprep.subr.bf16.mxu0 %v5720
    %6793 = vmatpush1.bf16.msra.mxu0 %v5719
    %6794 = vmatprep.subr.bf16.mxu0 %v5724
    %6795 = vmatpush1.bf16.msra.mxu0 %v5723
    %6796 = vmatprep.subr.bf16.mxu0 %v5728
    %6797 = vmatpush1.bf16.msra.mxu0 %v5727
    %6798 = vmatprep.subr.bf16.mxu0 %v5732
    %6799 = vmatpush1.bf16.msra.mxu0 %v5731
    %6800 = vmatprep.subr.bf16.mxu0 %v5736
    %6801 = vmatpush1.bf16.msra.mxu0 %v5735
    %6802 = vmatprep.subr.bf16.mxu0 %v5740
    %6803 = vmatpush1.bf16.msra.mxu0 %v5739
    %6804 = vmatprep.subr.bf16.mxu0 %v5744
    %6805 = vmatpush1.bf16.msra.mxu0 %v5743
    %6806 = vmatprep.subr.bf16.mxu0 %v5748
    %6807 = vmatpush1.bf16.msra.mxu0 %v5747
    %6808 = vmatprep.subr.bf16.mxu0 %v5752
    %6809 = vmatpush1.bf16.msra.mxu0 %v5751
    %6810 = vmatprep.subr.bf16.mxu0 %v5756
    %6811 = vmatpush1.bf16.msra.mxu0 %v5755
    %6812 = vmatprep.subr.bf16.mxu0 %v5760
    %6813 = vmatpush1.bf16.msra.mxu0 %v5759
    %6814 = vmatprep.subr.bf16.mxu0 %v5764
    %6815 = vmatpush1.bf16.msra.mxu0 %v5763
    %6816 = vmatprep.subr.bf16.mxu0 %v5768
    %6817 = vmatpush1.bf16.msra.mxu0 %v5767
    %6818 = vmatprep.subr.bf16.mxu0 %v5772
    %6819 = vmatpush1.bf16.msra.mxu0 %v5771
    %6820 = vmatprep.subr.bf16.mxu0 %v5776
    %6821 = vmatpush1.bf16.msra.mxu0 %v5775
    %6822 = vmatprep.subr.bf16.mxu0 %v5780
    %6823 = vmatpush1.bf16.msra.mxu0 %v5779
    %6824 = vmatprep.mubr.bf16.mxu0 %v4074
    %6825 = vmatmul.mubr.bf16.gmra.mrb[0].mxu0 %v4073
    %v6826 = vpop.f32.mrb[0].mxu0
    %v6827 = vadd.f32 %v6774, %v6826
    %v6828 = vpop.f32.mrb[0].mxu0
    %v6829 = vadd.f32 %v6776, %v6828
    %v6830 = vpop.f32.mrb[0].mxu0
    %v6831 = vadd.f32 %v6778, %v6830
    %v6832 = vpop.f32.mrb[0].mxu0
    %v6833 = vadd.f32 %v6780, %v6832
    %6834 = vmatprep.mubr.bf16.mxu0 %v4086
    %6835 = vmatmul.mubr.bf16.gmra.mrb[0].mxu0 %v4085
    %v6836 = vpop.f32.mrb[0].mxu0
    %v6837 = vadd.f32 %v6784, %v6836
    %v6838 = vpop.f32.mrb[0].mxu0
    %v6839 = vadd.f32 %v6786, %v6838
    %v6840 = vpop.f32.mrb[0].mxu0
    %v6841 = vadd.f32 %v6788, %v6840
    %v6842 = vpop.f32.mrb[0].mxu0
    %v6843 = vadd.f32 %v6790, %v6842
    %6844 = vdwg.mxu0
    %6845 = vmatprep.subr.bf16.mxu0 %v5784
    %6846 = vmatpush1.bf16.msra.mxu0 %v5783
    %6847 = vmatprep.subr.bf16.mxu0 %v5788
    %6848 = vmatpush1.bf16.msra.mxu0 %v5787
    %6849 = vmatprep.subr.bf16.mxu0 %v5792
    %6850 = vmatpush1.bf16.msra.mxu0 %v5791
    %6851 = vmatprep.subr.bf16.mxu0 %v5796
    %6852 = vmatpush1.bf16.msra.mxu0 %v5795
    %6853 = vmatprep.subr.bf16.mxu0 %v5800
    %6854 = vmatpush1.bf16.msra.mxu0 %v5799
    %6855 = vmatprep.subr.bf16.mxu0 %v5804
    %6856 = vmatpush1.bf16.msra.mxu0 %v5803
    %6857 = vmatprep.subr.bf16.mxu0 %v5808
    %6858 = vmatpush1.bf16.msra.mxu0 %v5807
    %6859 = vmatprep.subr.bf16.mxu0 %v5812
    %6860 = vmatpush1.bf16.msra.mxu0 %v5811
    %6861 = vmatprep.subr.bf16.mxu0 %v5816
    %6862 = vmatpush1.bf16.msra.mxu0 %v5815
    %6863 = vmatprep.subr.bf16.mxu0 %v5820
    %6864 = vmatpush1.bf16.msra.mxu0 %v5819
    %6865 = vmatprep.subr.bf16.mxu0 %v5824
    %6866 = vmatpush1.bf16.msra.mxu0 %v5823
    %6867 = vmatprep.subr.bf16.mxu0 %v5828
    %6868 = vmatpush1.bf16.msra.mxu0 %v5827
    %6869 = vmatprep.subr.bf16.mxu0 %v5832
    %6870 = vmatpush1.bf16.msra.mxu0 %v5831
    %6871 = vmatprep.subr.bf16.mxu0 %v5836
    %6872 = vmatpush1.bf16.msra.mxu0 %v5835
    %6873 = vmatprep.subr.bf16.mxu0 %v5840
    %6874 = vmatpush1.bf16.msra.mxu0 %v5839
    %6875 = vmatprep.subr.bf16.mxu0 %v5844
    %6876 = vmatpush1.bf16.msra.mxu0 %v5843
    %6877 = vmatprep.mubr.bf16.mxu0 %v4076
    %6878 = vmatmul.mubr.bf16.gmra.mrb[0].mxu0 %v4075
    %v6879 = vpop.f32.mrb[0].mxu0
    %v6880 = vadd.f32 %v6827, %v6879
    %v6881 = vpop.f32.mrb[0].mxu0
    %v6882 = vadd.f32 %v6829, %v6881
    %v6883 = vpop.f32.mrb[0].mxu0
    %v6884 = vadd.f32 %v6831, %v6883
    %v6885 = vpop.f32.mrb[0].mxu0
    %v6886 = vadd.f32 %v6833, %v6885
    %6887 = vmatprep.mubr.bf16.mxu0 %v4088
    %6888 = vmatmul.mubr.bf16.gmra.mrb[0].mxu0 %v4087
    %v6889 = vpop.f32.mrb[0].mxu0
    %v6890 = vadd.f32 %v6837, %v6889
    %v6891 = vpop.f32.mrb[0].mxu0
    %v6892 = vadd.f32 %v6839, %v6891
    %v6893 = vpop.f32.mrb[0].mxu0
    %v6894 = vadd.f32 %v6841, %v6893
    %v6895 = vpop.f32.mrb[0].mxu0
    %v6896 = vadd.f32 %v6843, %v6895
    %6897 = vdwg.mxu0
    %6898 = vmatprep.subr.bf16.mxu0 %v5848
    %6899 = vmatpush1.bf16.msra.mxu0 %v5847
    %6900 = vmatprep.subr.bf16.mxu0 %v5852
    %6901 = vmatpush1.bf16.msra.mxu0 %v5851
    %6902 = vmatprep.subr.bf16.mxu0 %v5856
    %6903 = vmatpush1.bf16.msra.mxu0 %v5855
    %6904 = vmatprep.subr.bf16.mxu0 %v5860
    %6905 = vmatpush1.bf16.msra.mxu0 %v5859
    %6906 = vmatprep.subr.bf16.mxu0 %v5864
    %6907 = vmatpush1.bf16.msra.mxu0 %v5863
    %6908 = vmatprep.subr.bf16.mxu0 %v5868
    %6909 = vmatpush1.bf16.msra.mxu0 %v5867
    %6910 = vmatprep.subr.bf16.mxu0 %v5872
    %6911 = vmatpush1.bf16.msra.mxu0 %v5871
    %6912 = vmatprep.subr.bf16.mxu0 %v5876
    %6913 = vmatpush1.bf16.msra.mxu0 %v5875
    %6914 = vmatprep.subr.bf16.mxu0 %v5880
    %6915 = vmatpush1.bf16.msra.mxu0 %v5879
    %6916 = vmatprep.subr.bf16.mxu0 %v5884
    %6917 = vmatpush1.bf16.msra.mxu0 %v5883
    %6918 = vmatprep.subr.bf16.mxu0 %v5888
    %6919 = vmatpush1.bf16.msra.mxu0 %v5887
    %6920 = vmatprep.subr.bf16.mxu0 %v5892
    %6921 = vmatpush1.bf16.msra.mxu0 %v5891
    %6922 = vmatprep.subr.bf16.mxu0 %v5896
    %6923 = vmatpush1.bf16.msra.mxu0 %v5895
    %6924 = vmatprep.subr.bf16.mxu0 %v5900
    %6925 = vmatpush1.bf16.msra.mxu0 %v5899
    %6926 = vmatprep.subr.bf16.mxu0 %v5904
    %6927 = vmatpush1.bf16.msra.mxu0 %v5903
    %6928 = vmatprep.subr.bf16.mxu0 %v5908
    %6929 = vmatpush1.bf16.msra.mxu0 %v5907
    %6930 = vmatprep.mubr.bf16.mxu0 %v4078
    %6931 = vmatmul.mubr.bf16.gmra.mrb[0].mxu0 %v4077
    %v6932 = vpop.f32.mrb[0].mxu0
    %v6933 = vadd.f32 %v6880, %v6932
    %v6934 = vpop.f32.mrb[0].mxu0
    %v6935 = vadd.f32 %v6882, %v6934
    %v6936 = vpop.f32.mrb[0].mxu0
    %v6937 = vadd.f32 %v6884, %v6936
    %v6938 = vpop.f32.mrb[0].mxu0
    %v6939 = vadd.f32 %v6886, %v6938
    %6940 = vmatprep.mubr.bf16.mxu0 %v4090
    %6941 = vmatmul.mubr.bf16.gmra.mrb[0].mxu0 %v4089
    %v6942 = vpop.f32.mrb[0].mxu0
    %v6943 = vadd.f32 %v6890, %v6942
    %v6944 = vpop.f32.mrb[0].mxu0
    %v6945 = vadd.f32 %v6892, %v6944
    %v6946 = vpop.f32.mrb[0].mxu0
    %v6947 = vadd.f32 %v6894, %v6946
    %v6948 = vpop.f32.mrb[0].mxu0
    %v6949 = vadd.f32 %v6896, %v6948
    %6950 = vdwg.mxu0
    %6951 = vmatprep.subr.bf16.mxu0 %v5912
    %6952 = vmatpush1.bf16.msra.mxu0 %v5911
    %6953 = vmatprep.subr.bf16.mxu0 %v5916
    %6954 = vmatpush1.bf16.msra.mxu0 %v5915
    %6955 = vmatprep.subr.bf16.mxu0 %v5920
    %6956 = vmatpush1.bf16.msra.mxu0 %v5919
    %6957 = vmatprep.subr.bf16.mxu0 %v5924
    %6958 = vmatpush1.bf16.msra.mxu0 %v5923
    %6959 = vmatprep.subr.bf16.mxu0 %v5928
    %6960 = vmatpush1.bf16.msra.mxu0 %v5927
    %6961 = vmatprep.subr.bf16.mxu0 %v5932
    %6962 = vmatpush1.bf16.msra.mxu0 %v5931
    %6963 = vmatprep.subr.bf16.mxu0 %v5936
    %6964 = vmatpush1.bf16.msra.mxu0 %v5935
    %6965 = vmatprep.subr.bf16.mxu0 %v5940
    %6966 = vmatpush1.bf16.msra.mxu0 %v5939
    %6967 = vmatprep.subr.bf16.mxu0 %v5944
    %6968 = vmatpush1.bf16.msra.mxu0 %v5943
    %6969 = vmatprep.subr.bf16.mxu0 %v5948
    %6970 = vmatpush1.bf16.msra.mxu0 %v5947
    %6971 = vmatprep.subr.bf16.mxu0 %v5952
    %6972 = vmatpush1.bf16.msra.mxu0 %v5951
    %6973 = vmatprep.subr.bf16.mxu0 %v5956
    %6974 = vmatpush1.bf16.msra.mxu0 %v5955
    %6975 = vmatprep.subr.bf16.mxu0 %v5960
    %6976 = vmatpush1.bf16.msra.mxu0 %v5959
    %6977 = vmatprep.subr.bf16.mxu0 %v5964
    %6978 = vmatpush1.bf16.msra.mxu0 %v5963
    %6979 = vmatprep.subr.bf16.mxu0 %v5968
    %6980 = vmatpush1.bf16.msra.mxu0 %v5967
    %6981 = vmatprep.subr.bf16.mxu0 %v5972
    %6982 = vmatpush1.bf16.msra.mxu0 %v5971
    %6983 = vmatprep.mubr.bf16.mxu0 %v4080
    %6984 = vmatmul.mubr.bf16.gmra.mrb[0].mxu0 %v4079
    %v6985 = vpop.f32.mrb[0].mxu0
    %v6986 = vadd.f32 %v6933, %v6985
    %v6987 = vpop.f32.mrb[0].mxu0
    %v6988 = vadd.f32 %v6935, %v6987
    %v6989 = vpop.f32.mrb[0].mxu0
    %v6990 = vadd.f32 %v6937, %v6989
    %v6991 = vpop.f32.mrb[0].mxu0
    %v6992 = vadd.f32 %v6939, %v6991
    %6993 = vmatprep.mubr.bf16.mxu0 %v4092
    %6994 = vmatmul.mubr.bf16.gmra.mrb[0].mxu0 %v4091
    %v6995 = vpop.f32.mrb[0].mxu0
    %v6996 = vadd.f32 %v6943, %v6995
    %v6997 = vpop.f32.mrb[0].mxu0
    %v6998 = vadd.f32 %v6945, %v6997
    %v6999 = vpop.f32.mrb[0].mxu0
    %v7000 = vadd.f32 %v6947, %v6999
    %v7001 = vpop.f32.mrb[0].mxu0
    %v7002 = vadd.f32 %v6949, %v7001
    %7003 = vdwg.mxu0
    %7004 = vmatprep.subr.bf16.mxu0 %v5976
    %7005 = vmatpush1.bf16.msra.mxu0 %v5975
    %7006 = vmatprep.subr.bf16.mxu0 %v5980
    %7007 = vmatpush1.bf16.msra.mxu0 %v5979
    %7008 = vmatprep.subr.bf16.mxu0 %v5984
    %7009 = vmatpush1.bf16.msra.mxu0 %v5983
    %7010 = vmatprep.subr.bf16.mxu0 %v5988
    %7011 = vmatpush1.bf16.msra.mxu0 %v5987
    %7012 = vmatprep.subr.bf16.mxu0 %v5992
    %7013 = vmatpush1.bf16.msra.mxu0 %v5991
    %7014 = vmatprep.subr.bf16.mxu0 %v5996
    %7015 = vmatpush1.bf16.msra.mxu0 %v5995
    %7016 = vmatprep.subr.bf16.mxu0 %v6000
    %7017 = vmatpush1.bf16.msra.mxu0 %v5999
    %7018 = vmatprep.subr.bf16.mxu0 %v6004
    %7019 = vmatpush1.bf16.msra.mxu0 %v6003
    %7020 = vmatprep.subr.bf16.mxu0 %v6008
    %7021 = vmatpush1.bf16.msra.mxu0 %v6007
    %7022 = vmatprep.subr.bf16.mxu0 %v6012
    %7023 = vmatpush1.bf16.msra.mxu0 %v6011
    %7024 = vmatprep.subr.bf16.mxu0 %v6016
    %7025 = vmatpush1.bf16.msra.mxu0 %v6015
    %7026 = vmatprep.subr.bf16.mxu0 %v6020
    %7027 = vmatpush1.bf16.msra.mxu0 %v6019
    %7028 = vmatprep.subr.bf16.mxu0 %v6024
    %7029 = vmatpush1.bf16.msra.mxu0 %v6023
    %7030 = vmatprep.subr.bf16.mxu0 %v6028
    %7031 = vmatpush1.bf16.msra.mxu0 %v6027
    %7032 = vmatprep.subr.bf16.mxu0 %v6032
    %7033 = vmatpush1.bf16.msra.mxu0 %v6031
    %7034 = vmatprep.subr.bf16.mxu0 %v6036
    %7035 = vmatpush1.bf16.msra.mxu0 %v6035
    %7036 = vmatprep.mubr.bf16.mxu0 %v4082
    %7037 = vmatmul.mubr.bf16.gmra.mrb[0].mxu0 %v4081
    %v7038 = vpop.f32.mrb[0].mxu0
    %v7039 = vadd.f32 %v6986, %v7038
    %v7040 = vpop.f32.mrb[0].mxu0
    %v7041 = vadd.f32 %v6988, %v7040
    %v7042 = vpop.f32.mrb[0].mxu0
    %v7043 = vadd.f32 %v6990, %v7042
    %v7044 = vpop.f32.mrb[0].mxu0
    %v7045 = vadd.f32 %v6992, %v7044
    %7046 = vmatprep.mubr.bf16.mxu0 %v4094
    %7047 = vmatmul.mubr.bf16.gmra.mrb[0].mxu0 %v4093
    %v7048 = vpop.f32.mrb[0].mxu0
    %v7049 = vadd.f32 %v6996, %v7048
    %v7050 = vpop.f32.mrb[0].mxu0
    %v7051 = vadd.f32 %v6998, %v7050
    %v7052 = vpop.f32.mrb[0].mxu0
    %v7053 = vadd.f32 %v7000, %v7052
    %v7054 = vpop.f32.mrb[0].mxu0
    %v7055 = vadd.f32 %v7002, %v7054
    %7056 = vdwg.mxu0
    %v7057 = vadd.f32 %v179, %v6721
    %v7058 = vadd.f32 %v180, %v6723
    %v7059 = vadd.f32 %v181, %v7039
    %v7060 = vadd.f32 %v182, %v7041
    %v7061 = vadd.f32 %v183, %v6725
    %v7062 = vadd.f32 %v184, %v6727
    %v7063 = vadd.f32 %v185, %v7043
    %v7064 = vadd.f32 %v186, %v7045
    %v7065 = vadd.f32 %v187, %v6731
    %v7066 = vadd.f32 %v188, %v6733
    %v7067 = vadd.f32 %v189, %v7049
    %v7068 = vadd.f32 %v190, %v7051
    %v7069 = vadd.f32 %v191, %v6735
    %v7070 = vadd.f32 %v192, %v6737
    %v7071 = vadd.f32 %v193, %v7053
    %v7072 = vadd.f32 %v194, %v7055
    %7073 = vst [vmem:[#allocation14] sm:$0xff] %v7057
    %7074 = vst [vmem:[#allocation14 + $0x8] sm:$0xff] %v7058
    %7075 = vst [vmem:[#allocation14 + $0x10] sm:$0xff] %v7059
    %7076 = vst [vmem:[#allocation14 + $0x18] sm:$0xff] %v7060
    %7077 = vst [vmem:[#allocation14 + $0x20] sm:$0xff] %v7061
    %7078 = vst [vmem:[#allocation14 + $0x28] sm:$0xff] %v7062
    %7079 = vst [vmem:[#allocation14 + $0x30] sm:$0xff] %v7063
    %7080 = vst [vmem:[#allocation14 + $0x38] sm:$0xff] %v7064
    %7081 = vst [vmem:[#allocation14 + $0x40] sm:$0xff] %v7065
    %7082 = vst [vmem:[#allocation14 + $0x48] sm:$0xff] %v7066
    %7083 = vst [vmem:[#allocation14 + $0x50] sm:$0xff] %v7067
    %7084 = vst [vmem:[#allocation14 + $0x58] sm:$0xff] %v7068
    %7085 = vst [vmem:[#allocation14 + $0x60] sm:$0xff] %v7069
    %7086 = vst [vmem:[#allocation14 + $0x68] sm:$0xff] %v7070
    %7087 = vst [vmem:[#allocation14 + $0x70] sm:$0xff] %v7071
    %7088 = vst [vmem:[#allocation14 + $0x78] sm:$0xff] %v7072
    // Predicated region
    $region58: #{tpu_custom_call.1} parent=1 // pred_check
      _
    $region59: #{tpu_custom_call.1} parent=1 // pred_check_branch
      %7090 = sbr.rel (0) target = $region61
    $region60: #{tpu_custom_call.1} parent=1 // pred_region
      %s7092 = ssub.s32 2048, 2048
      %7093 = vsyncadd [#allocation4], %s7092
      %s7094 = sshll.u32 [#allocation14], 4
      %s7095 = int_to_ptr.vmem [resolvable:$true] %s7094
      %7100 = dma.vmem_to_hbm [thread:$0]  %s7095, 2048, %s7, [#allocation4], 512, 512, 32
    $region61: #{tpu_custom_call.1} parent=1 // pred_fallthru
      _
    // Predicated region
    $region62: #{tpu_custom_call.1} parent=1 // pred_check
      _
    $region63: #{tpu_custom_call.1} parent=1 // pred_check_branch
      %7102 = sbr.rel (0) target = $region65
    $region64: #{tpu_custom_call.1} parent=1 // pred_region
      %7103 = dma.done [#allocation4], 2048
    $region65: #{tpu_custom_call.1} parent=1 // pred_fallthru
      _
    %7104 = vsyncpa [#allocation3], 1
    %7105 = vsyncpa [#allocation6], 1
    %7106 = vsyncpa [#allocation9], 1
    %7107 = vsyncpa [#allocation12], 1
    %7108 = vsyncpa [#allocation4], 1

</llo_original>
